<compile_context>
chip_gen: v7x
topology: tpu7x:2x2x1
jax: 0.10.0
libtpu: 0.0.40
codegen_flags: <defaults>
</compile_context>

<pallas_src>
import functools

import jax
import jax.numpy as jnp
from jax import lax
from jax.experimental import pallas as pl
from jax.experimental.pallas import tpu as pltpu

SELU_ALPHA = 1.6732632423543772
SELU_SCALE = 1.0507009873554805


def _selu(x):
    return SELU_SCALE * jnp.where(x > 0, x, SELU_ALPHA * (jnp.exp(x) - 1.0))


def _round_up(a, m):
    return (a + m - 1) // m * m


def _vmem_limit_bytes():
    # Generation-aware scoped-VMEM limit:
    #  * 128 MiB parts (v5e/v6e): cap - 24 MiB (~104 MiB) so larger tiles fit.
    #  * 64 MiB parts (v7x): <= 48 MiB, leaving headroom for Mosaic scratch.
    cap = 64 << 20
    try:
        info = pltpu.get_tpu_info()
        cap = int(getattr(info, "vmem_capacity_bytes", cap))
    except Exception:
        pass
    if cap >= (100 << 20):
        return cap - (24 << 20)
    return max(16 << 20, min(48 << 20, cap - (16 << 20)))


def _elementwise_dtype():
    # bf16 SELU/exp/tanh only on chips with bf16 VPU/EUP (v6e/v7x).
    # v5e (and older) have no bf16 VPU/EUP -> keep f32 (bf16 would be emulated).
    try:
        kind = jax.devices()[0].device_kind.lower()
    except Exception:
        return jnp.float32
    if ("v6" in kind) or ("v7" in kind):
        return jnp.bfloat16
    return jnp.float32


def vae_kernel(
    x_ref, eps_ref,
    w1_ref, b1_ref, w23_ref, b23_ref, wd1_ref, bd1_ref, wd2_ref, bd2_ref,
    out_ref, kl_ref,
    *, batch_size, latent_dim, mask_rows, compute_dtype,
):
    TB = x_ref.shape[0]
    LP = eps_ref.shape[1]          # latent dim padded to a 128-lane multiple
    i = pl.program_id(0)

    # ---- encoder ----  bf16 MXU operands, f32 accumulation
    h = _selu(
        (jnp.dot(x_ref[...].astype(jnp.bfloat16), w1_ref[...],
                 preferred_element_type=jnp.float32) + b1_ref[...]
         ).astype(compute_dtype))

    # Fused mu / log_sigma projection: one (TB, H1) x (H1, 2*LP) matmul.
    # LP is a multiple of 128, so both slices are lane-aligned (no relayout).
    ms = jnp.dot(h.astype(jnp.bfloat16), w23_ref[...],
                 preferred_element_type=jnp.float32) + b23_ref[...]
    mu = ms[:, :LP]
    log_sigma = ms[:, LP:]
    sigma = jnp.exp(log_sigma.astype(compute_dtype)).astype(jnp.float32)

    # reparameterization (padded eps lanes are zero, padded mu lanes are zero)
    z = mu + sigma * eps_ref[...]

    # ---- KL partial: sublane reduce only, lane-dense (1, LP) write per tile ----
    terms = sigma * sigma + mu * mu - log_sigma - 0.5
    if LP != latent_dim:
        # Padded latent lanes have sigma=1, mu=0 -> each would add +0.5; mask them.
        col = lax.broadcasted_iota(jnp.int32, (1, LP), 1)
        terms = jnp.where(col < latent_dim, terms, 0.0)
    if mask_rows:
        # Batch-padding rows: cheap (TB, 1) sublane-iota mask broadcast over lanes
        # (only emitted when the wrapper actually padded the batch).
        row = lax.broadcasted_iota(jnp.int32, (TB, 1), 0) + i * TB
        terms = jnp.where(row < batch_size, terms, 0.0)
    kl_ref[...] = jnp.sum(terms, axis=0, keepdims=True).reshape(kl_ref.shape)

    # ---- decoder ----
    d = _selu(
        (jnp.dot(z.astype(jnp.bfloat16), wd1_ref[...],
                 preferred_element_type=jnp.float32) + bd1_ref[...]
         ).astype(compute_dtype))
    out = jnp.tanh(
        (jnp.dot(d.astype(jnp.bfloat16), wd2_ref[...],
                 preferred_element_type=jnp.float32) + bd2_ref[...]
         ).astype(compute_dtype))
    out_ref[...] = out.astype(out_ref.dtype)


def _pick_tb(B, DP, LP, H1, H2, x_bytes, out_bytes, vmem_limit):
    # Resident weights: constant index_map skips re-DMA but the pipeline still
    # allocates 2 buffers per input, so count them twice.
    # (pl.Buffered(1) on the weight specs would halve this on v7x; omitted to
    #  keep a single compile-safe code path across jax versions.)
    w_bytes = 2 * 2 * (DP * H1 + H1 * 2 * LP + LP * H2 + H2 * DP) \
        + 2 * 4 * (H1 + 2 * LP + H2 + DP)
    # Per-batch-row bytes: double-buffered x/out/eps streams + f32 intermediates.
    per_row = 2 * (DP * x_bytes + DP * out_bytes + LP * 4) \
        + 4 * (H1 + 4 * LP + H2 + DP)
    budget = max((vmem_limit * 3) // 4 - w_bytes, 1 << 20)
    tb = 512
    while tb > 16 and tb * per_row > budget:
        tb //= 2
    tb = min(tb, _round_up(B, 16))   # multiple of 16: clean f32->bf16 packing
    return max(16, _round_up(tb, 16))


@jax.jit
def vae_forward(x_nchw, eps, params):
    B = x_nchw.shape[0]
    D = x_nchw.shape[1] * x_nchw.shape[2] * x_nchw.shape[3]
    # torch.flatten(x, start_dim=1); keep the caller's dtype (no extra HBM pass).
    x = x_nchw.reshape(B, D)

    (w1, b1, w2, b2, w3, b3, wd1, bd1, wd2, bd2) = params
    L = w2.shape[1]
    H1 = w1.shape[1]
    H2 = wd1.shape[1]

    # Lane-align feature / latent dims to 128 (zero padding; masked in the KL).
    DP = _round_up(D, 128)
    LP = max(128, _round_up(L, 128))

    def pad_c(a, n):
        return a if a.shape[1] == n else jnp.pad(a, ((0, 0), (0, n - a.shape[1])))

    def pad_r(a, n):
        return a if a.shape[0] == n else jnp.pad(a, ((0, n - a.shape[0]), (0, 0)))

    w1p = pad_r(w1, DP)
    w23 = jnp.concatenate([pad_c(w2, LP), pad_c(w3, LP)], axis=1)    # (H1, 2*LP)
    b23 = jnp.concatenate([pad_c(b2, LP), pad_c(b3, LP)], axis=1)    # (1, 2*LP)
    wd1p = pad_r(wd1, LP)                                            # zero rows
    wd2p = pad_c(wd2, DP)
    bd2p = pad_c(bd2, DP)

    compute_dtype = _elementwise_dtype()
    vmem_limit = _vmem_limit_bytes()
    x_bytes = jnp.dtype(x.dtype).itemsize

    TB = _pick_tb(B, DP, LP, H1, H2, x_bytes, 2, vmem_limit)
    B_pad = _round_up(B, TB)
    G = B_pad // TB

    x = jnp.pad(x, ((0, B_pad - B), (0, DP - D)))
    eps = jnp.pad(eps.astype(jnp.float32), ((0, B_pad - B), (0, LP - L)))

    def batch_spec(n_cols):
        return pl.BlockSpec((TB, n_cols), lambda i: (i, 0))

    def resident_spec(shape):
        # Constant block index -> stays resident in VMEM across grid steps.
        return pl.BlockSpec(shape, lambda i: (0,) * len(shape))

    in_specs = [
        batch_spec(DP),                 # x
        batch_spec(LP),                 # eps
        resident_spec(w1p.shape),
        resident_spec(b1.shape),
        resident_spec(w23.shape),
        resident_spec(b23.shape),
        resident_spec(wd1p.shape),
        resident_spec(bd1.shape),
        resident_spec(wd2p.shape),
        resident_spec(bd2p.shape),
    ]
    out_specs = (
        pl.BlockSpec((TB, DP), lambda i: (i, 0)),       # reconstruction (bf16)
        pl.BlockSpec((1, 1, LP), lambda i: (i, 0, 0)),  # lane-dense KL partial/tile
    )

    out, kl_part = pl.pallas_call(
        functools.partial(
            vae_kernel, batch_size=B, latent_dim=L,
            mask_rows=(B_pad != B), compute_dtype=compute_dtype),
        out_shape=(
            jax.ShapeDtypeStruct((B_pad, DP), jnp.bfloat16),
            jax.ShapeDtypeStruct((G, 1, LP), jnp.float32),
        ),
        grid_spec=pltpu.PrefetchScalarGridSpec(
            num_scalar_prefetch=0,
            grid=(G,),
            in_specs=in_specs,
            out_specs=out_specs,
        ),
        compiler_params=pltpu.CompilerParams(
            dimension_semantics=("parallel",),
            vmem_limit_bytes=vmem_limit,
        ),
    )(x, eps, w1p, b1, w23, b23, wd1p, bd1, wd2p, bd2p)

    return out[:B, :D], jnp.sum(kl_part)


def init_params(key, input_dim, latent_dim, hidden_width_1=512, hidden_width_2=512):
    """Deterministic synthetic params (same shapes as the torch module).
    Weights stored bf16 (MXU operands); biases kept f32."""
    ks = jax.random.split(key, 10)

    def lin_w(kw, fan_in, fan_out):
        lim = 1.0 / jnp.sqrt(jnp.float32(fan_in))
        w = jax.random.uniform(kw, (fan_in, fan_out), jnp.float32, -lim, lim)
        return w.astype(jnp.bfloat16)

    def lin_b(kb, fan_out):
        return jax.random.uniform(kb, (1, fan_out), jnp.float32, -0.05, 0.05)

    w1 = lin_w(ks[0], input_dim, hidden_width_1)
    b1 = lin_b(ks[1], hidden_width_1)
    w2 = lin_w(ks[2], hidden_width_1, latent_dim)
    b2 = lin_b(ks[3], latent_dim)
    w3 = lin_w(ks[4], hidden_width_1, latent_dim)
    b3 = lin_b(ks[5], latent_dim)
    wd1 = lin_w(ks[6], latent_dim, hidden_width_2)
    bd1 = lin_b(ks[7], hidden_width_2)
    wd2 = lin_w(ks[8], hidden_width_2, input_dim)
    bd2 = lin_b(ks[9], input_dim)
    return (w1, b1, w2, b2, w3, b3, wd1, bd1, wd2, bd2)


def ref_forward(x_nchw, eps, params, compute_dtype=jnp.float32):
    """Pure-JAX reference mirroring the kernel's documented precision policy:
    bf16 MXU operands, f32 accumulation, elementwise in `compute_dtype`."""
    (w1, b1, w2, b2, w3, b3, wd1, bd1, wd2, bd2) = params
    xf = x_nchw.reshape(x_nchw.shape[0], -1)

    def mm(a, w):
        return jnp.dot(a.astype(jnp.bfloat16), w.astype(jnp.bfloat16),
                       preferred_element_type=jnp.float32)

    h = _selu((mm(xf, w1) + b1).astype(compute_dtype))
    mu = mm(h, w2) + b2
    log_sigma = mm(h, w3) + b3
    sigma = jnp.exp(log_sigma.astype(compute_dtype)).astype(jnp.float32)
    z = mu + sigma * eps
    kl = jnp.sum(sigma ** 2 + mu ** 2 - log_sigma - 0.5)
    d = _selu((mm(z, wd1) + bd1).astype(compute_dtype))
    out = jnp.tanh((mm(d, wd2) + bd2).astype(compute_dtype))
    return out.astype(jnp.float32), kl


if __name__ == "__main__":
    # Small, module-consistent shapes: x is NCHW (2, 4, 16, 16) -> input_dim = 1024
    B, C, H, W = 2, 4, 16, 16
    input_dim = C * H * W
    latent_dim = 32
    hidden_width = 512

    key = jax.random.PRNGKey(0)
    kx, keps, kp = jax.random.split(key, 3)

    x = jax.random.normal(kx, (B, C, H, W), jnp.float32)
    # N(0,1) sample (torch.distributions.Normal(0,1).sample()) drawn outside the kernel
    eps = jax.random.normal(keps, (B, latent_dim), jnp.float32)
    params = init_params(kp, input_dim, latent_dim, hidden_width, hidden_width)

    out, kl = vae_forward(x, eps, params)
    out = jax.block_until_ready(out)
    kl = jax.block_until_ready(kl)

    ref_out, ref_kl = ref_forward(x, eps, params, _elementwise_dtype())
    out_f32 = out.astype(jnp.float32)

    assert out.shape == (B, input_dim)
    assert jnp.isfinite(out_f32).all() and jnp.isfinite(kl)
    assert jnp.allclose(out_f32, ref_out, atol=2e-2, rtol=2e-2), float(
        jnp.max(jnp.abs(out_f32 - ref_out)))
    assert jnp.allclose(kl, ref_kl, rtol=5e-2, atol=1.0), (float(kl), float(ref_kl))

    print("KERNEL_OK")
</pallas_src>

<mosaic_0001>
module attributes {stable_mosaic.version = 11 : i64} {
  func.func @vae_kernel(%arg0: i32, %arg1: memref<16x1024xf32, #tpu.memory_space<vmem>>, %arg2: memref<16x128xf32, #tpu.memory_space<vmem>>, %arg3: memref<1024x512xbf16, #tpu.memory_space<vmem>>, %arg4: memref<1x512xf32, #tpu.memory_space<vmem>>, %arg5: memref<512x256xbf16, #tpu.memory_space<vmem>>, %arg6: memref<1x256xf32, #tpu.memory_space<vmem>>, %arg7: memref<128x512xbf16, #tpu.memory_space<vmem>>, %arg8: memref<1x512xf32, #tpu.memory_space<vmem>>, %arg9: memref<512x1024xbf16, #tpu.memory_space<vmem>>, %arg10: memref<1x1024xf32, #tpu.memory_space<vmem>>, %arg11: memref<16x1024xbf16, #tpu.memory_space<vmem>>, %arg12: memref<1x1x128xf32, #tpu.memory_space<vmem>>) attributes {dimension_semantics = [#tpu.dimension_semantics<parallel>], iteration_bounds = array<i64: 1>, scalar_prefetch = 0 : i64, scratch_operands = 0 : i64, tpu.core_type = #tpu.core_type<tc>, window_params = [{transform_indices = @transform_0, window_bounds = array<i64: 16, 1024>}, {transform_indices = @transform_1, window_bounds = array<i64: 16, 128>}, {pipeline_mode = #tpu.pipeline_mode<synchronous>, transform_indices = @transform_2, window_bounds = array<i64: 1024, 512>}, {pipeline_mode = #tpu.pipeline_mode<synchronous>, transform_indices = @transform_3, window_bounds = array<i64: 1, 512>}, {pipeline_mode = #tpu.pipeline_mode<synchronous>, transform_indices = @transform_4, window_bounds = array<i64: 512, 256>}, {pipeline_mode = #tpu.pipeline_mode<synchronous>, transform_indices = @transform_5, window_bounds = array<i64: 1, 256>}, {pipeline_mode = #tpu.pipeline_mode<synchronous>, transform_indices = @transform_6, window_bounds = array<i64: 128, 512>}, {pipeline_mode = #tpu.pipeline_mode<synchronous>, transform_indices = @transform_7, window_bounds = array<i64: 1, 512>}, {pipeline_mode = #tpu.pipeline_mode<synchronous>, transform_indices = @transform_8, window_bounds = array<i64: 512, 1024>}, {pipeline_mode = #tpu.pipeline_mode<synchronous>, transform_indices = @transform_9, window_bounds = array<i64: 1, 1024>}, {transform_indices = @transform_10, window_bounds = array<i64: 16, 1024>}, {transform_indices = @transform_11, window_bounds = array<i64: 1, 1, 128>}]} {
    %c0 = arith.constant 0 : index
    %c0_0 = arith.constant 0 : index
    %0 = vector.load %arg1[%c0, %c0_0] : memref<16x1024xf32, #tpu.memory_space<vmem>>, vector<16x1024xf32>
    %1 = arith.truncf %0 : vector<16x1024xf32> to vector<16x1024xbf16>
    %c0_1 = arith.constant 0 : index
    %c0_2 = arith.constant 0 : index
    %2 = vector.load %arg3[%c0_1, %c0_2] : memref<1024x512xbf16, #tpu.memory_space<vmem>>, vector<1024x512xbf16>
    %cst = arith.constant dense<0.000000e+00> : vector<16x512xf32>
    %3 = tpu.matmul %1, %2, %cst {dimension_numbers = #tpu.dot_dimension_numbers<[1], [0], [0], [1], [0, 0, 1, 1], [], []>} : vector<16x1024xbf16>, vector<1024x512xbf16>, vector<16x512xf32> -> vector<16x512xf32>
    %c0_3 = arith.constant 0 : index
    %c0_4 = arith.constant 0 : index
    %4 = vector.load %arg4[%c0_3, %c0_4] : memref<1x512xf32, #tpu.memory_space<vmem>>, vector<1x512xf32>
    %5 = vector.broadcast %4 : vector<1x512xf32> to vector<16x512xf32>
    %6 = arith.addf %3, %5 : vector<16x512xf32>
    %cst_5 = arith.constant 0.000000e+00 : f32
    %7 = vector.broadcast %cst_5 : f32 to vector<16x512xf32>
    %8 = arith.cmpf ogt, %6, %7 : vector<16x512xf32>
    %9 = math.exp %6 : vector<16x512xf32>
    %cst_6 = arith.constant 1.000000e+00 : f32
    %10 = vector.broadcast %cst_6 : f32 to vector<16x512xf32>
    %11 = arith.subf %9, %10 : vector<16x512xf32>
    %cst_7 = arith.constant 1.67326319 : f32
    %12 = vector.broadcast %cst_7 : f32 to vector<16x512xf32>
    %13 = arith.mulf %12, %11 : vector<16x512xf32>
    %14 = arith.select %8, %6, %13 : vector<16x512xi1>, vector<16x512xf32>
    %cst_8 = arith.constant 1.05070102 : f32
    %15 = vector.broadcast %cst_8 : f32 to vector<16x512xf32>
    %16 = arith.mulf %15, %14 : vector<16x512xf32>
    %17 = arith.truncf %16 : vector<16x512xf32> to vector<16x512xbf16>
    %c0_9 = arith.constant 0 : index
    %c0_10 = arith.constant 0 : index
    %18 = vector.load %arg5[%c0_9, %c0_10] : memref<512x256xbf16, #tpu.memory_space<vmem>>, vector<512x256xbf16>
    %cst_11 = arith.constant dense<0.000000e+00> : vector<16x256xf32>
    %19 = tpu.matmul %17, %18, %cst_11 {dimension_numbers = #tpu.dot_dimension_numbers<[1], [0], [0], [1], [0, 0, 1, 1], [], []>} : vector<16x512xbf16>, vector<512x256xbf16>, vector<16x256xf32> -> vector<16x256xf32>
    %c0_12 = arith.constant 0 : index
    %c0_13 = arith.constant 0 : index
    %20 = vector.load %arg6[%c0_12, %c0_13] : memref<1x256xf32, #tpu.memory_space<vmem>>, vector<1x256xf32>
    %21 = vector.broadcast %20 : vector<1x256xf32> to vector<16x256xf32>
    %22 = arith.addf %19, %21 : vector<16x256xf32>
    %23 = vector.extract_strided_slice %22 {offsets = [0, 0], sizes = [16, 128], strides = [1, 1]} : vector<16x256xf32> to vector<16x128xf32>
    %24 = vector.extract_strided_slice %22 {offsets = [0, 128], sizes = [16, 128], strides = [1, 1]} : vector<16x256xf32> to vector<16x128xf32>
    %25 = math.exp %24 : vector<16x128xf32>
    %c0_14 = arith.constant 0 : index
    %c0_15 = arith.constant 0 : index
    %26 = vector.load %arg2[%c0_14, %c0_15] : memref<16x128xf32, #tpu.memory_space<vmem>>, vector<16x128xf32>
    %27 = arith.mulf %25, %26 : vector<16x128xf32>
    %28 = arith.addf %23, %27 : vector<16x128xf32>
    %29 = arith.mulf %25, %25 : vector<16x128xf32>
    %30 = arith.mulf %23, %23 : vector<16x128xf32>
    %31 = arith.addf %29, %30 : vector<16x128xf32>
    %32 = arith.subf %31, %24 : vector<16x128xf32>
    %cst_16 = arith.constant 5.000000e-01 : f32
    %33 = vector.broadcast %cst_16 : f32 to vector<16x128xf32>
    %34 = arith.subf %32, %33 : vector<16x128xf32>
    %35 = tpu.iota {dimensions = array<i32: 1>} : vector<1x128xi32>
    %c32_i32 = arith.constant 32 : i32
    %36 = vector.broadcast %c32_i32 : i32 to vector<1x128xi32>
    %37 = arith.cmpi slt, %35, %36 : vector<1x128xi32>
    %cst_17 = arith.constant 0.000000e+00 : f32
    %38 = vector.shape_cast %37 : vector<1x128xi1> to vector<1x128xi1>
    %39 = vector.broadcast %38 : vector<1x128xi1> to vector<16x128xi1>
    %40 = vector.broadcast %cst_17 : f32 to vector<16x128xf32>
    %41 = arith.select %39, %34, %40 : vector<16x128xi1>, vector<16x128xf32>
    %42 = tpu.iota {dimensions = array<i32: 0>} : vector<16x1xi32>
    %c16_i32 = arith.constant 16 : i32
    %43 = arith.muli %arg0, %c16_i32 : i32
    %44 = vector.broadcast %43 : i32 to vector<16x1xi32>
    %45 = arith.addi %42, %44 : vector<16x1xi32>
    %c2_i32 = arith.constant 2 : i32
    %46 = vector.broadcast %c2_i32 : i32 to vector<16x1xi32>
    %47 = arith.cmpi slt, %45, %46 : vector<16x1xi32>
    %cst_18 = arith.constant 0.000000e+00 : f32
    %48 = vector.shape_cast %47 : vector<16x1xi1> to vector<16x1xi1>
    %49 = vector.broadcast %48 : vector<16x1xi1> to vector<16x128xi1>
    %50 = vector.broadcast %cst_18 : f32 to vector<16x128xf32>
    %51 = arith.select %49, %41, %50 : vector<16x128xi1>, vector<16x128xf32>
    %cst_19 = arith.constant dense<0.000000e+00> : vector<128xf32>
    %52 = vector.multi_reduction <add>, %51, %cst_19 [0] : vector<16x128xf32> to vector<128xf32>
    %53 = vector.shape_cast %52 : vector<128xf32> to vector<1x128xf32>
    %54 = vector.shape_cast %53 : vector<1x128xf32> to vector<1x1x128xf32>
    %c0_20 = arith.constant 0 : index
    %c0_21 = arith.constant 0 : index
    %c0_22 = arith.constant 0 : index
    %55 = vector.load %arg12[%c0_20, %c0_21, %c0_22] : memref<1x1x128xf32, #tpu.memory_space<vmem>>, vector<1x1x128xf32>
    tpu.vector_store %arg12[%c0_20, %c0_21, %c0_22], %54 {strides = array<i32>} : memref<1x1x128xf32, #tpu.memory_space<vmem>>, vector<1x1x128xf32>,
    %56 = arith.truncf %28 : vector<16x128xf32> to vector<16x128xbf16>
    %c0_23 = arith.constant 0 : index
    %c0_24 = arith.constant 0 : index
    %57 = vector.load %arg7[%c0_23, %c0_24] : memref<128x512xbf16, #tpu.memory_space<vmem>>, vector<128x512xbf16>
    %cst_25 = arith.constant dense<0.000000e+00> : vector<16x512xf32>
    %58 = tpu.matmul %56, %57, %cst_25 {dimension_numbers = #tpu.dot_dimension_numbers<[1], [0], [0], [1], [0, 0, 1, 1], [], []>} : vector<16x128xbf16>, vector<128x512xbf16>, vector<16x512xf32> -> vector<16x512xf32>
    %c0_26 = arith.constant 0 : index
    %c0_27 = arith.constant 0 : index
    %59 = vector.load %arg8[%c0_26, %c0_27] : memref<1x512xf32, #tpu.memory_space<vmem>>, vector<1x512xf32>
    %60 = vector.broadcast %59 : vector<1x512xf32> to vector<16x512xf32>
    %61 = arith.addf %58, %60 : vector<16x512xf32>
    %cst_28 = arith.constant 0.000000e+00 : f32
    %62 = vector.broadcast %cst_28 : f32 to vector<16x512xf32>
    %63 = arith.cmpf ogt, %61, %62 : vector<16x512xf32>
    %64 = math.exp %61 : vector<16x512xf32>
    %cst_29 = arith.constant 1.000000e+00 : f32
    %65 = vector.broadcast %cst_29 : f32 to vector<16x512xf32>
    %66 = arith.subf %64, %65 : vector<16x512xf32>
    %cst_30 = arith.constant 1.67326319 : f32
    %67 = vector.broadcast %cst_30 : f32 to vector<16x512xf32>
    %68 = arith.mulf %67, %66 : vector<16x512xf32>
    %69 = arith.select %63, %61, %68 : vector<16x512xi1>, vector<16x512xf32>
    %cst_31 = arith.constant 1.05070102 : f32
    %70 = vector.broadcast %cst_31 : f32 to vector<16x512xf32>
    %71 = arith.mulf %70, %69 : vector<16x512xf32>
    %72 = arith.truncf %71 : vector<16x512xf32> to vector<16x512xbf16>
    %c0_32 = arith.constant 0 : index
    %c0_33 = arith.constant 0 : index
    %73 = vector.load %arg9[%c0_32, %c0_33] : memref<512x1024xbf16, #tpu.memory_space<vmem>>, vector<512x1024xbf16>
    %cst_34 = arith.constant dense<0.000000e+00> : vector<16x1024xf32>
    %74 = tpu.matmul %72, %73, %cst_34 {dimension_numbers = #tpu.dot_dimension_numbers<[1], [0], [0], [1], [0, 0, 1, 1], [], []>} : vector<16x512xbf16>, vector<512x1024xbf16>, vector<16x1024xf32> -> vector<16x1024xf32>
    %c0_35 = arith.constant 0 : index
    %c0_36 = arith.constant 0 : index
    %75 = vector.load %arg10[%c0_35, %c0_36] : memref<1x1024xf32, #tpu.memory_space<vmem>>, vector<1x1024xf32>
    %76 = vector.broadcast %75 : vector<1x1024xf32> to vector<16x1024xf32>
    %77 = arith.addf %74, %76 : vector<16x1024xf32>
    %78 = math.tanh %77 : vector<16x1024xf32>
    %79 = arith.truncf %78 : vector<16x1024xf32> to vector<16x1024xbf16>
    %c0_37 = arith.constant 0 : index
    %c0_38 = arith.constant 0 : index
    %80 = vector.load %arg11[%c0_37, %c0_38] : memref<16x1024xbf16, #tpu.memory_space<vmem>>, vector<16x1024xbf16>
    tpu.vector_store %arg11[%c0_37, %c0_38], %79 {strides = array<i32>} : memref<16x1024xbf16, #tpu.memory_space<vmem>>, vector<16x1024xbf16>,
    return
  }
  func.func @transform_0(%arg0: i32) -> (i32, i32) {
    %c0_i32 = arith.constant 0 : i32
    %c0_i32_0 = arith.constant 0 : i32
    return %arg0, %c0_i32 : i32, i32
  }
  func.func @transform_1(%arg0: i32) -> (i32, i32) {
    %c0_i32 = arith.constant 0 : i32
    %c0_i32_0 = arith.constant 0 : i32
    return %arg0, %c0_i32 : i32, i32
  }
  func.func @transform_2(%arg0: i32) -> (i32, i32) {
    %c0_i32 = arith.constant 0 : i32
    %c0_i32_0 = arith.constant 0 : i32
    %c0_i32_1 = arith.constant 0 : i32
    return %c0_i32, %c0_i32_0 : i32, i32
  }
  func.func @transform_3(%arg0: i32) -> (i32, i32) {
    %c0_i32 = arith.constant 0 : i32
    %c0_i32_0 = arith.constant 0 : i32
    %c0_i32_1 = arith.constant 0 : i32
    return %c0_i32, %c0_i32_0 : i32, i32
  }
  func.func @transform_4(%arg0: i32) -> (i32, i32) {
    %c0_i32 = arith.constant 0 : i32
    %c0_i32_0 = arith.constant 0 : i32
    %c0_i32_1 = arith.constant 0 : i32
    return %c0_i32, %c0_i32_0 : i32, i32
  }
  func.func @transform_5(%arg0: i32) -> (i32, i32) {
    %c0_i32 = arith.constant 0 : i32
    %c0_i32_0 = arith.constant 0 : i32
    %c0_i32_1 = arith.constant 0 : i32
    return %c0_i32, %c0_i32_0 : i32, i32
  }
  func.func @transform_6(%arg0: i32) -> (i32, i32) {
    %c0_i32 = arith.constant 0 : i32
    %c0_i32_0 = arith.constant 0 : i32
    %c0_i32_1 = arith.constant 0 : i32
    return %c0_i32, %c0_i32_0 : i32, i32
  }
  func.func @transform_7(%arg0: i32) -> (i32, i32) {
    %c0_i32 = arith.constant 0 : i32
    %c0_i32_0 = arith.constant 0 : i32
    %c0_i32_1 = arith.constant 0 : i32
    return %c0_i32, %c0_i32_0 : i32, i32
  }
  func.func @transform_8(%arg0: i32) -> (i32, i32) {
    %c0_i32 = arith.constant 0 : i32
    %c0_i32_0 = arith.constant 0 : i32
    %c0_i32_1 = arith.constant 0 : i32
    return %c0_i32, %c0_i32_0 : i32, i32
  }
  func.func @transform_9(%arg0: i32) -> (i32, i32) {
    %c0_i32 = arith.constant 0 : i32
    %c0_i32_0 = arith.constant 0 : i32
    %c0_i32_1 = arith.constant 0 : i32
    return %c0_i32, %c0_i32_0 : i32, i32
  }
  func.func @transform_10(%arg0: i32) -> (i32, i32) {
    %c0_i32 = arith.constant 0 : i32
    %c0_i32_0 = arith.constant 0 : i32
    return %arg0, %c0_i32 : i32, i32
  }
  func.func @transform_11(%arg0: i32) -> (i32, i32, i32) {
    %c0_i32 = arith.constant 0 : i32
    %c0_i32_0 = arith.constant 0 : i32
    %c0_i32_1 = arith.constant 0 : i32
    return %arg0, %c0_i32, %c0_i32_0 : i32, i32, i32
  }
}

</mosaic_0001>

<llo_original>
// kernel: vae_forward.1
$region0: #{vae_forward.1}
  #allocation0 [shape = 'u32[]', space=smem, size = 0x4, offset = 0x4, fixed_abs, tag = 'smem constant byte address 0x4 - core index']
  #allocation1 [shape = 'u32[144,128]{1,0:T(1,128)}', space=vmem, size = 0x12000, scoped, tag = 'internal scratch']
  %s0 = inlined_call_operand.vmem [shape: f32[16,1024], index: 0, kind: input, shape index: {}]
  %s1 = inlined_call_operand.vmem [shape: f32[16,128], index: 1, kind: input, shape index: {}]
  %s2 = inlined_call_operand.vmem [shape: bf16[1024,512], index: 2, kind: input, shape index: {}]
  %s3 = inlined_call_operand.vmem [shape: f32[1,512], index: 3, kind: input, shape index: {}]
  %s4 = inlined_call_operand.vmem [shape: bf16[512,256], index: 4, kind: input, shape index: {}]
  %s5 = inlined_call_operand.vmem [shape: f32[1,256], index: 5, kind: input, shape index: {}]
  %s6 = inlined_call_operand.vmem [shape: bf16[128,512], index: 6, kind: input, shape index: {}]
  %s7 = inlined_call_operand.hbm [shape: f32[1,512], index: 7, kind: input, shape index: {}]
  %s8 = inlined_call_operand.hbm [shape: bf16[512,1024], index: 8, kind: input, shape index: {}]
  %s9 = inlined_call_operand.vmem [shape: f32[1,1024], index: 9, kind: input, shape index: {}]
  %s10 = inlined_call_operand.vmem [shape: bf16[16,1024], index: 10, kind: output, shape index: {0}]
  %s11 = inlined_call_operand.vmem [shape: f32[1,1,128], index: 11, kind: output, shape index: {1}]
  %12 = xla_tuple %s10, %s11
  %s13 = sld [smem:[#allocation0]]
  $region66: #{vae_forward.1} parent=0
    _
  %s15 = ssub.s32 1, %s13
  %s16 = scalar_select 0, %s15, %s13
  $region1: #{vae_forward.1} parent=0
    #allocation2 [shape = 'u8[2048]{0}', space=vmem, size = 0x800, scoped, tag = 'input window, operand 7, single buffered']
    #allocation3 [shape = 's32[1]{0}', space=sflag, size = 0x4, scoped, tag = 'scoped memory for vae_forward.1']
    #allocation4 [shape = 'u8[1048576]{0}', space=vmem, size = 0x100000, scoped, tag = 'input window, operand 8, single buffered']
    #allocation5 [shape = 's32[1]{0}', space=sflag, size = 0x4, scoped, tag = 'scoped memory for vae_forward.1']
    %17 = vsyncpa [#allocation3], 0
    %18 = vsyncpa [#allocation5], 0
    // Predicated region
    $region2: #{vae_forward.1} parent=1 // pred_check
      _
    $region3: #{vae_forward.1} parent=1 // pred_check_branch
      %20 = sbr.rel (0) target = $region5
    $region4: #{vae_forward.1} parent=1 // pred_region
      _
    $region5: #{vae_forward.1} parent=1 // pred_fallthru
      _
    // Predicated region
    $region6: #{vae_forward.1} parent=1 // pred_check
      _
    $region7: #{vae_forward.1} parent=1 // pred_check_branch
      %22 = sbr.rel (0) target = $region9
    $region8: #{vae_forward.1} parent=1 // pred_region
      _
    $region9: #{vae_forward.1} parent=1 // pred_fallthru
      _
    // Predicated region
    $region10: #{vae_forward.1} parent=1 // pred_check
      _
    $region11: #{vae_forward.1} parent=1 // pred_check_branch
      %24 = sbr.rel (0) target = $region13
    $region12: #{vae_forward.1} parent=1 // pred_region
      _
    $region13: #{vae_forward.1} parent=1 // pred_fallthru
      _
    // Predicated region
    $region14: #{vae_forward.1} parent=1 // pred_check
      _
    $region15: #{vae_forward.1} parent=1 // pred_check_branch
      %26 = sbr.rel (0) target = $region17
    $region16: #{vae_forward.1} parent=1 // pred_region
      _
    $region17: #{vae_forward.1} parent=1 // pred_fallthru
      _
    // Predicated region
    $region18: #{vae_forward.1} parent=1 // pred_check
      _
    $region19: #{vae_forward.1} parent=1 // pred_check_branch
      %28 = sbr.rel (0) target = $region21
    $region20: #{vae_forward.1} parent=1 // pred_region
      _
    $region21: #{vae_forward.1} parent=1 // pred_fallthru
      _
    // Predicated region
    $region22: #{vae_forward.1} parent=1 // pred_check
      _
    $region23: #{vae_forward.1} parent=1 // pred_check_branch
      %30 = sbr.rel (0) target = $region25
    $region24: #{vae_forward.1} parent=1 // pred_region
      _
    $region25: #{vae_forward.1} parent=1 // pred_fallthru
      _
    // Predicated region
    $region26: #{vae_forward.1} parent=1 // pred_check
      _
    $region27: #{vae_forward.1} parent=1 // pred_check_branch
      %32 = sbr.rel (0) target = $region29
    $region28: #{vae_forward.1} parent=1 // pred_region
      _
    $region29: #{vae_forward.1} parent=1 // pred_fallthru
      _
    // Predicated region
    $region30: #{vae_forward.1} parent=1 // pred_check
      _
    $region31: #{vae_forward.1} parent=1 // pred_check_branch
      %34 = sbr.rel (0) target = $region33
    $region32: #{vae_forward.1} parent=1 // pred_region
      %s36 = ssub.s32 64, 64
      %37 = vsyncadd [#allocation3], %s36
      %s39 = sshll.u32 [#allocation2], 4
      %s40 = int_to_ptr.vmem [resolvable:$true] %s39
      %42 = dma.hbm_to_vmem [thread:$0]  %s7, 64, %s40, [#allocation3]
    $region33: #{vae_forward.1} parent=1 // pred_fallthru
      _
    // Predicated region
    $region34: #{vae_forward.1} parent=1 // pred_check
      _
    $region35: #{vae_forward.1} parent=1 // pred_check_branch
      %44 = sbr.rel (0) target = $region37
    $region36: #{vae_forward.1} parent=1 // pred_region
      %s46 = ssub.s32 32768, 32768
      %47 = vsyncadd [#allocation5], %s46
      %s48 = sshll.u32 [#allocation4], 4
      %s49 = int_to_ptr.vmem [resolvable:$true] %s48
      %54 = dma.hbm_to_vmem [thread:$0]  %s8, 32768, %s49, [#allocation5], 512, 512, 32
    $region37: #{vae_forward.1} parent=1 // pred_fallthru
      _
    // Predicated region
    $region38: #{vae_forward.1} parent=1 // pred_check
      _
    $region39: #{vae_forward.1} parent=1 // pred_check_branch
      %56 = sbr.rel (0) target = $region41
    $region40: #{vae_forward.1} parent=1 // pred_region
      _
    $region41: #{vae_forward.1} parent=1 // pred_fallthru
      _
    // Predicated region
    $region42: #{vae_forward.1} parent=1 // pred_check
      _
    $region43: #{vae_forward.1} parent=1 // pred_check_branch
      %58 = sbr.rel (0) target = $region45
    $region44: #{vae_forward.1} parent=1 // pred_region
      %59 = dma.done [#allocation3], 64
    $region45: #{vae_forward.1} parent=1 // pred_fallthru
      _
    // Predicated region
    $region46: #{vae_forward.1} parent=1 // pred_check
      _
    $region47: #{vae_forward.1} parent=1 // pred_check_branch
      %61 = sbr.rel (0) target = $region49
    $region48: #{vae_forward.1} parent=1 // pred_region
      %62 = dma.done [#allocation5], 32768
    $region49: #{vae_forward.1} parent=1 // pred_fallthru
      _
    %v64 = vld [vmem:[%s0] sm:$0xff]
    %v65 = vld [vmem:[%s0 + $0x8] sm:$0xff]
    %v66 = vld [vmem:[%s0 + $0x10] sm:$0xff]
    %v67 = vld [vmem:[%s0 + $0x18] sm:$0xff]
    %v68 = vld [vmem:[%s0 + $0x20] sm:$0xff]
    %v69 = vld [vmem:[%s0 + $0x28] sm:$0xff]
    %v70 = vld [vmem:[%s0 + $0x30] sm:$0xff]
    %v71 = vld [vmem:[%s0 + $0x38] sm:$0xff]
    %v72 = vld [vmem:[%s0 + $0x40] sm:$0xff]
    %v73 = vld [vmem:[%s0 + $0x48] sm:$0xff]
    %v74 = vld [vmem:[%s0 + $0x50] sm:$0xff]
    %v75 = vld [vmem:[%s0 + $0x58] sm:$0xff]
    %v76 = vld [vmem:[%s0 + $0x60] sm:$0xff]
    %v77 = vld [vmem:[%s0 + $0x68] sm:$0xff]
    %v78 = vld [vmem:[%s0 + $0x70] sm:$0xff]
    %v79 = vld [vmem:[%s0 + $0x78] sm:$0xff]
    %v80 = vpack.c.bf16 %v72, %v64
    %v81 = vpack.c.bf16 %v73, %v65
    %v82 = vpack.c.bf16 %v74, %v66
    %v83 = vpack.c.bf16 %v75, %v67
    %v84 = vpack.c.bf16 %v76, %v68
    %v85 = vpack.c.bf16 %v77, %v69
    %v86 = vpack.c.bf16 %v78, %v70
    %v87 = vpack.c.bf16 %v79, %v71
    %v88 = vld [vmem:[%s2] sm:$0xff]
    %v89 = vld [vmem:[%s2 + $0x8] sm:$0xff]
    %v90 = vld [vmem:[%s2 + $0x10] sm:$0xff]
    %v91 = vld [vmem:[%s2 + $0x18] sm:$0xff]
    %v92 = vld [vmem:[%s2 + $0x20] sm:$0xff]
    %v93 = vld [vmem:[%s2 + $0x28] sm:$0xff]
    %v94 = vld [vmem:[%s2 + $0x30] sm:$0xff]
    %v95 = vld [vmem:[%s2 + $0x38] sm:$0xff]
    %v96 = vld [vmem:[%s2 + $0x40] sm:$0xff]
    %v97 = vld [vmem:[%s2 + $0x48] sm:$0xff]
    %v98 = vld [vmem:[%s2 + $0x50] sm:$0xff]
    %v99 = vld [vmem:[%s2 + $0x58] sm:$0xff]
    %v100 = vld [vmem:[%s2 + $0x60] sm:$0xff]
    %v101 = vld [vmem:[%s2 + $0x68] sm:$0xff]
    %v102 = vld [vmem:[%s2 + $0x70] sm:$0xff]
    %v103 = vld [vmem:[%s2 + $0x78] sm:$0xff]
    %v104 = vld [vmem:[%s2 + $0x80] sm:$0xff]
    %v105 = vld [vmem:[%s2 + $0x88] sm:$0xff]
    %v106 = vld [vmem:[%s2 + $0x90] sm:$0xff]
    %v107 = vld [vmem:[%s2 + $0x98] sm:$0xff]
    %v108 = vld [vmem:[%s2 + $0xa0] sm:$0xff]
    %v109 = vld [vmem:[%s2 + $0xa8] sm:$0xff]
    %v110 = vld [vmem:[%s2 + $0xb0] sm:$0xff]
    %v111 = vld [vmem:[%s2 + $0xb8] sm:$0xff]
    %v112 = vld [vmem:[%s2 + $0xc0] sm:$0xff]
    %v113 = vld [vmem:[%s2 + $0xc8] sm:$0xff]
    %v114 = vld [vmem:[%s2 + $0xd0] sm:$0xff]
    %v115 = vld [vmem:[%s2 + $0xd8] sm:$0xff]
    %v116 = vld [vmem:[%s2 + $0xe0] sm:$0xff]
    %v117 = vld [vmem:[%s2 + $0xe8] sm:$0xff]
    %v118 = vld [vmem:[%s2 + $0xf0] sm:$0xff]
    %v119 = vld [vmem:[%s2 + $0xf8] sm:$0xff]
    %v120 = vld [vmem:[%s2 + $0x100] sm:$0xff]
    %v121 = vld [vmem:[%s2 + $0x108] sm:$0xff]
    %v122 = vld [vmem:[%s2 + $0x110] sm:$0xff]
    %v123 = vld [vmem:[%s2 + $0x118] sm:$0xff]
    %v124 = vld [vmem:[%s2 + $0x120] sm:$0xff]
    %v125 = vld [vmem:[%s2 + $0x128] sm:$0xff]
    %v126 = vld [vmem:[%s2 + $0x130] sm:$0xff]
    %v127 = vld [vmem:[%s2 + $0x138] sm:$0xff]
    %v128 = vld [vmem:[%s2 + $0x140] sm:$0xff]
    %v129 = vld [vmem:[%s2 + $0x148] sm:$0xff]
    %v130 = vld [vmem:[%s2 + $0x150] sm:$0xff]
    %v131 = vld [vmem:[%s2 + $0x158] sm:$0xff]
    %v132 = vld [vmem:[%s2 + $0x160] sm:$0xff]
    %v133 = vld [vmem:[%s2 + $0x168] sm:$0xff]
    %v134 = vld [vmem:[%s2 + $0x170] sm:$0xff]
    %v135 = vld [vmem:[%s2 + $0x178] sm:$0xff]
    %v136 = vld [vmem:[%s2 + $0x180] sm:$0xff]
    %v137 = vld [vmem:[%s2 + $0x188] sm:$0xff]
    %v138 = vld [vmem:[%s2 + $0x190] sm:$0xff]
    %v139 = vld [vmem:[%s2 + $0x198] sm:$0xff]
    %v140 = vld [vmem:[%s2 + $0x1a0] sm:$0xff]
    %v141 = vld [vmem:[%s2 + $0x1a8] sm:$0xff]
    %v142 = vld [vmem:[%s2 + $0x1b0] sm:$0xff]
    %v143 = vld [vmem:[%s2 + $0x1b8] sm:$0xff]
    %v144 = vld [vmem:[%s2 + $0x1c0] sm:$0xff]
    %v145 = vld [vmem:[%s2 + $0x1c8] sm:$0xff]
    %v146 = vld [vmem:[%s2 + $0x1d0] sm:$0xff]
    %v147 = vld [vmem:[%s2 + $0x1d8] sm:$0xff]
    %v148 = vld [vmem:[%s2 + $0x1e0] sm:$0xff]
    %v149 = vld [vmem:[%s2 + $0x1e8] sm:$0xff]
    %v150 = vld [vmem:[%s2 + $0x1f0] sm:$0xff]
    %v151 = vld [vmem:[%s2 + $0x1f8] sm:$0xff]
    %v152 = vld [vmem:[%s2 + $0x200] sm:$0xff]
    %v153 = vld [vmem:[%s2 + $0x208] sm:$0xff]
    %v154 = vld [vmem:[%s2 + $0x210] sm:$0xff]
    %v155 = vld [vmem:[%s2 + $0x218] sm:$0xff]
    %v156 = vld [vmem:[%s2 + $0x220] sm:$0xff]
    %v157 = vld [vmem:[%s2 + $0x228] sm:$0xff]
    %v158 = vld [vmem:[%s2 + $0x230] sm:$0xff]
    %v159 = vld [vmem:[%s2 + $0x238] sm:$0xff]
    %v160 = vld [vmem:[%s2 + $0x240] sm:$0xff]
    %v161 = vld [vmem:[%s2 + $0x248] sm:$0xff]
    %v162 = vld [vmem:[%s2 + $0x250] sm:$0xff]
    %v163 = vld [vmem:[%s2 + $0x258] sm:$0xff]
    %v164 = vld [vmem:[%s2 + $0x260] sm:$0xff]
    %v165 = vld [vmem:[%s2 + $0x268] sm:$0xff]
    %v166 = vld [vmem:[%s2 + $0x270] sm:$0xff]
    %v167 = vld [vmem:[%s2 + $0x278] sm:$0xff]
    %v168 = vld [vmem:[%s2 + $0x280] sm:$0xff]
    %v169 = vld [vmem:[%s2 + $0x288] sm:$0xff]
    %v170 = vld [vmem:[%s2 + $0x290] sm:$0xff]
    %v171 = vld [vmem:[%s2 + $0x298] sm:$0xff]
    %v172 = vld [vmem:[%s2 + $0x2a0] sm:$0xff]
    %v173 = vld [vmem:[%s2 + $0x2a8] sm:$0xff]
    %v174 = vld [vmem:[%s2 + $0x2b0] sm:$0xff]
    %v175 = vld [vmem:[%s2 + $0x2b8] sm:$0xff]
    %v176 = vld [vmem:[%s2 + $0x2c0] sm:$0xff]
    %v177 = vld [vmem:[%s2 + $0x2c8] sm:$0xff]
    %v178 = vld [vmem:[%s2 + $0x2d0] sm:$0xff]
    %v179 = vld [vmem:[%s2 + $0x2d8] sm:$0xff]
    %v180 = vld [vmem:[%s2 + $0x2e0] sm:$0xff]
    %v181 = vld [vmem:[%s2 + $0x2e8] sm:$0xff]
    %v182 = vld [vmem:[%s2 + $0x2f0] sm:$0xff]
    %v183 = vld [vmem:[%s2 + $0x2f8] sm:$0xff]
    %v184 = vld [vmem:[%s2 + $0x300] sm:$0xff]
    %v185 = vld [vmem:[%s2 + $0x308] sm:$0xff]
    %v186 = vld [vmem:[%s2 + $0x310] sm:$0xff]
    %v187 = vld [vmem:[%s2 + $0x318] sm:$0xff]
    %v188 = vld [vmem:[%s2 + $0x320] sm:$0xff]
    %v189 = vld [vmem:[%s2 + $0x328] sm:$0xff]
    %v190 = vld [vmem:[%s2 + $0x330] sm:$0xff]
    %v191 = vld [vmem:[%s2 + $0x338] sm:$0xff]
    %v192 = vld [vmem:[%s2 + $0x340] sm:$0xff]
    %v193 = vld [vmem:[%s2 + $0x348] sm:$0xff]
    %v194 = vld [vmem:[%s2 + $0x350] sm:$0xff]
    %v195 = vld [vmem:[%s2 + $0x358] sm:$0xff]
    %v196 = vld [vmem:[%s2 + $0x360] sm:$0xff]
    %v197 = vld [vmem:[%s2 + $0x368] sm:$0xff]
    %v198 = vld [vmem:[%s2 + $0x370] sm:$0xff]
    %v199 = vld [vmem:[%s2 + $0x378] sm:$0xff]
    %v200 = vld [vmem:[%s2 + $0x380] sm:$0xff]
    %v201 = vld [vmem:[%s2 + $0x388] sm:$0xff]
    %v202 = vld [vmem:[%s2 + $0x390] sm:$0xff]
    %v203 = vld [vmem:[%s2 + $0x398] sm:$0xff]
    %v204 = vld [vmem:[%s2 + $0x3a0] sm:$0xff]
    %v205 = vld [vmem:[%s2 + $0x3a8] sm:$0xff]
    %v206 = vld [vmem:[%s2 + $0x3b0] sm:$0xff]
    %v207 = vld [vmem:[%s2 + $0x3b8] sm:$0xff]
    %v208 = vld [vmem:[%s2 + $0x3c0] sm:$0xff]
    %v209 = vld [vmem:[%s2 + $0x3c8] sm:$0xff]
    %v210 = vld [vmem:[%s2 + $0x3d0] sm:$0xff]
    %v211 = vld [vmem:[%s2 + $0x3d8] sm:$0xff]
    %v212 = vld [vmem:[%s2 + $0x3e0] sm:$0xff]
    %v213 = vld [vmem:[%s2 + $0x3e8] sm:$0xff]
    %v214 = vld [vmem:[%s2 + $0x3f0] sm:$0xff]
    %v215 = vld [vmem:[%s2 + $0x3f8] sm:$0xff]
    %v216 = vld [vmem:[%s2 + $0x400] sm:$0xff]
    %v217 = vld [vmem:[%s2 + $0x408] sm:$0xff]
    %v218 = vld [vmem:[%s2 + $0x410] sm:$0xff]
    %v219 = vld [vmem:[%s2 + $0x418] sm:$0xff]
    %v220 = vld [vmem:[%s2 + $0x420] sm:$0xff]
    %v221 = vld [vmem:[%s2 + $0x428] sm:$0xff]
    %v222 = vld [vmem:[%s2 + $0x430] sm:$0xff]
    %v223 = vld [vmem:[%s2 + $0x438] sm:$0xff]
    %v224 = vld [vmem:[%s2 + $0x440] sm:$0xff]
    %v225 = vld [vmem:[%s2 + $0x448] sm:$0xff]
    %v226 = vld [vmem:[%s2 + $0x450] sm:$0xff]
    %v227 = vld [vmem:[%s2 + $0x458] sm:$0xff]
    %v228 = vld [vmem:[%s2 + $0x460] sm:$0xff]
    %v229 = vld [vmem:[%s2 + $0x468] sm:$0xff]
    %v230 = vld [vmem:[%s2 + $0x470] sm:$0xff]
    %v231 = vld [vmem:[%s2 + $0x478] sm:$0xff]
    %v232 = vld [vmem:[%s2 + $0x480] sm:$0xff]
    %v233 = vld [vmem:[%s2 + $0x488] sm:$0xff]
    %v234 = vld [vmem:[%s2 + $0x490] sm:$0xff]
    %v235 = vld [vmem:[%s2 + $0x498] sm:$0xff]
    %v236 = vld [vmem:[%s2 + $0x4a0] sm:$0xff]
    %v237 = vld [vmem:[%s2 + $0x4a8] sm:$0xff]
    %v238 = vld [vmem:[%s2 + $0x4b0] sm:$0xff]
    %v239 = vld [vmem:[%s2 + $0x4b8] sm:$0xff]
    %v240 = vld [vmem:[%s2 + $0x4c0] sm:$0xff]
    %v241 = vld [vmem:[%s2 + $0x4c8] sm:$0xff]
    %v242 = vld [vmem:[%s2 + $0x4d0] sm:$0xff]
    %v243 = vld [vmem:[%s2 + $0x4d8] sm:$0xff]
    %v244 = vld [vmem:[%s2 + $0x4e0] sm:$0xff]
    %v245 = vld [vmem:[%s2 + $0x4e8] sm:$0xff]
    %v246 = vld [vmem:[%s2 + $0x4f0] sm:$0xff]
    %v247 = vld [vmem:[%s2 + $0x4f8] sm:$0xff]
    %v248 = vld [vmem:[%s2 + $0x500] sm:$0xff]
    %v249 = vld [vmem:[%s2 + $0x508] sm:$0xff]
    %v250 = vld [vmem:[%s2 + $0x510] sm:$0xff]
    %v251 = vld [vmem:[%s2 + $0x518] sm:$0xff]
    %v252 = vld [vmem:[%s2 + $0x520] sm:$0xff]
    %v253 = vld [vmem:[%s2 + $0x528] sm:$0xff]
    %v254 = vld [vmem:[%s2 + $0x530] sm:$0xff]
    %v255 = vld [vmem:[%s2 + $0x538] sm:$0xff]
    %v256 = vld [vmem:[%s2 + $0x540] sm:$0xff]
    %v257 = vld [vmem:[%s2 + $0x548] sm:$0xff]
    %v258 = vld [vmem:[%s2 + $0x550] sm:$0xff]
    %v259 = vld [vmem:[%s2 + $0x558] sm:$0xff]
    %v260 = vld [vmem:[%s2 + $0x560] sm:$0xff]
    %v261 = vld [vmem:[%s2 + $0x568] sm:$0xff]
    %v262 = vld [vmem:[%s2 + $0x570] sm:$0xff]
    %v263 = vld [vmem:[%s2 + $0x578] sm:$0xff]
    %v264 = vld [vmem:[%s2 + $0x580] sm:$0xff]
    %v265 = vld [vmem:[%s2 + $0x588] sm:$0xff]
    %v266 = vld [vmem:[%s2 + $0x590] sm:$0xff]
    %v267 = vld [vmem:[%s2 + $0x598] sm:$0xff]
    %v268 = vld [vmem:[%s2 + $0x5a0] sm:$0xff]
    %v269 = vld [vmem:[%s2 + $0x5a8] sm:$0xff]
    %v270 = vld [vmem:[%s2 + $0x5b0] sm:$0xff]
    %v271 = vld [vmem:[%s2 + $0x5b8] sm:$0xff]
    %v272 = vld [vmem:[%s2 + $0x5c0] sm:$0xff]
    %v273 = vld [vmem:[%s2 + $0x5c8] sm:$0xff]
    %v274 = vld [vmem:[%s2 + $0x5d0] sm:$0xff]
    %v275 = vld [vmem:[%s2 + $0x5d8] sm:$0xff]
    %v276 = vld [vmem:[%s2 + $0x5e0] sm:$0xff]
    %v277 = vld [vmem:[%s2 + $0x5e8] sm:$0xff]
    %v278 = vld [vmem:[%s2 + $0x5f0] sm:$0xff]
    %v279 = vld [vmem:[%s2 + $0x5f8] sm:$0xff]
    %v280 = vld [vmem:[%s2 + $0x600] sm:$0xff]
    %v281 = vld [vmem:[%s2 + $0x608] sm:$0xff]
    %v282 = vld [vmem:[%s2 + $0x610] sm:$0xff]
    %v283 = vld [vmem:[%s2 + $0x618] sm:$0xff]
    %v284 = vld [vmem:[%s2 + $0x620] sm:$0xff]
    %v285 = vld [vmem:[%s2 + $0x628] sm:$0xff]
    %v286 = vld [vmem:[%s2 + $0x630] sm:$0xff]
    %v287 = vld [vmem:[%s2 + $0x638] sm:$0xff]
    %v288 = vld [vmem:[%s2 + $0x640] sm:$0xff]
    %v289 = vld [vmem:[%s2 + $0x648] sm:$0xff]
    %v290 = vld [vmem:[%s2 + $0x650] sm:$0xff]
    %v291 = vld [vmem:[%s2 + $0x658] sm:$0xff]
    %v292 = vld [vmem:[%s2 + $0x660] sm:$0xff]
    %v293 = vld [vmem:[%s2 + $0x668] sm:$0xff]
    %v294 = vld [vmem:[%s2 + $0x670] sm:$0xff]
    %v295 = vld [vmem:[%s2 + $0x678] sm:$0xff]
    %v296 = vld [vmem:[%s2 + $0x680] sm:$0xff]
    %v297 = vld [vmem:[%s2 + $0x688] sm:$0xff]
    %v298 = vld [vmem:[%s2 + $0x690] sm:$0xff]
    %v299 = vld [vmem:[%s2 + $0x698] sm:$0xff]
    %v300 = vld [vmem:[%s2 + $0x6a0] sm:$0xff]
    %v301 = vld [vmem:[%s2 + $0x6a8] sm:$0xff]
    %v302 = vld [vmem:[%s2 + $0x6b0] sm:$0xff]
    %v303 = vld [vmem:[%s2 + $0x6b8] sm:$0xff]
    %v304 = vld [vmem:[%s2 + $0x6c0] sm:$0xff]
    %v305 = vld [vmem:[%s2 + $0x6c8] sm:$0xff]
    %v306 = vld [vmem:[%s2 + $0x6d0] sm:$0xff]
    %v307 = vld [vmem:[%s2 + $0x6d8] sm:$0xff]
    %v308 = vld [vmem:[%s2 + $0x6e0] sm:$0xff]
    %v309 = vld [vmem:[%s2 + $0x6e8] sm:$0xff]
    %v310 = vld [vmem:[%s2 + $0x6f0] sm:$0xff]
    %v311 = vld [vmem:[%s2 + $0x6f8] sm:$0xff]
    %v312 = vld [vmem:[%s2 + $0x700] sm:$0xff]
    %v313 = vld [vmem:[%s2 + $0x708] sm:$0xff]
    %v314 = vld [vmem:[%s2 + $0x710] sm:$0xff]
    %v315 = vld [vmem:[%s2 + $0x718] sm:$0xff]
    %v316 = vld [vmem:[%s2 + $0x720] sm:$0xff]
    %v317 = vld [vmem:[%s2 + $0x728] sm:$0xff]
    %v318 = vld [vmem:[%s2 + $0x730] sm:$0xff]
    %v319 = vld [vmem:[%s2 + $0x738] sm:$0xff]
    %v320 = vld [vmem:[%s2 + $0x740] sm:$0xff]
    %v321 = vld [vmem:[%s2 + $0x748] sm:$0xff]
    %v322 = vld [vmem:[%s2 + $0x750] sm:$0xff]
    %v323 = vld [vmem:[%s2 + $0x758] sm:$0xff]
    %v324 = vld [vmem:[%s2 + $0x760] sm:$0xff]
    %v325 = vld [vmem:[%s2 + $0x768] sm:$0xff]
    %v326 = vld [vmem:[%s2 + $0x770] sm:$0xff]
    %v327 = vld [vmem:[%s2 + $0x778] sm:$0xff]
    %v328 = vld [vmem:[%s2 + $0x780] sm:$0xff]
    %v329 = vld [vmem:[%s2 + $0x788] sm:$0xff]
    %v330 = vld [vmem:[%s2 + $0x790] sm:$0xff]
    %v331 = vld [vmem:[%s2 + $0x798] sm:$0xff]
    %v332 = vld [vmem:[%s2 + $0x7a0] sm:$0xff]
    %v333 = vld [vmem:[%s2 + $0x7a8] sm:$0xff]
    %v334 = vld [vmem:[%s2 + $0x7b0] sm:$0xff]
    %v335 = vld [vmem:[%s2 + $0x7b8] sm:$0xff]
    %v336 = vld [vmem:[%s2 + $0x7c0] sm:$0xff]
    %v337 = vld [vmem:[%s2 + $0x7c8] sm:$0xff]
    %v338 = vld [vmem:[%s2 + $0x7d0] sm:$0xff]
    %v339 = vld [vmem:[%s2 + $0x7d8] sm:$0xff]
    %v340 = vld [vmem:[%s2 + $0x7e0] sm:$0xff]
    %v341 = vld [vmem:[%s2 + $0x7e8] sm:$0xff]
    %v342 = vld [vmem:[%s2 + $0x7f0] sm:$0xff]
    %v343 = vld [vmem:[%s2 + $0x7f8] sm:$0xff]
    %v344 = vld [vmem:[%s3] sm:$0xf]
    %v346 = vlaneseq
    %v347 = vshrl.u32 %v346, 7
    %v348 = vsub.s32 0, %v347
    %v349 = vrot.slane %v344, %v348
    %v350 = vlaneseq
    %v351 = vshrl.u32 %v350, 7
    %v352 = vsub.s32 1, %v351
    %v353 = vrot.slane %v344, %v352
    %v354 = vlaneseq
    %v355 = vshrl.u32 %v354, 7
    %v356 = vsub.s32 2, %v355
    %v357 = vrot.slane %v344, %v356
    %v358 = vlaneseq
    %v359 = vshrl.u32 %v358, 7
    %v360 = vsub.s32 3, %v359
    %v361 = vrot.slane %v344, %v360
    %v622 = vunpack.c.l.b16 %v88
    %v623 = vunpack.c.h.b16 %v88
    %v624 = vunpack.c.l.b16 %v89
    %v625 = vunpack.c.h.b16 %v89
    %v626 = vunpack.c.l.b16 %v90
    %v627 = vunpack.c.h.b16 %v90
    %v628 = vunpack.c.l.b16 %v91
    %v629 = vunpack.c.h.b16 %v91
    %v630 = vunpack.c.l.b16 %v92
    %v631 = vunpack.c.h.b16 %v92
    %v632 = vunpack.c.l.b16 %v93
    %v633 = vunpack.c.h.b16 %v93
    %v634 = vunpack.c.l.b16 %v94
    %v635 = vunpack.c.h.b16 %v94
    %v636 = vunpack.c.l.b16 %v95
    %v637 = vunpack.c.h.b16 %v95
    %v638 = vunpack.c.l.b16 %v96
    %v639 = vunpack.c.h.b16 %v96
    %v640 = vunpack.c.l.b16 %v97
    %v641 = vunpack.c.h.b16 %v97
    %v642 = vunpack.c.l.b16 %v98
    %v643 = vunpack.c.h.b16 %v98
    %v644 = vunpack.c.l.b16 %v99
    %v645 = vunpack.c.h.b16 %v99
    %v646 = vunpack.c.l.b16 %v100
    %v647 = vunpack.c.h.b16 %v100
    %v648 = vunpack.c.l.b16 %v101
    %v649 = vunpack.c.h.b16 %v101
    %v650 = vunpack.c.l.b16 %v102
    %v651 = vunpack.c.h.b16 %v102
    %v652 = vunpack.c.l.b16 %v103
    %v653 = vunpack.c.h.b16 %v103
    %v654 = vunpack.c.l.b16 %v104
    %v655 = vunpack.c.h.b16 %v104
    %v656 = vunpack.c.l.b16 %v105
    %v657 = vunpack.c.h.b16 %v105
    %v658 = vunpack.c.l.b16 %v106
    %v659 = vunpack.c.h.b16 %v106
    %v660 = vunpack.c.l.b16 %v107
    %v661 = vunpack.c.h.b16 %v107
    %v662 = vunpack.c.l.b16 %v108
    %v663 = vunpack.c.h.b16 %v108
    %v664 = vunpack.c.l.b16 %v109
    %v665 = vunpack.c.h.b16 %v109
    %v666 = vunpack.c.l.b16 %v110
    %v667 = vunpack.c.h.b16 %v110
    %v668 = vunpack.c.l.b16 %v111
    %v669 = vunpack.c.h.b16 %v111
    %v670 = vunpack.c.l.b16 %v112
    %v671 = vunpack.c.h.b16 %v112
    %v672 = vunpack.c.l.b16 %v113
    %v673 = vunpack.c.h.b16 %v113
    %v674 = vunpack.c.l.b16 %v114
    %v675 = vunpack.c.h.b16 %v114
    %v676 = vunpack.c.l.b16 %v115
    %v677 = vunpack.c.h.b16 %v115
    %v678 = vunpack.c.l.b16 %v116
    %v679 = vunpack.c.h.b16 %v116
    %v680 = vunpack.c.l.b16 %v117
    %v681 = vunpack.c.h.b16 %v117
    %v682 = vunpack.c.l.b16 %v118
    %v683 = vunpack.c.h.b16 %v118
    %v684 = vunpack.c.l.b16 %v119
    %v685 = vunpack.c.h.b16 %v119
    %v686 = vunpack.c.l.b16 %v120
    %v687 = vunpack.c.h.b16 %v120
    %v688 = vunpack.c.l.b16 %v121
    %v689 = vunpack.c.h.b16 %v121
    %v690 = vunpack.c.l.b16 %v122
    %v691 = vunpack.c.h.b16 %v122
    %v692 = vunpack.c.l.b16 %v123
    %v693 = vunpack.c.h.b16 %v123
    %v694 = vunpack.c.l.b16 %v124
    %v695 = vunpack.c.h.b16 %v124
    %v696 = vunpack.c.l.b16 %v125
    %v697 = vunpack.c.h.b16 %v125
    %v698 = vunpack.c.l.b16 %v126
    %v699 = vunpack.c.h.b16 %v126
    %v700 = vunpack.c.l.b16 %v127
    %v701 = vunpack.c.h.b16 %v127
    %v702 = vunpack.c.l.b16 %v128
    %v703 = vunpack.c.h.b16 %v128
    %v704 = vunpack.c.l.b16 %v129
    %v705 = vunpack.c.h.b16 %v129
    %v706 = vunpack.c.l.b16 %v130
    %v707 = vunpack.c.h.b16 %v130
    %v708 = vunpack.c.l.b16 %v131
    %v709 = vunpack.c.h.b16 %v131
    %v710 = vunpack.c.l.b16 %v132
    %v711 = vunpack.c.h.b16 %v132
    %v712 = vunpack.c.l.b16 %v133
    %v713 = vunpack.c.h.b16 %v133
    %v714 = vunpack.c.l.b16 %v134
    %v715 = vunpack.c.h.b16 %v134
    %v716 = vunpack.c.l.b16 %v135
    %v717 = vunpack.c.h.b16 %v135
    %v718 = vunpack.c.l.b16 %v136
    %v719 = vunpack.c.h.b16 %v136
    %v720 = vunpack.c.l.b16 %v137
    %v721 = vunpack.c.h.b16 %v137
    %v722 = vunpack.c.l.b16 %v138
    %v723 = vunpack.c.h.b16 %v138
    %v724 = vunpack.c.l.b16 %v139
    %v725 = vunpack.c.h.b16 %v139
    %v726 = vunpack.c.l.b16 %v140
    %v727 = vunpack.c.h.b16 %v140
    %v728 = vunpack.c.l.b16 %v141
    %v729 = vunpack.c.h.b16 %v141
    %v730 = vunpack.c.l.b16 %v142
    %v731 = vunpack.c.h.b16 %v142
    %v732 = vunpack.c.l.b16 %v143
    %v733 = vunpack.c.h.b16 %v143
    %v734 = vunpack.c.l.b16 %v144
    %v735 = vunpack.c.h.b16 %v144
    %v736 = vunpack.c.l.b16 %v145
    %v737 = vunpack.c.h.b16 %v145
    %v738 = vunpack.c.l.b16 %v146
    %v739 = vunpack.c.h.b16 %v146
    %v740 = vunpack.c.l.b16 %v147
    %v741 = vunpack.c.h.b16 %v147
    %v742 = vunpack.c.l.b16 %v148
    %v743 = vunpack.c.h.b16 %v148
    %v744 = vunpack.c.l.b16 %v149
    %v745 = vunpack.c.h.b16 %v149
    %v746 = vunpack.c.l.b16 %v150
    %v747 = vunpack.c.h.b16 %v150
    %v748 = vunpack.c.l.b16 %v151
    %v749 = vunpack.c.h.b16 %v151
    %v750 = vunpack.c.l.b16 %v152
    %v751 = vunpack.c.h.b16 %v152
    %v752 = vunpack.c.l.b16 %v153
    %v753 = vunpack.c.h.b16 %v153
    %v754 = vunpack.c.l.b16 %v154
    %v755 = vunpack.c.h.b16 %v154
    %v756 = vunpack.c.l.b16 %v155
    %v757 = vunpack.c.h.b16 %v155
    %v758 = vunpack.c.l.b16 %v156
    %v759 = vunpack.c.h.b16 %v156
    %v760 = vunpack.c.l.b16 %v157
    %v761 = vunpack.c.h.b16 %v157
    %v762 = vunpack.c.l.b16 %v158
    %v763 = vunpack.c.h.b16 %v158
    %v764 = vunpack.c.l.b16 %v159
    %v765 = vunpack.c.h.b16 %v159
    %v766 = vunpack.c.l.b16 %v160
    %v767 = vunpack.c.h.b16 %v160
    %v768 = vunpack.c.l.b16 %v161
    %v769 = vunpack.c.h.b16 %v161
    %v770 = vunpack.c.l.b16 %v162
    %v771 = vunpack.c.h.b16 %v162
    %v772 = vunpack.c.l.b16 %v163
    %v773 = vunpack.c.h.b16 %v163
    %v774 = vunpack.c.l.b16 %v164
    %v775 = vunpack.c.h.b16 %v164
    %v776 = vunpack.c.l.b16 %v165
    %v777 = vunpack.c.h.b16 %v165
    %v778 = vunpack.c.l.b16 %v166
    %v779 = vunpack.c.h.b16 %v166
    %v780 = vunpack.c.l.b16 %v167
    %v781 = vunpack.c.h.b16 %v167
    %v782 = vunpack.c.l.b16 %v168
    %v783 = vunpack.c.h.b16 %v168
    %v784 = vunpack.c.l.b16 %v169
    %v785 = vunpack.c.h.b16 %v169
    %v786 = vunpack.c.l.b16 %v170
    %v787 = vunpack.c.h.b16 %v170
    %v788 = vunpack.c.l.b16 %v171
    %v789 = vunpack.c.h.b16 %v171
    %v790 = vunpack.c.l.b16 %v172
    %v791 = vunpack.c.h.b16 %v172
    %v792 = vunpack.c.l.b16 %v173
    %v793 = vunpack.c.h.b16 %v173
    %v794 = vunpack.c.l.b16 %v174
    %v795 = vunpack.c.h.b16 %v174
    %v796 = vunpack.c.l.b16 %v175
    %v797 = vunpack.c.h.b16 %v175
    %v798 = vunpack.c.l.b16 %v176
    %v799 = vunpack.c.h.b16 %v176
    %v800 = vunpack.c.l.b16 %v177
    %v801 = vunpack.c.h.b16 %v177
    %v802 = vunpack.c.l.b16 %v178
    %v803 = vunpack.c.h.b16 %v178
    %v804 = vunpack.c.l.b16 %v179
    %v805 = vunpack.c.h.b16 %v179
    %v806 = vunpack.c.l.b16 %v180
    %v807 = vunpack.c.h.b16 %v180
    %v808 = vunpack.c.l.b16 %v181
    %v809 = vunpack.c.h.b16 %v181
    %v810 = vunpack.c.l.b16 %v182
    %v811 = vunpack.c.h.b16 %v182
    %v812 = vunpack.c.l.b16 %v183
    %v813 = vunpack.c.h.b16 %v183
    %v814 = vunpack.c.l.b16 %v184
    %v815 = vunpack.c.h.b16 %v184
    %v816 = vunpack.c.l.b16 %v185
    %v817 = vunpack.c.h.b16 %v185
    %v818 = vunpack.c.l.b16 %v186
    %v819 = vunpack.c.h.b16 %v186
    %v820 = vunpack.c.l.b16 %v187
    %v821 = vunpack.c.h.b16 %v187
    %v822 = vunpack.c.l.b16 %v188
    %v823 = vunpack.c.h.b16 %v188
    %v824 = vunpack.c.l.b16 %v189
    %v825 = vunpack.c.h.b16 %v189
    %v826 = vunpack.c.l.b16 %v190
    %v827 = vunpack.c.h.b16 %v190
    %v828 = vunpack.c.l.b16 %v191
    %v829 = vunpack.c.h.b16 %v191
    %v830 = vunpack.c.l.b16 %v192
    %v831 = vunpack.c.h.b16 %v192
    %v832 = vunpack.c.l.b16 %v193
    %v833 = vunpack.c.h.b16 %v193
    %v834 = vunpack.c.l.b16 %v194
    %v835 = vunpack.c.h.b16 %v194
    %v836 = vunpack.c.l.b16 %v195
    %v837 = vunpack.c.h.b16 %v195
    %v838 = vunpack.c.l.b16 %v196
    %v839 = vunpack.c.h.b16 %v196
    %v840 = vunpack.c.l.b16 %v197
    %v841 = vunpack.c.h.b16 %v197
    %v842 = vunpack.c.l.b16 %v198
    %v843 = vunpack.c.h.b16 %v198
    %v844 = vunpack.c.l.b16 %v199
    %v845 = vunpack.c.h.b16 %v199
    %v846 = vunpack.c.l.b16 %v200
    %v847 = vunpack.c.h.b16 %v200
    %v848 = vunpack.c.l.b16 %v201
    %v849 = vunpack.c.h.b16 %v201
    %v850 = vunpack.c.l.b16 %v202
    %v851 = vunpack.c.h.b16 %v202
    %v852 = vunpack.c.l.b16 %v203
    %v853 = vunpack.c.h.b16 %v203
    %v854 = vunpack.c.l.b16 %v204
    %v855 = vunpack.c.h.b16 %v204
    %v856 = vunpack.c.l.b16 %v205
    %v857 = vunpack.c.h.b16 %v205
    %v858 = vunpack.c.l.b16 %v206
    %v859 = vunpack.c.h.b16 %v206
    %v860 = vunpack.c.l.b16 %v207
    %v861 = vunpack.c.h.b16 %v207
    %v862 = vunpack.c.l.b16 %v208
    %v863 = vunpack.c.h.b16 %v208
    %v864 = vunpack.c.l.b16 %v209
    %v865 = vunpack.c.h.b16 %v209
    %v866 = vunpack.c.l.b16 %v210
    %v867 = vunpack.c.h.b16 %v210
    %v868 = vunpack.c.l.b16 %v211
    %v869 = vunpack.c.h.b16 %v211
    %v870 = vunpack.c.l.b16 %v212
    %v871 = vunpack.c.h.b16 %v212
    %v872 = vunpack.c.l.b16 %v213
    %v873 = vunpack.c.h.b16 %v213
    %v874 = vunpack.c.l.b16 %v214
    %v875 = vunpack.c.h.b16 %v214
    %v876 = vunpack.c.l.b16 %v215
    %v877 = vunpack.c.h.b16 %v215
    %v878 = vunpack.c.l.b16 %v216
    %v879 = vunpack.c.h.b16 %v216
    %v880 = vunpack.c.l.b16 %v217
    %v881 = vunpack.c.h.b16 %v217
    %v882 = vunpack.c.l.b16 %v218
    %v883 = vunpack.c.h.b16 %v218
    %v884 = vunpack.c.l.b16 %v219
    %v885 = vunpack.c.h.b16 %v219
    %v886 = vunpack.c.l.b16 %v220
    %v887 = vunpack.c.h.b16 %v220
    %v888 = vunpack.c.l.b16 %v221
    %v889 = vunpack.c.h.b16 %v221
    %v890 = vunpack.c.l.b16 %v222
    %v891 = vunpack.c.h.b16 %v222
    %v892 = vunpack.c.l.b16 %v223
    %v893 = vunpack.c.h.b16 %v223
    %v894 = vunpack.c.l.b16 %v224
    %v895 = vunpack.c.h.b16 %v224
    %v896 = vunpack.c.l.b16 %v225
    %v897 = vunpack.c.h.b16 %v225
    %v898 = vunpack.c.l.b16 %v226
    %v899 = vunpack.c.h.b16 %v226
    %v900 = vunpack.c.l.b16 %v227
    %v901 = vunpack.c.h.b16 %v227
    %v902 = vunpack.c.l.b16 %v228
    %v903 = vunpack.c.h.b16 %v228
    %v904 = vunpack.c.l.b16 %v229
    %v905 = vunpack.c.h.b16 %v229
    %v906 = vunpack.c.l.b16 %v230
    %v907 = vunpack.c.h.b16 %v230
    %v908 = vunpack.c.l.b16 %v231
    %v909 = vunpack.c.h.b16 %v231
    %v910 = vunpack.c.l.b16 %v232
    %v911 = vunpack.c.h.b16 %v232
    %v912 = vunpack.c.l.b16 %v233
    %v913 = vunpack.c.h.b16 %v233
    %v914 = vunpack.c.l.b16 %v234
    %v915 = vunpack.c.h.b16 %v234
    %v916 = vunpack.c.l.b16 %v235
    %v917 = vunpack.c.h.b16 %v235
    %v918 = vunpack.c.l.b16 %v236
    %v919 = vunpack.c.h.b16 %v236
    %v920 = vunpack.c.l.b16 %v237
    %v921 = vunpack.c.h.b16 %v237
    %v922 = vunpack.c.l.b16 %v238
    %v923 = vunpack.c.h.b16 %v238
    %v924 = vunpack.c.l.b16 %v239
    %v925 = vunpack.c.h.b16 %v239
    %v926 = vunpack.c.l.b16 %v240
    %v927 = vunpack.c.h.b16 %v240
    %v928 = vunpack.c.l.b16 %v241
    %v929 = vunpack.c.h.b16 %v241
    %v930 = vunpack.c.l.b16 %v242
    %v931 = vunpack.c.h.b16 %v242
    %v932 = vunpack.c.l.b16 %v243
    %v933 = vunpack.c.h.b16 %v243
    %v934 = vunpack.c.l.b16 %v244
    %v935 = vunpack.c.h.b16 %v244
    %v936 = vunpack.c.l.b16 %v245
    %v937 = vunpack.c.h.b16 %v245
    %v938 = vunpack.c.l.b16 %v246
    %v939 = vunpack.c.h.b16 %v246
    %v940 = vunpack.c.l.b16 %v247
    %v941 = vunpack.c.h.b16 %v247
    %v942 = vunpack.c.l.b16 %v248
    %v943 = vunpack.c.h.b16 %v248
    %v944 = vunpack.c.l.b16 %v249
    %v945 = vunpack.c.h.b16 %v249
    %v946 = vunpack.c.l.b16 %v250
    %v947 = vunpack.c.h.b16 %v250
    %v948 = vunpack.c.l.b16 %v251
    %v949 = vunpack.c.h.b16 %v251
    %v950 = vunpack.c.l.b16 %v252
    %v951 = vunpack.c.h.b16 %v252
    %v952 = vunpack.c.l.b16 %v253
    %v953 = vunpack.c.h.b16 %v253
    %v954 = vunpack.c.l.b16 %v254
    %v955 = vunpack.c.h.b16 %v254
    %v956 = vunpack.c.l.b16 %v255
    %v957 = vunpack.c.h.b16 %v255
    %v958 = vunpack.c.l.b16 %v256
    %v959 = vunpack.c.h.b16 %v256
    %v960 = vunpack.c.l.b16 %v257
    %v961 = vunpack.c.h.b16 %v257
    %v962 = vunpack.c.l.b16 %v258
    %v963 = vunpack.c.h.b16 %v258
    %v964 = vunpack.c.l.b16 %v259
    %v965 = vunpack.c.h.b16 %v259
    %v966 = vunpack.c.l.b16 %v260
    %v967 = vunpack.c.h.b16 %v260
    %v968 = vunpack.c.l.b16 %v261
    %v969 = vunpack.c.h.b16 %v261
    %v970 = vunpack.c.l.b16 %v262
    %v971 = vunpack.c.h.b16 %v262
    %v972 = vunpack.c.l.b16 %v263
    %v973 = vunpack.c.h.b16 %v263
    %v974 = vunpack.c.l.b16 %v264
    %v975 = vunpack.c.h.b16 %v264
    %v976 = vunpack.c.l.b16 %v265
    %v977 = vunpack.c.h.b16 %v265
    %v978 = vunpack.c.l.b16 %v266
    %v979 = vunpack.c.h.b16 %v266
    %v980 = vunpack.c.l.b16 %v267
    %v981 = vunpack.c.h.b16 %v267
    %v982 = vunpack.c.l.b16 %v268
    %v983 = vunpack.c.h.b16 %v268
    %v984 = vunpack.c.l.b16 %v269
    %v985 = vunpack.c.h.b16 %v269
    %v986 = vunpack.c.l.b16 %v270
    %v987 = vunpack.c.h.b16 %v270
    %v988 = vunpack.c.l.b16 %v271
    %v989 = vunpack.c.h.b16 %v271
    %v990 = vunpack.c.l.b16 %v272
    %v991 = vunpack.c.h.b16 %v272
    %v992 = vunpack.c.l.b16 %v273
    %v993 = vunpack.c.h.b16 %v273
    %v994 = vunpack.c.l.b16 %v274
    %v995 = vunpack.c.h.b16 %v274
    %v996 = vunpack.c.l.b16 %v275
    %v997 = vunpack.c.h.b16 %v275
    %v998 = vunpack.c.l.b16 %v276
    %v999 = vunpack.c.h.b16 %v276
    %v1000 = vunpack.c.l.b16 %v277
    %v1001 = vunpack.c.h.b16 %v277
    %v1002 = vunpack.c.l.b16 %v278
    %v1003 = vunpack.c.h.b16 %v278
    %v1004 = vunpack.c.l.b16 %v279
    %v1005 = vunpack.c.h.b16 %v279
    %v1006 = vunpack.c.l.b16 %v280
    %v1007 = vunpack.c.h.b16 %v280
    %v1008 = vunpack.c.l.b16 %v281
    %v1009 = vunpack.c.h.b16 %v281
    %v1010 = vunpack.c.l.b16 %v282
    %v1011 = vunpack.c.h.b16 %v282
    %v1012 = vunpack.c.l.b16 %v283
    %v1013 = vunpack.c.h.b16 %v283
    %v1014 = vunpack.c.l.b16 %v284
    %v1015 = vunpack.c.h.b16 %v284
    %v1016 = vunpack.c.l.b16 %v285
    %v1017 = vunpack.c.h.b16 %v285
    %v1018 = vunpack.c.l.b16 %v286
    %v1019 = vunpack.c.h.b16 %v286
    %v1020 = vunpack.c.l.b16 %v287
    %v1021 = vunpack.c.h.b16 %v287
    %v1022 = vunpack.c.l.b16 %v288
    %v1023 = vunpack.c.h.b16 %v288
    %v1024 = vunpack.c.l.b16 %v289
    %v1025 = vunpack.c.h.b16 %v289
    %v1026 = vunpack.c.l.b16 %v290
    %v1027 = vunpack.c.h.b16 %v290
    %v1028 = vunpack.c.l.b16 %v291
    %v1029 = vunpack.c.h.b16 %v291
    %v1030 = vunpack.c.l.b16 %v292
    %v1031 = vunpack.c.h.b16 %v292
    %v1032 = vunpack.c.l.b16 %v293
    %v1033 = vunpack.c.h.b16 %v293
    %v1034 = vunpack.c.l.b16 %v294
    %v1035 = vunpack.c.h.b16 %v294
    %v1036 = vunpack.c.l.b16 %v295
    %v1037 = vunpack.c.h.b16 %v295
    %v1038 = vunpack.c.l.b16 %v296
    %v1039 = vunpack.c.h.b16 %v296
    %v1040 = vunpack.c.l.b16 %v297
    %v1041 = vunpack.c.h.b16 %v297
    %v1042 = vunpack.c.l.b16 %v298
    %v1043 = vunpack.c.h.b16 %v298
    %v1044 = vunpack.c.l.b16 %v299
    %v1045 = vunpack.c.h.b16 %v299
    %v1046 = vunpack.c.l.b16 %v300
    %v1047 = vunpack.c.h.b16 %v300
    %v1048 = vunpack.c.l.b16 %v301
    %v1049 = vunpack.c.h.b16 %v301
    %v1050 = vunpack.c.l.b16 %v302
    %v1051 = vunpack.c.h.b16 %v302
    %v1052 = vunpack.c.l.b16 %v303
    %v1053 = vunpack.c.h.b16 %v303
    %v1054 = vunpack.c.l.b16 %v304
    %v1055 = vunpack.c.h.b16 %v304
    %v1056 = vunpack.c.l.b16 %v305
    %v1057 = vunpack.c.h.b16 %v305
    %v1058 = vunpack.c.l.b16 %v306
    %v1059 = vunpack.c.h.b16 %v306
    %v1060 = vunpack.c.l.b16 %v307
    %v1061 = vunpack.c.h.b16 %v307
    %v1062 = vunpack.c.l.b16 %v308
    %v1063 = vunpack.c.h.b16 %v308
    %v1064 = vunpack.c.l.b16 %v309
    %v1065 = vunpack.c.h.b16 %v309
    %v1066 = vunpack.c.l.b16 %v310
    %v1067 = vunpack.c.h.b16 %v310
    %v1068 = vunpack.c.l.b16 %v311
    %v1069 = vunpack.c.h.b16 %v311
    %v1070 = vunpack.c.l.b16 %v312
    %v1071 = vunpack.c.h.b16 %v312
    %v1072 = vunpack.c.l.b16 %v313
    %v1073 = vunpack.c.h.b16 %v313
    %v1074 = vunpack.c.l.b16 %v314
    %v1075 = vunpack.c.h.b16 %v314
    %v1076 = vunpack.c.l.b16 %v315
    %v1077 = vunpack.c.h.b16 %v315
    %v1078 = vunpack.c.l.b16 %v316
    %v1079 = vunpack.c.h.b16 %v316
    %v1080 = vunpack.c.l.b16 %v317
    %v1081 = vunpack.c.h.b16 %v317
    %v1082 = vunpack.c.l.b16 %v318
    %v1083 = vunpack.c.h.b16 %v318
    %v1084 = vunpack.c.l.b16 %v319
    %v1085 = vunpack.c.h.b16 %v319
    %v1086 = vunpack.c.l.b16 %v320
    %v1087 = vunpack.c.h.b16 %v320
    %v1088 = vunpack.c.l.b16 %v321
    %v1089 = vunpack.c.h.b16 %v321
    %v1090 = vunpack.c.l.b16 %v322
    %v1091 = vunpack.c.h.b16 %v322
    %v1092 = vunpack.c.l.b16 %v323
    %v1093 = vunpack.c.h.b16 %v323
    %v1094 = vunpack.c.l.b16 %v324
    %v1095 = vunpack.c.h.b16 %v324
    %v1096 = vunpack.c.l.b16 %v325
    %v1097 = vunpack.c.h.b16 %v325
    %v1098 = vunpack.c.l.b16 %v326
    %v1099 = vunpack.c.h.b16 %v326
    %v1100 = vunpack.c.l.b16 %v327
    %v1101 = vunpack.c.h.b16 %v327
    %v1102 = vunpack.c.l.b16 %v328
    %v1103 = vunpack.c.h.b16 %v328
    %v1104 = vunpack.c.l.b16 %v329
    %v1105 = vunpack.c.h.b16 %v329
    %v1106 = vunpack.c.l.b16 %v330
    %v1107 = vunpack.c.h.b16 %v330
    %v1108 = vunpack.c.l.b16 %v331
    %v1109 = vunpack.c.h.b16 %v331
    %v1110 = vunpack.c.l.b16 %v332
    %v1111 = vunpack.c.h.b16 %v332
    %v1112 = vunpack.c.l.b16 %v333
    %v1113 = vunpack.c.h.b16 %v333
    %v1114 = vunpack.c.l.b16 %v334
    %v1115 = vunpack.c.h.b16 %v334
    %v1116 = vunpack.c.l.b16 %v335
    %v1117 = vunpack.c.h.b16 %v335
    %v1118 = vunpack.c.l.b16 %v336
    %v1119 = vunpack.c.h.b16 %v336
    %v1120 = vunpack.c.l.b16 %v337
    %v1121 = vunpack.c.h.b16 %v337
    %v1122 = vunpack.c.l.b16 %v338
    %v1123 = vunpack.c.h.b16 %v338
    %v1124 = vunpack.c.l.b16 %v339
    %v1125 = vunpack.c.h.b16 %v339
    %v1126 = vunpack.c.l.b16 %v340
    %v1127 = vunpack.c.h.b16 %v340
    %v1128 = vunpack.c.l.b16 %v341
    %v1129 = vunpack.c.h.b16 %v341
    %v1130 = vunpack.c.l.b16 %v342
    %v1131 = vunpack.c.h.b16 %v342
    %v1132 = vunpack.c.l.b16 %v343
    %v1133 = vunpack.c.h.b16 %v343
    %v1134 = vpack.c.b16 %v626, %v622
    %v1135 = vpack.c.b16 %v627, %v623
    %v1136 = vpack.c.b16 %v628, %v624
    %v1137 = vpack.c.b16 %v629, %v625
    %v1138 = vpack.c.b16 %v634, %v630
    %v1139 = vpack.c.b16 %v635, %v631
    %v1140 = vpack.c.b16 %v636, %v632
    %v1141 = vpack.c.b16 %v637, %v633
    %v1142 = vpack.c.b16 %v642, %v638
    %v1143 = vpack.c.b16 %v643, %v639
    %v1144 = vpack.c.b16 %v644, %v640
    %v1145 = vpack.c.b16 %v645, %v641
    %v1146 = vpack.c.b16 %v650, %v646
    %v1147 = vpack.c.b16 %v651, %v647
    %v1148 = vpack.c.b16 %v652, %v648
    %v1149 = vpack.c.b16 %v653, %v649
    %v1150 = vpack.c.b16 %v658, %v654
    %v1151 = vpack.c.b16 %v659, %v655
    %v1152 = vpack.c.b16 %v660, %v656
    %v1153 = vpack.c.b16 %v661, %v657
    %v1154 = vpack.c.b16 %v666, %v662
    %v1155 = vpack.c.b16 %v667, %v663
    %v1156 = vpack.c.b16 %v668, %v664
    %v1157 = vpack.c.b16 %v669, %v665
    %v1158 = vpack.c.b16 %v674, %v670
    %v1159 = vpack.c.b16 %v675, %v671
    %v1160 = vpack.c.b16 %v676, %v672
    %v1161 = vpack.c.b16 %v677, %v673
    %v1162 = vpack.c.b16 %v682, %v678
    %v1163 = vpack.c.b16 %v683, %v679
    %v1164 = vpack.c.b16 %v684, %v680
    %v1165 = vpack.c.b16 %v685, %v681
    %v1166 = vpack.c.b16 %v690, %v686
    %v1167 = vpack.c.b16 %v691, %v687
    %v1168 = vpack.c.b16 %v692, %v688
    %v1169 = vpack.c.b16 %v693, %v689
    %v1170 = vpack.c.b16 %v698, %v694
    %v1171 = vpack.c.b16 %v699, %v695
    %v1172 = vpack.c.b16 %v700, %v696
    %v1173 = vpack.c.b16 %v701, %v697
    %v1174 = vpack.c.b16 %v706, %v702
    %v1175 = vpack.c.b16 %v707, %v703
    %v1176 = vpack.c.b16 %v708, %v704
    %v1177 = vpack.c.b16 %v709, %v705
    %v1178 = vpack.c.b16 %v714, %v710
    %v1179 = vpack.c.b16 %v715, %v711
    %v1180 = vpack.c.b16 %v716, %v712
    %v1181 = vpack.c.b16 %v717, %v713
    %v1182 = vpack.c.b16 %v722, %v718
    %v1183 = vpack.c.b16 %v723, %v719
    %v1184 = vpack.c.b16 %v724, %v720
    %v1185 = vpack.c.b16 %v725, %v721
    %v1186 = vpack.c.b16 %v730, %v726
    %v1187 = vpack.c.b16 %v731, %v727
    %v1188 = vpack.c.b16 %v732, %v728
    %v1189 = vpack.c.b16 %v733, %v729
    %v1190 = vpack.c.b16 %v738, %v734
    %v1191 = vpack.c.b16 %v739, %v735
    %v1192 = vpack.c.b16 %v740, %v736
    %v1193 = vpack.c.b16 %v741, %v737
    %v1194 = vpack.c.b16 %v746, %v742
    %v1195 = vpack.c.b16 %v747, %v743
    %v1196 = vpack.c.b16 %v748, %v744
    %v1197 = vpack.c.b16 %v749, %v745
    %v1198 = vpack.c.b16 %v754, %v750
    %v1199 = vpack.c.b16 %v755, %v751
    %v1200 = vpack.c.b16 %v756, %v752
    %v1201 = vpack.c.b16 %v757, %v753
    %v1202 = vpack.c.b16 %v762, %v758
    %v1203 = vpack.c.b16 %v763, %v759
    %v1204 = vpack.c.b16 %v764, %v760
    %v1205 = vpack.c.b16 %v765, %v761
    %v1206 = vpack.c.b16 %v770, %v766
    %v1207 = vpack.c.b16 %v771, %v767
    %v1208 = vpack.c.b16 %v772, %v768
    %v1209 = vpack.c.b16 %v773, %v769
    %v1210 = vpack.c.b16 %v778, %v774
    %v1211 = vpack.c.b16 %v779, %v775
    %v1212 = vpack.c.b16 %v780, %v776
    %v1213 = vpack.c.b16 %v781, %v777
    %v1214 = vpack.c.b16 %v786, %v782
    %v1215 = vpack.c.b16 %v787, %v783
    %v1216 = vpack.c.b16 %v788, %v784
    %v1217 = vpack.c.b16 %v789, %v785
    %v1218 = vpack.c.b16 %v794, %v790
    %v1219 = vpack.c.b16 %v795, %v791
    %v1220 = vpack.c.b16 %v796, %v792
    %v1221 = vpack.c.b16 %v797, %v793
    %v1222 = vpack.c.b16 %v802, %v798
    %v1223 = vpack.c.b16 %v803, %v799
    %v1224 = vpack.c.b16 %v804, %v800
    %v1225 = vpack.c.b16 %v805, %v801
    %v1226 = vpack.c.b16 %v810, %v806
    %v1227 = vpack.c.b16 %v811, %v807
    %v1228 = vpack.c.b16 %v812, %v808
    %v1229 = vpack.c.b16 %v813, %v809
    %v1230 = vpack.c.b16 %v818, %v814
    %v1231 = vpack.c.b16 %v819, %v815
    %v1232 = vpack.c.b16 %v820, %v816
    %v1233 = vpack.c.b16 %v821, %v817
    %v1234 = vpack.c.b16 %v826, %v822
    %v1235 = vpack.c.b16 %v827, %v823
    %v1236 = vpack.c.b16 %v828, %v824
    %v1237 = vpack.c.b16 %v829, %v825
    %v1238 = vpack.c.b16 %v834, %v830
    %v1239 = vpack.c.b16 %v835, %v831
    %v1240 = vpack.c.b16 %v836, %v832
    %v1241 = vpack.c.b16 %v837, %v833
    %v1242 = vpack.c.b16 %v842, %v838
    %v1243 = vpack.c.b16 %v843, %v839
    %v1244 = vpack.c.b16 %v844, %v840
    %v1245 = vpack.c.b16 %v845, %v841
    %v1246 = vpack.c.b16 %v850, %v846
    %v1247 = vpack.c.b16 %v851, %v847
    %v1248 = vpack.c.b16 %v852, %v848
    %v1249 = vpack.c.b16 %v853, %v849
    %v1250 = vpack.c.b16 %v858, %v854
    %v1251 = vpack.c.b16 %v859, %v855
    %v1252 = vpack.c.b16 %v860, %v856
    %v1253 = vpack.c.b16 %v861, %v857
    %v1254 = vpack.c.b16 %v866, %v862
    %v1255 = vpack.c.b16 %v867, %v863
    %v1256 = vpack.c.b16 %v868, %v864
    %v1257 = vpack.c.b16 %v869, %v865
    %v1258 = vpack.c.b16 %v874, %v870
    %v1259 = vpack.c.b16 %v875, %v871
    %v1260 = vpack.c.b16 %v876, %v872
    %v1261 = vpack.c.b16 %v877, %v873
    %v1262 = vpack.c.b16 %v882, %v878
    %v1263 = vpack.c.b16 %v883, %v879
    %v1264 = vpack.c.b16 %v884, %v880
    %v1265 = vpack.c.b16 %v885, %v881
    %v1266 = vpack.c.b16 %v890, %v886
    %v1267 = vpack.c.b16 %v891, %v887
    %v1268 = vpack.c.b16 %v892, %v888
    %v1269 = vpack.c.b16 %v893, %v889
    %v1270 = vpack.c.b16 %v898, %v894
    %v1271 = vpack.c.b16 %v899, %v895
    %v1272 = vpack.c.b16 %v900, %v896
    %v1273 = vpack.c.b16 %v901, %v897
    %v1274 = vpack.c.b16 %v906, %v902
    %v1275 = vpack.c.b16 %v907, %v903
    %v1276 = vpack.c.b16 %v908, %v904
    %v1277 = vpack.c.b16 %v909, %v905
    %v1278 = vpack.c.b16 %v914, %v910
    %v1279 = vpack.c.b16 %v915, %v911
    %v1280 = vpack.c.b16 %v916, %v912
    %v1281 = vpack.c.b16 %v917, %v913
    %v1282 = vpack.c.b16 %v922, %v918
    %v1283 = vpack.c.b16 %v923, %v919
    %v1284 = vpack.c.b16 %v924, %v920
    %v1285 = vpack.c.b16 %v925, %v921
    %v1286 = vpack.c.b16 %v930, %v926
    %v1287 = vpack.c.b16 %v931, %v927
    %v1288 = vpack.c.b16 %v932, %v928
    %v1289 = vpack.c.b16 %v933, %v929
    %v1290 = vpack.c.b16 %v938, %v934
    %v1291 = vpack.c.b16 %v939, %v935
    %v1292 = vpack.c.b16 %v940, %v936
    %v1293 = vpack.c.b16 %v941, %v937
    %v1294 = vpack.c.b16 %v946, %v942
    %v1295 = vpack.c.b16 %v947, %v943
    %v1296 = vpack.c.b16 %v948, %v944
    %v1297 = vpack.c.b16 %v949, %v945
    %v1298 = vpack.c.b16 %v954, %v950
    %v1299 = vpack.c.b16 %v955, %v951
    %v1300 = vpack.c.b16 %v956, %v952
    %v1301 = vpack.c.b16 %v957, %v953
    %v1302 = vpack.c.b16 %v962, %v958
    %v1303 = vpack.c.b16 %v963, %v959
    %v1304 = vpack.c.b16 %v964, %v960
    %v1305 = vpack.c.b16 %v965, %v961
    %v1306 = vpack.c.b16 %v970, %v966
    %v1307 = vpack.c.b16 %v971, %v967
    %v1308 = vpack.c.b16 %v972, %v968
    %v1309 = vpack.c.b16 %v973, %v969
    %v1310 = vpack.c.b16 %v978, %v974
    %v1311 = vpack.c.b16 %v979, %v975
    %v1312 = vpack.c.b16 %v980, %v976
    %v1313 = vpack.c.b16 %v981, %v977
    %v1314 = vpack.c.b16 %v986, %v982
    %v1315 = vpack.c.b16 %v987, %v983
    %v1316 = vpack.c.b16 %v988, %v984
    %v1317 = vpack.c.b16 %v989, %v985
    %v1318 = vpack.c.b16 %v994, %v990
    %v1319 = vpack.c.b16 %v995, %v991
    %v1320 = vpack.c.b16 %v996, %v992
    %v1321 = vpack.c.b16 %v997, %v993
    %v1322 = vpack.c.b16 %v1002, %v998
    %v1323 = vpack.c.b16 %v1003, %v999
    %v1324 = vpack.c.b16 %v1004, %v1000
    %v1325 = vpack.c.b16 %v1005, %v1001
    %v1326 = vpack.c.b16 %v1010, %v1006
    %v1327 = vpack.c.b16 %v1011, %v1007
    %v1328 = vpack.c.b16 %v1012, %v1008
    %v1329 = vpack.c.b16 %v1013, %v1009
    %v1330 = vpack.c.b16 %v1018, %v1014
    %v1331 = vpack.c.b16 %v1019, %v1015
    %v1332 = vpack.c.b16 %v1020, %v1016
    %v1333 = vpack.c.b16 %v1021, %v1017
    %v1334 = vpack.c.b16 %v1026, %v1022
    %v1335 = vpack.c.b16 %v1027, %v1023
    %v1336 = vpack.c.b16 %v1028, %v1024
    %v1337 = vpack.c.b16 %v1029, %v1025
    %v1338 = vpack.c.b16 %v1034, %v1030
    %v1339 = vpack.c.b16 %v1035, %v1031
    %v1340 = vpack.c.b16 %v1036, %v1032
    %v1341 = vpack.c.b16 %v1037, %v1033
    %v1342 = vpack.c.b16 %v1042, %v1038
    %v1343 = vpack.c.b16 %v1043, %v1039
    %v1344 = vpack.c.b16 %v1044, %v1040
    %v1345 = vpack.c.b16 %v1045, %v1041
    %v1346 = vpack.c.b16 %v1050, %v1046
    %v1347 = vpack.c.b16 %v1051, %v1047
    %v1348 = vpack.c.b16 %v1052, %v1048
    %v1349 = vpack.c.b16 %v1053, %v1049
    %v1350 = vpack.c.b16 %v1058, %v1054
    %v1351 = vpack.c.b16 %v1059, %v1055
    %v1352 = vpack.c.b16 %v1060, %v1056
    %v1353 = vpack.c.b16 %v1061, %v1057
    %v1354 = vpack.c.b16 %v1066, %v1062
    %v1355 = vpack.c.b16 %v1067, %v1063
    %v1356 = vpack.c.b16 %v1068, %v1064
    %v1357 = vpack.c.b16 %v1069, %v1065
    %v1358 = vpack.c.b16 %v1074, %v1070
    %v1359 = vpack.c.b16 %v1075, %v1071
    %v1360 = vpack.c.b16 %v1076, %v1072
    %v1361 = vpack.c.b16 %v1077, %v1073
    %v1362 = vpack.c.b16 %v1082, %v1078
    %v1363 = vpack.c.b16 %v1083, %v1079
    %v1364 = vpack.c.b16 %v1084, %v1080
    %v1365 = vpack.c.b16 %v1085, %v1081
    %v1366 = vpack.c.b16 %v1090, %v1086
    %v1367 = vpack.c.b16 %v1091, %v1087
    %v1368 = vpack.c.b16 %v1092, %v1088
    %v1369 = vpack.c.b16 %v1093, %v1089
    %v1370 = vpack.c.b16 %v1098, %v1094
    %v1371 = vpack.c.b16 %v1099, %v1095
    %v1372 = vpack.c.b16 %v1100, %v1096
    %v1373 = vpack.c.b16 %v1101, %v1097
    %v1374 = vpack.c.b16 %v1106, %v1102
    %v1375 = vpack.c.b16 %v1107, %v1103
    %v1376 = vpack.c.b16 %v1108, %v1104
    %v1377 = vpack.c.b16 %v1109, %v1105
    %v1378 = vpack.c.b16 %v1114, %v1110
    %v1379 = vpack.c.b16 %v1115, %v1111
    %v1380 = vpack.c.b16 %v1116, %v1112
    %v1381 = vpack.c.b16 %v1117, %v1113
    %v1382 = vpack.c.b16 %v1122, %v1118
    %v1383 = vpack.c.b16 %v1123, %v1119
    %v1384 = vpack.c.b16 %v1124, %v1120
    %v1385 = vpack.c.b16 %v1125, %v1121
    %v1386 = vpack.c.b16 %v1130, %v1126
    %v1387 = vpack.c.b16 %v1131, %v1127
    %v1388 = vpack.c.b16 %v1132, %v1128
    %v1389 = vpack.c.b16 %v1133, %v1129
    %1646 = vmatprep.subr.bf16.mxu0 %v1135
    %1647 = vmatpush1.bf16.msra.mxu0 %v1134
    %1648 = vmatprep.subr.bf16.mxu0 %v1139
    %1649 = vmatpush1.bf16.msra.mxu0 %v1138
    %1650 = vmatprep.subr.bf16.mxu0 %v1143
    %1651 = vmatpush1.bf16.msra.mxu0 %v1142
    %1652 = vmatprep.subr.bf16.mxu0 %v1147
    %1653 = vmatpush1.bf16.msra.mxu0 %v1146
    %1654 = vmatprep.subr.bf16.mxu0 %v1151
    %1655 = vmatpush1.bf16.msra.mxu0 %v1150
    %1656 = vmatprep.subr.bf16.mxu0 %v1155
    %1657 = vmatpush1.bf16.msra.mxu0 %v1154
    %1658 = vmatprep.subr.bf16.mxu0 %v1159
    %1659 = vmatpush1.bf16.msra.mxu0 %v1158
    %1660 = vmatprep.subr.bf16.mxu0 %v1163
    %1661 = vmatpush1.bf16.msra.mxu0 %v1162
    %1662 = vmatprep.subr.bf16.mxu0 %v1167
    %1663 = vmatpush1.bf16.msra.mxu0 %v1166
    %1664 = vmatprep.subr.bf16.mxu0 %v1171
    %1665 = vmatpush1.bf16.msra.mxu0 %v1170
    %1666 = vmatprep.subr.bf16.mxu0 %v1175
    %1667 = vmatpush1.bf16.msra.mxu0 %v1174
    %1668 = vmatprep.subr.bf16.mxu0 %v1179
    %1669 = vmatpush1.bf16.msra.mxu0 %v1178
    %1670 = vmatprep.subr.bf16.mxu0 %v1183
    %1671 = vmatpush1.bf16.msra.mxu0 %v1182
    %1672 = vmatprep.subr.bf16.mxu0 %v1187
    %1673 = vmatpush1.bf16.msra.mxu0 %v1186
    %1674 = vmatprep.subr.bf16.mxu0 %v1191
    %1675 = vmatpush1.bf16.msra.mxu0 %v1190
    %1676 = vmatprep.subr.bf16.mxu0 %v1195
    %1677 = vmatpush1.bf16.msra.mxu0 %v1194
    %1678 = vmatprep.mubr.bf16.mxu0 %v81
    %1679 = vmatmul.mubr.bf16.gmra.mrb[0].mxu0 %v80
    %v1680 = vpop.f32.mrb[0].mxu0
    %v1681 = vadd.f32 %v349, %v1680
    %v1682 = vpop.f32.mrb[0].mxu0
    %v1683 = vadd.f32 %v353, %v1682
    %v1684 = vpop.f32.mrb[0].mxu0
    %v1685 = vadd.f32 %v349, %v1684
    %v1686 = vpop.f32.mrb[0].mxu0
    %v1687 = vadd.f32 %v353, %v1686
    %1688 = vdwg.mxu0
    %1689 = vmatprep.subr.bf16.mxu0 %v1199
    %1690 = vmatpush1.bf16.msra.mxu0 %v1198
    %1691 = vmatprep.subr.bf16.mxu0 %v1203
    %1692 = vmatpush1.bf16.msra.mxu0 %v1202
    %1693 = vmatprep.subr.bf16.mxu0 %v1207
    %1694 = vmatpush1.bf16.msra.mxu0 %v1206
    %1695 = vmatprep.subr.bf16.mxu0 %v1211
    %1696 = vmatpush1.bf16.msra.mxu0 %v1210
    %1697 = vmatprep.subr.bf16.mxu0 %v1215
    %1698 = vmatpush1.bf16.msra.mxu0 %v1214
    %1699 = vmatprep.subr.bf16.mxu0 %v1219
    %1700 = vmatpush1.bf16.msra.mxu0 %v1218
    %1701 = vmatprep.subr.bf16.mxu0 %v1223
    %1702 = vmatpush1.bf16.msra.mxu0 %v1222
    %1703 = vmatprep.subr.bf16.mxu0 %v1227
    %1704 = vmatpush1.bf16.msra.mxu0 %v1226
    %1705 = vmatprep.subr.bf16.mxu0 %v1231
    %1706 = vmatpush1.bf16.msra.mxu0 %v1230
    %1707 = vmatprep.subr.bf16.mxu0 %v1235
    %1708 = vmatpush1.bf16.msra.mxu0 %v1234
    %1709 = vmatprep.subr.bf16.mxu0 %v1239
    %1710 = vmatpush1.bf16.msra.mxu0 %v1238
    %1711 = vmatprep.subr.bf16.mxu0 %v1243
    %1712 = vmatpush1.bf16.msra.mxu0 %v1242
    %1713 = vmatprep.subr.bf16.mxu0 %v1247
    %1714 = vmatpush1.bf16.msra.mxu0 %v1246
    %1715 = vmatprep.subr.bf16.mxu0 %v1251
    %1716 = vmatpush1.bf16.msra.mxu0 %v1250
    %1717 = vmatprep.subr.bf16.mxu0 %v1255
    %1718 = vmatpush1.bf16.msra.mxu0 %v1254
    %1719 = vmatprep.subr.bf16.mxu0 %v1259
    %1720 = vmatpush1.bf16.msra.mxu0 %v1258
    %1721 = vmatprep.mubr.bf16.mxu0 %v83
    %1722 = vmatmul.mubr.bf16.gmra.mrb[0].mxu0 %v82
    %v1723 = vpop.f32.mrb[0].mxu0
    %v1724 = vadd.f32 %v1681, %v1723
    %v1725 = vpop.f32.mrb[0].mxu0
    %v1726 = vadd.f32 %v1683, %v1725
    %v1727 = vpop.f32.mrb[0].mxu0
    %v1728 = vadd.f32 %v1685, %v1727
    %v1729 = vpop.f32.mrb[0].mxu0
    %v1730 = vadd.f32 %v1687, %v1729
    %1731 = vdwg.mxu0
    %1732 = vmatprep.subr.bf16.mxu0 %v1263
    %1733 = vmatpush1.bf16.msra.mxu0 %v1262
    %1734 = vmatprep.subr.bf16.mxu0 %v1267
    %1735 = vmatpush1.bf16.msra.mxu0 %v1266
    %1736 = vmatprep.subr.bf16.mxu0 %v1271
    %1737 = vmatpush1.bf16.msra.mxu0 %v1270
    %1738 = vmatprep.subr.bf16.mxu0 %v1275
    %1739 = vmatpush1.bf16.msra.mxu0 %v1274
    %1740 = vmatprep.subr.bf16.mxu0 %v1279
    %1741 = vmatpush1.bf16.msra.mxu0 %v1278
    %1742 = vmatprep.subr.bf16.mxu0 %v1283
    %1743 = vmatpush1.bf16.msra.mxu0 %v1282
    %1744 = vmatprep.subr.bf16.mxu0 %v1287
    %1745 = vmatpush1.bf16.msra.mxu0 %v1286
    %1746 = vmatprep.subr.bf16.mxu0 %v1291
    %1747 = vmatpush1.bf16.msra.mxu0 %v1290
    %1748 = vmatprep.subr.bf16.mxu0 %v1295
    %1749 = vmatpush1.bf16.msra.mxu0 %v1294
    %1750 = vmatprep.subr.bf16.mxu0 %v1299
    %1751 = vmatpush1.bf16.msra.mxu0 %v1298
    %1752 = vmatprep.subr.bf16.mxu0 %v1303
    %1753 = vmatpush1.bf16.msra.mxu0 %v1302
    %1754 = vmatprep.subr.bf16.mxu0 %v1307
    %1755 = vmatpush1.bf16.msra.mxu0 %v1306
    %1756 = vmatprep.subr.bf16.mxu0 %v1311
    %1757 = vmatpush1.bf16.msra.mxu0 %v1310
    %1758 = vmatprep.subr.bf16.mxu0 %v1315
    %1759 = vmatpush1.bf16.msra.mxu0 %v1314
    %1760 = vmatprep.subr.bf16.mxu0 %v1319
    %1761 = vmatpush1.bf16.msra.mxu0 %v1318
    %1762 = vmatprep.subr.bf16.mxu0 %v1323
    %1763 = vmatpush1.bf16.msra.mxu0 %v1322
    %1764 = vmatprep.mubr.bf16.mxu0 %v85
    %1765 = vmatmul.mubr.bf16.gmra.mrb[0].mxu0 %v84
    %v1766 = vpop.f32.mrb[0].mxu0
    %v1767 = vadd.f32 %v1724, %v1766
    %v1768 = vpop.f32.mrb[0].mxu0
    %v1769 = vadd.f32 %v1726, %v1768
    %v1770 = vpop.f32.mrb[0].mxu0
    %v1771 = vadd.f32 %v1728, %v1770
    %v1772 = vpop.f32.mrb[0].mxu0
    %v1773 = vadd.f32 %v1730, %v1772
    %1774 = vdwg.mxu0
    %1775 = vmatprep.subr.bf16.mxu0 %v1327
    %1776 = vmatpush1.bf16.msra.mxu0 %v1326
    %1777 = vmatprep.subr.bf16.mxu0 %v1331
    %1778 = vmatpush1.bf16.msra.mxu0 %v1330
    %1779 = vmatprep.subr.bf16.mxu0 %v1335
    %1780 = vmatpush1.bf16.msra.mxu0 %v1334
    %1781 = vmatprep.subr.bf16.mxu0 %v1339
    %1782 = vmatpush1.bf16.msra.mxu0 %v1338
    %1783 = vmatprep.subr.bf16.mxu0 %v1343
    %1784 = vmatpush1.bf16.msra.mxu0 %v1342
    %1785 = vmatprep.subr.bf16.mxu0 %v1347
    %1786 = vmatpush1.bf16.msra.mxu0 %v1346
    %1787 = vmatprep.subr.bf16.mxu0 %v1351
    %1788 = vmatpush1.bf16.msra.mxu0 %v1350
    %1789 = vmatprep.subr.bf16.mxu0 %v1355
    %1790 = vmatpush1.bf16.msra.mxu0 %v1354
    %1791 = vmatprep.subr.bf16.mxu0 %v1359
    %1792 = vmatpush1.bf16.msra.mxu0 %v1358
    %1793 = vmatprep.subr.bf16.mxu0 %v1363
    %1794 = vmatpush1.bf16.msra.mxu0 %v1362
    %1795 = vmatprep.subr.bf16.mxu0 %v1367
    %1796 = vmatpush1.bf16.msra.mxu0 %v1366
    %1797 = vmatprep.subr.bf16.mxu0 %v1371
    %1798 = vmatpush1.bf16.msra.mxu0 %v1370
    %1799 = vmatprep.subr.bf16.mxu0 %v1375
    %1800 = vmatpush1.bf16.msra.mxu0 %v1374
    %1801 = vmatprep.subr.bf16.mxu0 %v1379
    %1802 = vmatpush1.bf16.msra.mxu0 %v1378
    %1803 = vmatprep.subr.bf16.mxu0 %v1383
    %1804 = vmatpush1.bf16.msra.mxu0 %v1382
    %1805 = vmatprep.subr.bf16.mxu0 %v1387
    %1806 = vmatpush1.bf16.msra.mxu0 %v1386
    %1807 = vmatprep.mubr.bf16.mxu0 %v87
    %1808 = vmatmul.mubr.bf16.gmra.mrb[0].mxu0 %v86
    %v1809 = vpop.f32.mrb[0].mxu0
    %v1810 = vadd.f32 %v1767, %v1809
    %v1811 = vpop.f32.mrb[0].mxu0
    %v1812 = vadd.f32 %v1769, %v1811
    %v1813 = vpop.f32.mrb[0].mxu0
    %v1814 = vadd.f32 %v1771, %v1813
    %v1815 = vpop.f32.mrb[0].mxu0
    %v1816 = vadd.f32 %v1773, %v1815
    %1817 = vdwg.mxu0
    %1818 = vmatprep.subr.bf16.mxu0 %v1137
    %1819 = vmatpush1.bf16.msra.mxu0 %v1136
    %1820 = vmatprep.subr.bf16.mxu0 %v1141
    %1821 = vmatpush1.bf16.msra.mxu0 %v1140
    %1822 = vmatprep.subr.bf16.mxu0 %v1145
    %1823 = vmatpush1.bf16.msra.mxu0 %v1144
    %1824 = vmatprep.subr.bf16.mxu0 %v1149
    %1825 = vmatpush1.bf16.msra.mxu0 %v1148
    %1826 = vmatprep.subr.bf16.mxu0 %v1153
    %1827 = vmatpush1.bf16.msra.mxu0 %v1152
    %1828 = vmatprep.subr.bf16.mxu0 %v1157
    %1829 = vmatpush1.bf16.msra.mxu0 %v1156
    %1830 = vmatprep.subr.bf16.mxu0 %v1161
    %1831 = vmatpush1.bf16.msra.mxu0 %v1160
    %1832 = vmatprep.subr.bf16.mxu0 %v1165
    %1833 = vmatpush1.bf16.msra.mxu0 %v1164
    %1834 = vmatprep.subr.bf16.mxu0 %v1169
    %1835 = vmatpush1.bf16.msra.mxu0 %v1168
    %1836 = vmatprep.subr.bf16.mxu0 %v1173
    %1837 = vmatpush1.bf16.msra.mxu0 %v1172
    %1838 = vmatprep.subr.bf16.mxu0 %v1177
    %1839 = vmatpush1.bf16.msra.mxu0 %v1176
    %1840 = vmatprep.subr.bf16.mxu0 %v1181
    %1841 = vmatpush1.bf16.msra.mxu0 %v1180
    %1842 = vmatprep.subr.bf16.mxu0 %v1185
    %1843 = vmatpush1.bf16.msra.mxu0 %v1184
    %1844 = vmatprep.subr.bf16.mxu0 %v1189
    %1845 = vmatpush1.bf16.msra.mxu0 %v1188
    %1846 = vmatprep.subr.bf16.mxu0 %v1193
    %1847 = vmatpush1.bf16.msra.mxu0 %v1192
    %1848 = vmatprep.subr.bf16.mxu0 %v1197
    %1849 = vmatpush1.bf16.msra.mxu0 %v1196
    %1850 = vmatprep.mubr.bf16.mxu0 %v81
    %1851 = vmatmul.mubr.bf16.gmra.mrb[0].mxu0 %v80
    %v1852 = vpop.f32.mrb[0].mxu0
    %v1853 = vadd.f32 %v357, %v1852
    %v1854 = vpop.f32.mrb[0].mxu0
    %v1855 = vadd.f32 %v361, %v1854
    %v1856 = vpop.f32.mrb[0].mxu0
    %v1857 = vadd.f32 %v357, %v1856
    %v1858 = vpop.f32.mrb[0].mxu0
    %v1859 = vadd.f32 %v361, %v1858
    %1860 = vdwg.mxu0
    %1861 = vmatprep.subr.bf16.mxu0 %v1201
    %1862 = vmatpush1.bf16.msra.mxu0 %v1200
    %1863 = vmatprep.subr.bf16.mxu0 %v1205
    %1864 = vmatpush1.bf16.msra.mxu0 %v1204
    %1865 = vmatprep.subr.bf16.mxu0 %v1209
    %1866 = vmatpush1.bf16.msra.mxu0 %v1208
    %1867 = vmatprep.subr.bf16.mxu0 %v1213
    %1868 = vmatpush1.bf16.msra.mxu0 %v1212
    %1869 = vmatprep.subr.bf16.mxu0 %v1217
    %1870 = vmatpush1.bf16.msra.mxu0 %v1216
    %1871 = vmatprep.subr.bf16.mxu0 %v1221
    %1872 = vmatpush1.bf16.msra.mxu0 %v1220
    %1873 = vmatprep.subr.bf16.mxu0 %v1225
    %1874 = vmatpush1.bf16.msra.mxu0 %v1224
    %1875 = vmatprep.subr.bf16.mxu0 %v1229
    %1876 = vmatpush1.bf16.msra.mxu0 %v1228
    %1877 = vmatprep.subr.bf16.mxu0 %v1233
    %1878 = vmatpush1.bf16.msra.mxu0 %v1232
    %1879 = vmatprep.subr.bf16.mxu0 %v1237
    %1880 = vmatpush1.bf16.msra.mxu0 %v1236
    %1881 = vmatprep.subr.bf16.mxu0 %v1241
    %1882 = vmatpush1.bf16.msra.mxu0 %v1240
    %1883 = vmatprep.subr.bf16.mxu0 %v1245
    %1884 = vmatpush1.bf16.msra.mxu0 %v1244
    %1885 = vmatprep.subr.bf16.mxu0 %v1249
    %1886 = vmatpush1.bf16.msra.mxu0 %v1248
    %1887 = vmatprep.subr.bf16.mxu0 %v1253
    %1888 = vmatpush1.bf16.msra.mxu0 %v1252
    %1889 = vmatprep.subr.bf16.mxu0 %v1257
    %1890 = vmatpush1.bf16.msra.mxu0 %v1256
    %1891 = vmatprep.subr.bf16.mxu0 %v1261
    %1892 = vmatpush1.bf16.msra.mxu0 %v1260
    %1893 = vmatprep.mubr.bf16.mxu0 %v83
    %1894 = vmatmul.mubr.bf16.gmra.mrb[0].mxu0 %v82
    %v1895 = vpop.f32.mrb[0].mxu0
    %v1896 = vadd.f32 %v1853, %v1895
    %v1897 = vpop.f32.mrb[0].mxu0
    %v1898 = vadd.f32 %v1855, %v1897
    %v1899 = vpop.f32.mrb[0].mxu0
    %v1900 = vadd.f32 %v1857, %v1899
    %v1901 = vpop.f32.mrb[0].mxu0
    %v1902 = vadd.f32 %v1859, %v1901
    %1903 = vdwg.mxu0
    %1904 = vmatprep.subr.bf16.mxu0 %v1265
    %1905 = vmatpush1.bf16.msra.mxu0 %v1264
    %1906 = vmatprep.subr.bf16.mxu0 %v1269
    %1907 = vmatpush1.bf16.msra.mxu0 %v1268
    %1908 = vmatprep.subr.bf16.mxu0 %v1273
    %1909 = vmatpush1.bf16.msra.mxu0 %v1272
    %1910 = vmatprep.subr.bf16.mxu0 %v1277
    %1911 = vmatpush1.bf16.msra.mxu0 %v1276
    %1912 = vmatprep.subr.bf16.mxu0 %v1281
    %1913 = vmatpush1.bf16.msra.mxu0 %v1280
    %1914 = vmatprep.subr.bf16.mxu0 %v1285
    %1915 = vmatpush1.bf16.msra.mxu0 %v1284
    %1916 = vmatprep.subr.bf16.mxu0 %v1289
    %1917 = vmatpush1.bf16.msra.mxu0 %v1288
    %1918 = vmatprep.subr.bf16.mxu0 %v1293
    %1919 = vmatpush1.bf16.msra.mxu0 %v1292
    %1920 = vmatprep.subr.bf16.mxu0 %v1297
    %1921 = vmatpush1.bf16.msra.mxu0 %v1296
    %1922 = vmatprep.subr.bf16.mxu0 %v1301
    %1923 = vmatpush1.bf16.msra.mxu0 %v1300
    %1924 = vmatprep.subr.bf16.mxu0 %v1305
    %1925 = vmatpush1.bf16.msra.mxu0 %v1304
    %1926 = vmatprep.subr.bf16.mxu0 %v1309
    %1927 = vmatpush1.bf16.msra.mxu0 %v1308
    %1928 = vmatprep.subr.bf16.mxu0 %v1313
    %1929 = vmatpush1.bf16.msra.mxu0 %v1312
    %1930 = vmatprep.subr.bf16.mxu0 %v1317
    %1931 = vmatpush1.bf16.msra.mxu0 %v1316
    %1932 = vmatprep.subr.bf16.mxu0 %v1321
    %1933 = vmatpush1.bf16.msra.mxu0 %v1320
    %1934 = vmatprep.subr.bf16.mxu0 %v1325
    %1935 = vmatpush1.bf16.msra.mxu0 %v1324
    %1936 = vmatprep.mubr.bf16.mxu0 %v85
    %1937 = vmatmul.mubr.bf16.gmra.mrb[0].mxu0 %v84
    %v1938 = vpop.f32.mrb[0].mxu0
    %v1939 = vadd.f32 %v1896, %v1938
    %v1940 = vpop.f32.mrb[0].mxu0
    %v1941 = vadd.f32 %v1898, %v1940
    %v1942 = vpop.f32.mrb[0].mxu0
    %v1943 = vadd.f32 %v1900, %v1942
    %v1944 = vpop.f32.mrb[0].mxu0
    %v1945 = vadd.f32 %v1902, %v1944
    %1946 = vdwg.mxu0
    %1947 = vmatprep.subr.bf16.mxu0 %v1329
    %1948 = vmatpush1.bf16.msra.mxu0 %v1328
    %1949 = vmatprep.subr.bf16.mxu0 %v1333
    %1950 = vmatpush1.bf16.msra.mxu0 %v1332
    %1951 = vmatprep.subr.bf16.mxu0 %v1337
    %1952 = vmatpush1.bf16.msra.mxu0 %v1336
    %1953 = vmatprep.subr.bf16.mxu0 %v1341
    %1954 = vmatpush1.bf16.msra.mxu0 %v1340
    %1955 = vmatprep.subr.bf16.mxu0 %v1345
    %1956 = vmatpush1.bf16.msra.mxu0 %v1344
    %1957 = vmatprep.subr.bf16.mxu0 %v1349
    %1958 = vmatpush1.bf16.msra.mxu0 %v1348
    %1959 = vmatprep.subr.bf16.mxu0 %v1353
    %1960 = vmatpush1.bf16.msra.mxu0 %v1352
    %1961 = vmatprep.subr.bf16.mxu0 %v1357
    %1962 = vmatpush1.bf16.msra.mxu0 %v1356
    %1963 = vmatprep.subr.bf16.mxu0 %v1361
    %1964 = vmatpush1.bf16.msra.mxu0 %v1360
    %1965 = vmatprep.subr.bf16.mxu0 %v1365
    %1966 = vmatpush1.bf16.msra.mxu0 %v1364
    %1967 = vmatprep.subr.bf16.mxu0 %v1369
    %1968 = vmatpush1.bf16.msra.mxu0 %v1368
    %1969 = vmatprep.subr.bf16.mxu0 %v1373
    %1970 = vmatpush1.bf16.msra.mxu0 %v1372
    %1971 = vmatprep.subr.bf16.mxu0 %v1377
    %1972 = vmatpush1.bf16.msra.mxu0 %v1376
    %1973 = vmatprep.subr.bf16.mxu0 %v1381
    %1974 = vmatpush1.bf16.msra.mxu0 %v1380
    %1975 = vmatprep.subr.bf16.mxu0 %v1385
    %1976 = vmatpush1.bf16.msra.mxu0 %v1384
    %1977 = vmatprep.subr.bf16.mxu0 %v1389
    %1978 = vmatpush1.bf16.msra.mxu0 %v1388
    %1979 = vmatprep.mubr.bf16.mxu0 %v87
    %1980 = vmatmul.mubr.bf16.gmra.mrb[0].mxu0 %v86
    %v1981 = vpop.f32.mrb[0].mxu0
    %v1982 = vadd.f32 %v1939, %v1981
    %v1983 = vpop.f32.mrb[0].mxu0
    %v1984 = vadd.f32 %v1941, %v1983
    %v1985 = vpop.f32.mrb[0].mxu0
    %v1986 = vadd.f32 %v1943, %v1985
    %v1987 = vpop.f32.mrb[0].mxu0
    %v1988 = vadd.f32 %v1945, %v1987
    %1989 = vdwg.mxu0
    %vm1990 = vcmp.gt.f32.partialorder %v1810, 0.0
    %vm1991 = vcmp.gt.f32.partialorder %v1812, 0.0
    %vm1992 = vcmp.gt.f32.partialorder %v1982, 0.0
    %vm1993 = vcmp.gt.f32.partialorder %v1984, 0.0
    %vm1994 = vcmp.gt.f32.partialorder %v1814, 0.0
    %vm1995 = vcmp.gt.f32.partialorder %v1816, 0.0
    %vm1996 = vcmp.gt.f32.partialorder %v1986, 0.0
    %vm1997 = vcmp.gt.f32.partialorder %v1988, 0.0
    %v1998 = vmul.f32 %v1810, 1.442695
    %v1999 = vpow.pop %v1998
    %v2000 = vmul.f32 %v1812, 1.442695
    %v2001 = vpow.pop %v2000
    %v2002 = vmul.f32 %v1982, 1.442695
    %v2003 = vpow.pop %v2002
    %v2004 = vmul.f32 %v1984, 1.442695
    %v2005 = vpow.pop %v2004
    %v2006 = vmul.f32 %v1814, 1.442695
    %v2007 = vpow.pop %v2006
    %v2008 = vmul.f32 %v1816, 1.442695
    %v2009 = vpow.pop %v2008
    %v2010 = vmul.f32 %v1986, 1.442695
    %v2011 = vpow.pop %v2010
    %v2012 = vmul.f32 %v1988, 1.442695
    %v2013 = vpow.pop %v2012
    %v2014 = vsub.f32 %v1999, 1.0
    %v2015 = vsub.f32 %v2001, 1.0
    %v2016 = vsub.f32 %v2003, 1.0
    %v2017 = vsub.f32 %v2005, 1.0
    %v2018 = vsub.f32 %v2007, 1.0
    %v2019 = vsub.f32 %v2009, 1.0
    %v2020 = vsub.f32 %v2011, 1.0
    %v2021 = vsub.f32 %v2013, 1.0
    %v2022 = vmul.f32 %v2014, 1.6732632
    %v2023 = vmul.f32 %v2015, 1.6732632
    %v2024 = vmul.f32 %v2016, 1.6732632
    %v2025 = vmul.f32 %v2017, 1.6732632
    %v2026 = vmul.f32 %v2018, 1.6732632
    %v2027 = vmul.f32 %v2019, 1.6732632
    %v2028 = vmul.f32 %v2020, 1.6732632
    %v2029 = vmul.f32 %v2021, 1.6732632
    %v2030 = vsel %vm1990, %v1810, %v2022
    %v2031 = vsel %vm1991, %v1812, %v2023
    %v2032 = vsel %vm1992, %v1982, %v2024
    %v2033 = vsel %vm1993, %v1984, %v2025
    %v2034 = vsel %vm1994, %v1814, %v2026
    %v2035 = vsel %vm1995, %v1816, %v2027
    %v2036 = vsel %vm1996, %v1986, %v2028
    %v2037 = vsel %vm1997, %v1988, %v2029
    %v2038 = vmul.f32 %v2030, 1.050701
    %v2039 = vmul.f32 %v2031, 1.050701
    %v2040 = vmul.f32 %v2032, 1.050701
    %v2041 = vmul.f32 %v2033, 1.050701
    %v2042 = vmul.f32 %v2034, 1.050701
    %v2043 = vmul.f32 %v2035, 1.050701
    %v2044 = vmul.f32 %v2036, 1.050701
    %v2045 = vmul.f32 %v2037, 1.050701
    %v2046 = vpack.c.bf16 %v2042, %v2038
    %v2047 = vpack.c.bf16 %v2043, %v2039
    %v2048 = vpack.c.bf16 %v2044, %v2040
    %v2049 = vpack.c.bf16 %v2045, %v2041
    %v2050 = vld [vmem:[%s4] sm:$0xff]
    %v2051 = vld [vmem:[%s4 + $0x8] sm:$0xff]
    %v2052 = vld [vmem:[%s4 + $0x10] sm:$0xff]
    %v2053 = vld [vmem:[%s4 + $0x18] sm:$0xff]
    %v2054 = vld [vmem:[%s4 + $0x20] sm:$0xff]
    %v2055 = vld [vmem:[%s4 + $0x28] sm:$0xff]
    %v2056 = vld [vmem:[%s4 + $0x30] sm:$0xff]
    %v2057 = vld [vmem:[%s4 + $0x38] sm:$0xff]
    %v2058 = vld [vmem:[%s4 + $0x40] sm:$0xff]
    %v2059 = vld [vmem:[%s4 + $0x48] sm:$0xff]
    %v2060 = vld [vmem:[%s4 + $0x50] sm:$0xff]
    %v2061 = vld [vmem:[%s4 + $0x58] sm:$0xff]
    %v2062 = vld [vmem:[%s4 + $0x60] sm:$0xff]
    %v2063 = vld [vmem:[%s4 + $0x68] sm:$0xff]
    %v2064 = vld [vmem:[%s4 + $0x70] sm:$0xff]
    %v2065 = vld [vmem:[%s4 + $0x78] sm:$0xff]
    %v2066 = vld [vmem:[%s4 + $0x80] sm:$0xff]
    %v2067 = vld [vmem:[%s4 + $0x88] sm:$0xff]
    %v2068 = vld [vmem:[%s4 + $0x90] sm:$0xff]
    %v2069 = vld [vmem:[%s4 + $0x98] sm:$0xff]
    %v2070 = vld [vmem:[%s4 + $0xa0] sm:$0xff]
    %v2071 = vld [vmem:[%s4 + $0xa8] sm:$0xff]
    %v2072 = vld [vmem:[%s4 + $0xb0] sm:$0xff]
    %v2073 = vld [vmem:[%s4 + $0xb8] sm:$0xff]
    %v2074 = vld [vmem:[%s4 + $0xc0] sm:$0xff]
    %v2075 = vld [vmem:[%s4 + $0xc8] sm:$0xff]
    %v2076 = vld [vmem:[%s4 + $0xd0] sm:$0xff]
    %v2077 = vld [vmem:[%s4 + $0xd8] sm:$0xff]
    %v2078 = vld [vmem:[%s4 + $0xe0] sm:$0xff]
    %v2079 = vld [vmem:[%s4 + $0xe8] sm:$0xff]
    %v2080 = vld [vmem:[%s4 + $0xf0] sm:$0xff]
    %v2081 = vld [vmem:[%s4 + $0xf8] sm:$0xff]
    %v2082 = vld [vmem:[%s4 + $0x100] sm:$0xff]
    %v2083 = vld [vmem:[%s4 + $0x108] sm:$0xff]
    %v2084 = vld [vmem:[%s4 + $0x110] sm:$0xff]
    %v2085 = vld [vmem:[%s4 + $0x118] sm:$0xff]
    %v2086 = vld [vmem:[%s4 + $0x120] sm:$0xff]
    %v2087 = vld [vmem:[%s4 + $0x128] sm:$0xff]
    %v2088 = vld [vmem:[%s4 + $0x130] sm:$0xff]
    %v2089 = vld [vmem:[%s4 + $0x138] sm:$0xff]
    %v2090 = vld [vmem:[%s4 + $0x140] sm:$0xff]
    %v2091 = vld [vmem:[%s4 + $0x148] sm:$0xff]
    %v2092 = vld [vmem:[%s4 + $0x150] sm:$0xff]
    %v2093 = vld [vmem:[%s4 + $0x158] sm:$0xff]
    %v2094 = vld [vmem:[%s4 + $0x160] sm:$0xff]
    %v2095 = vld [vmem:[%s4 + $0x168] sm:$0xff]
    %v2096 = vld [vmem:[%s4 + $0x170] sm:$0xff]
    %v2097 = vld [vmem:[%s4 + $0x178] sm:$0xff]
    %v2098 = vld [vmem:[%s4 + $0x180] sm:$0xff]
    %v2099 = vld [vmem:[%s4 + $0x188] sm:$0xff]
    %v2100 = vld [vmem:[%s4 + $0x190] sm:$0xff]
    %v2101 = vld [vmem:[%s4 + $0x198] sm:$0xff]
    %v2102 = vld [vmem:[%s4 + $0x1a0] sm:$0xff]
    %v2103 = vld [vmem:[%s4 + $0x1a8] sm:$0xff]
    %v2104 = vld [vmem:[%s4 + $0x1b0] sm:$0xff]
    %v2105 = vld [vmem:[%s4 + $0x1b8] sm:$0xff]
    %v2106 = vld [vmem:[%s4 + $0x1c0] sm:$0xff]
    %v2107 = vld [vmem:[%s4 + $0x1c8] sm:$0xff]
    %v2108 = vld [vmem:[%s4 + $0x1d0] sm:$0xff]
    %v2109 = vld [vmem:[%s4 + $0x1d8] sm:$0xff]
    %v2110 = vld [vmem:[%s4 + $0x1e0] sm:$0xff]
    %v2111 = vld [vmem:[%s4 + $0x1e8] sm:$0xff]
    %v2112 = vld [vmem:[%s4 + $0x1f0] sm:$0xff]
    %v2113 = vld [vmem:[%s4 + $0x1f8] sm:$0xff]
    %v2114 = vld [vmem:[%s5] sm:$0x3]
    %v2116 = vlaneseq
    %v2117 = vshrl.u32 %v2116, 7
    %v2118 = vsub.s32 0, %v2117
    %v2119 = vrot.slane %v2114, %v2118
    %v2120 = vlaneseq
    %v2121 = vshrl.u32 %v2120, 7
    %v2122 = vsub.s32 1, %v2121
    %v2123 = vrot.slane %v2114, %v2122
    %v2190 = vunpack.c.l.b16 %v2050
    %v2191 = vunpack.c.h.b16 %v2050
    %v2192 = vunpack.c.l.b16 %v2051
    %v2193 = vunpack.c.h.b16 %v2051
    %v2194 = vunpack.c.l.b16 %v2052
    %v2195 = vunpack.c.h.b16 %v2052
    %v2196 = vunpack.c.l.b16 %v2053
    %v2197 = vunpack.c.h.b16 %v2053
    %v2198 = vunpack.c.l.b16 %v2054
    %v2199 = vunpack.c.h.b16 %v2054
    %v2200 = vunpack.c.l.b16 %v2055
    %v2201 = vunpack.c.h.b16 %v2055
    %v2202 = vunpack.c.l.b16 %v2056
    %v2203 = vunpack.c.h.b16 %v2056
    %v2204 = vunpack.c.l.b16 %v2057
    %v2205 = vunpack.c.h.b16 %v2057
    %v2206 = vunpack.c.l.b16 %v2058
    %v2207 = vunpack.c.h.b16 %v2058
    %v2208 = vunpack.c.l.b16 %v2059
    %v2209 = vunpack.c.h.b16 %v2059
    %v2210 = vunpack.c.l.b16 %v2060
    %v2211 = vunpack.c.h.b16 %v2060
    %v2212 = vunpack.c.l.b16 %v2061
    %v2213 = vunpack.c.h.b16 %v2061
    %v2214 = vunpack.c.l.b16 %v2062
    %v2215 = vunpack.c.h.b16 %v2062
    %v2216 = vunpack.c.l.b16 %v2063
    %v2217 = vunpack.c.h.b16 %v2063
    %v2218 = vunpack.c.l.b16 %v2064
    %v2219 = vunpack.c.h.b16 %v2064
    %v2220 = vunpack.c.l.b16 %v2065
    %v2221 = vunpack.c.h.b16 %v2065
    %v2222 = vunpack.c.l.b16 %v2066
    %v2223 = vunpack.c.h.b16 %v2066
    %v2224 = vunpack.c.l.b16 %v2067
    %v2225 = vunpack.c.h.b16 %v2067
    %v2226 = vunpack.c.l.b16 %v2068
    %v2227 = vunpack.c.h.b16 %v2068
    %v2228 = vunpack.c.l.b16 %v2069
    %v2229 = vunpack.c.h.b16 %v2069
    %v2230 = vunpack.c.l.b16 %v2070
    %v2231 = vunpack.c.h.b16 %v2070
    %v2232 = vunpack.c.l.b16 %v2071
    %v2233 = vunpack.c.h.b16 %v2071
    %v2234 = vunpack.c.l.b16 %v2072
    %v2235 = vunpack.c.h.b16 %v2072
    %v2236 = vunpack.c.l.b16 %v2073
    %v2237 = vunpack.c.h.b16 %v2073
    %v2238 = vunpack.c.l.b16 %v2074
    %v2239 = vunpack.c.h.b16 %v2074
    %v2240 = vunpack.c.l.b16 %v2075
    %v2241 = vunpack.c.h.b16 %v2075
    %v2242 = vunpack.c.l.b16 %v2076
    %v2243 = vunpack.c.h.b16 %v2076
    %v2244 = vunpack.c.l.b16 %v2077
    %v2245 = vunpack.c.h.b16 %v2077
    %v2246 = vunpack.c.l.b16 %v2078
    %v2247 = vunpack.c.h.b16 %v2078
    %v2248 = vunpack.c.l.b16 %v2079
    %v2249 = vunpack.c.h.b16 %v2079
    %v2250 = vunpack.c.l.b16 %v2080
    %v2251 = vunpack.c.h.b16 %v2080
    %v2252 = vunpack.c.l.b16 %v2081
    %v2253 = vunpack.c.h.b16 %v2081
    %v2254 = vunpack.c.l.b16 %v2082
    %v2255 = vunpack.c.h.b16 %v2082
    %v2256 = vunpack.c.l.b16 %v2083
    %v2257 = vunpack.c.h.b16 %v2083
    %v2258 = vunpack.c.l.b16 %v2084
    %v2259 = vunpack.c.h.b16 %v2084
    %v2260 = vunpack.c.l.b16 %v2085
    %v2261 = vunpack.c.h.b16 %v2085
    %v2262 = vunpack.c.l.b16 %v2086
    %v2263 = vunpack.c.h.b16 %v2086
    %v2264 = vunpack.c.l.b16 %v2087
    %v2265 = vunpack.c.h.b16 %v2087
    %v2266 = vunpack.c.l.b16 %v2088
    %v2267 = vunpack.c.h.b16 %v2088
    %v2268 = vunpack.c.l.b16 %v2089
    %v2269 = vunpack.c.h.b16 %v2089
    %v2270 = vunpack.c.l.b16 %v2090
    %v2271 = vunpack.c.h.b16 %v2090
    %v2272 = vunpack.c.l.b16 %v2091
    %v2273 = vunpack.c.h.b16 %v2091
    %v2274 = vunpack.c.l.b16 %v2092
    %v2275 = vunpack.c.h.b16 %v2092
    %v2276 = vunpack.c.l.b16 %v2093
    %v2277 = vunpack.c.h.b16 %v2093
    %v2278 = vunpack.c.l.b16 %v2094
    %v2279 = vunpack.c.h.b16 %v2094
    %v2280 = vunpack.c.l.b16 %v2095
    %v2281 = vunpack.c.h.b16 %v2095
    %v2282 = vunpack.c.l.b16 %v2096
    %v2283 = vunpack.c.h.b16 %v2096
    %v2284 = vunpack.c.l.b16 %v2097
    %v2285 = vunpack.c.h.b16 %v2097
    %v2286 = vunpack.c.l.b16 %v2098
    %v2287 = vunpack.c.h.b16 %v2098
    %v2288 = vunpack.c.l.b16 %v2099
    %v2289 = vunpack.c.h.b16 %v2099
    %v2290 = vunpack.c.l.b16 %v2100
    %v2291 = vunpack.c.h.b16 %v2100
    %v2292 = vunpack.c.l.b16 %v2101
    %v2293 = vunpack.c.h.b16 %v2101
    %v2294 = vunpack.c.l.b16 %v2102
    %v2295 = vunpack.c.h.b16 %v2102
    %v2296 = vunpack.c.l.b16 %v2103
    %v2297 = vunpack.c.h.b16 %v2103
    %v2298 = vunpack.c.l.b16 %v2104
    %v2299 = vunpack.c.h.b16 %v2104
    %v2300 = vunpack.c.l.b16 %v2105
    %v2301 = vunpack.c.h.b16 %v2105
    %v2302 = vunpack.c.l.b16 %v2106
    %v2303 = vunpack.c.h.b16 %v2106
    %v2304 = vunpack.c.l.b16 %v2107
    %v2305 = vunpack.c.h.b16 %v2107
    %v2306 = vunpack.c.l.b16 %v2108
    %v2307 = vunpack.c.h.b16 %v2108
    %v2308 = vunpack.c.l.b16 %v2109
    %v2309 = vunpack.c.h.b16 %v2109
    %v2310 = vunpack.c.l.b16 %v2110
    %v2311 = vunpack.c.h.b16 %v2110
    %v2312 = vunpack.c.l.b16 %v2111
    %v2313 = vunpack.c.h.b16 %v2111
    %v2314 = vunpack.c.l.b16 %v2112
    %v2315 = vunpack.c.h.b16 %v2112
    %v2316 = vunpack.c.l.b16 %v2113
    %v2317 = vunpack.c.h.b16 %v2113
    %v2318 = vpack.c.b16 %v2192, %v2190
    %v2319 = vpack.c.b16 %v2193, %v2191
    %v2320 = vpack.c.b16 %v2196, %v2194
    %v2321 = vpack.c.b16 %v2197, %v2195
    %v2322 = vpack.c.b16 %v2200, %v2198
    %v2323 = vpack.c.b16 %v2201, %v2199
    %v2324 = vpack.c.b16 %v2204, %v2202
    %v2325 = vpack.c.b16 %v2205, %v2203
    %v2326 = vpack.c.b16 %v2208, %v2206
    %v2327 = vpack.c.b16 %v2209, %v2207
    %v2328 = vpack.c.b16 %v2212, %v2210
    %v2329 = vpack.c.b16 %v2213, %v2211
    %v2330 = vpack.c.b16 %v2216, %v2214
    %v2331 = vpack.c.b16 %v2217, %v2215
    %v2332 = vpack.c.b16 %v2220, %v2218
    %v2333 = vpack.c.b16 %v2221, %v2219
    %v2334 = vpack.c.b16 %v2224, %v2222
    %v2335 = vpack.c.b16 %v2225, %v2223
    %v2336 = vpack.c.b16 %v2228, %v2226
    %v2337 = vpack.c.b16 %v2229, %v2227
    %v2338 = vpack.c.b16 %v2232, %v2230
    %v2339 = vpack.c.b16 %v2233, %v2231
    %v2340 = vpack.c.b16 %v2236, %v2234
    %v2341 = vpack.c.b16 %v2237, %v2235
    %v2342 = vpack.c.b16 %v2240, %v2238
    %v2343 = vpack.c.b16 %v2241, %v2239
    %v2344 = vpack.c.b16 %v2244, %v2242
    %v2345 = vpack.c.b16 %v2245, %v2243
    %v2346 = vpack.c.b16 %v2248, %v2246
    %v2347 = vpack.c.b16 %v2249, %v2247
    %v2348 = vpack.c.b16 %v2252, %v2250
    %v2349 = vpack.c.b16 %v2253, %v2251
    %v2350 = vpack.c.b16 %v2256, %v2254
    %v2351 = vpack.c.b16 %v2257, %v2255
    %v2352 = vpack.c.b16 %v2260, %v2258
    %v2353 = vpack.c.b16 %v2261, %v2259
    %v2354 = vpack.c.b16 %v2264, %v2262
    %v2355 = vpack.c.b16 %v2265, %v2263
    %v2356 = vpack.c.b16 %v2268, %v2266
    %v2357 = vpack.c.b16 %v2269, %v2267
    %v2358 = vpack.c.b16 %v2272, %v2270
    %v2359 = vpack.c.b16 %v2273, %v2271
    %v2360 = vpack.c.b16 %v2276, %v2274
    %v2361 = vpack.c.b16 %v2277, %v2275
    %v2362 = vpack.c.b16 %v2280, %v2278
    %v2363 = vpack.c.b16 %v2281, %v2279
    %v2364 = vpack.c.b16 %v2284, %v2282
    %v2365 = vpack.c.b16 %v2285, %v2283
    %v2366 = vpack.c.b16 %v2288, %v2286
    %v2367 = vpack.c.b16 %v2289, %v2287
    %v2368 = vpack.c.b16 %v2292, %v2290
    %v2369 = vpack.c.b16 %v2293, %v2291
    %v2370 = vpack.c.b16 %v2296, %v2294
    %v2371 = vpack.c.b16 %v2297, %v2295
    %v2372 = vpack.c.b16 %v2300, %v2298
    %v2373 = vpack.c.b16 %v2301, %v2299
    %v2374 = vpack.c.b16 %v2304, %v2302
    %v2375 = vpack.c.b16 %v2305, %v2303
    %v2376 = vpack.c.b16 %v2308, %v2306
    %v2377 = vpack.c.b16 %v2309, %v2307
    %v2378 = vpack.c.b16 %v2312, %v2310
    %v2379 = vpack.c.b16 %v2313, %v2311
    %v2380 = vpack.c.b16 %v2316, %v2314
    %v2381 = vpack.c.b16 %v2317, %v2315
    %2446 = vmatprep.subr.bf16.mxu0 %v2319
    %2447 = vmatpush1.bf16.msra.mxu0 %v2318
    %2448 = vmatprep.subr.bf16.mxu0 %v2321
    %2449 = vmatpush1.bf16.msra.mxu0 %v2320
    %2450 = vmatprep.subr.bf16.mxu0 %v2323
    %2451 = vmatpush1.bf16.msra.mxu0 %v2322
    %2452 = vmatprep.subr.bf16.mxu0 %v2325
    %2453 = vmatpush1.bf16.msra.mxu0 %v2324
    %2454 = vmatprep.subr.bf16.mxu0 %v2327
    %2455 = vmatpush1.bf16.msra.mxu0 %v2326
    %2456 = vmatprep.subr.bf16.mxu0 %v2329
    %2457 = vmatpush1.bf16.msra.mxu0 %v2328
    %2458 = vmatprep.subr.bf16.mxu0 %v2331
    %2459 = vmatpush1.bf16.msra.mxu0 %v2330
    %2460 = vmatprep.subr.bf16.mxu0 %v2333
    %2461 = vmatpush1.bf16.msra.mxu0 %v2332
    %2462 = vmatprep.subr.bf16.mxu0 %v2335
    %2463 = vmatpush1.bf16.msra.mxu0 %v2334
    %2464 = vmatprep.subr.bf16.mxu0 %v2337
    %2465 = vmatpush1.bf16.msra.mxu0 %v2336
    %2466 = vmatprep.subr.bf16.mxu0 %v2339
    %2467 = vmatpush1.bf16.msra.mxu0 %v2338
    %2468 = vmatprep.subr.bf16.mxu0 %v2341
    %2469 = vmatpush1.bf16.msra.mxu0 %v2340
    %2470 = vmatprep.subr.bf16.mxu0 %v2343
    %2471 = vmatpush1.bf16.msra.mxu0 %v2342
    %2472 = vmatprep.subr.bf16.mxu0 %v2345
    %2473 = vmatpush1.bf16.msra.mxu0 %v2344
    %2474 = vmatprep.subr.bf16.mxu0 %v2347
    %2475 = vmatpush1.bf16.msra.mxu0 %v2346
    %2476 = vmatprep.subr.bf16.mxu0 %v2349
    %2477 = vmatpush1.bf16.msra.mxu0 %v2348
    %2478 = vmatprep.mubr.bf16.mxu0 %v2047
    %2479 = vmatmul.mubr.bf16.gmra.mrb[0].mxu0 %v2046
    %v2480 = vpop.f32.mrb[0].mxu0
    %v2481 = vadd.f32 %v2119, %v2480
    %v2482 = vpop.f32.mrb[0].mxu0
    %v2483 = vadd.f32 %v2123, %v2482
    %v2484 = vpop.f32.mrb[0].mxu0
    %v2485 = vadd.f32 %v2119, %v2484
    %v2486 = vpop.f32.mrb[0].mxu0
    %v2487 = vadd.f32 %v2123, %v2486
    %2488 = vdwg.mxu0
    %2489 = vmatprep.subr.bf16.mxu0 %v2351
    %2490 = vmatpush1.bf16.msra.mxu0 %v2350
    %2491 = vmatprep.subr.bf16.mxu0 %v2353
    %2492 = vmatpush1.bf16.msra.mxu0 %v2352
    %2493 = vmatprep.subr.bf16.mxu0 %v2355
    %2494 = vmatpush1.bf16.msra.mxu0 %v2354
    %2495 = vmatprep.subr.bf16.mxu0 %v2357
    %2496 = vmatpush1.bf16.msra.mxu0 %v2356
    %2497 = vmatprep.subr.bf16.mxu0 %v2359
    %2498 = vmatpush1.bf16.msra.mxu0 %v2358
    %2499 = vmatprep.subr.bf16.mxu0 %v2361
    %2500 = vmatpush1.bf16.msra.mxu0 %v2360
    %2501 = vmatprep.subr.bf16.mxu0 %v2363
    %2502 = vmatpush1.bf16.msra.mxu0 %v2362
    %2503 = vmatprep.subr.bf16.mxu0 %v2365
    %2504 = vmatpush1.bf16.msra.mxu0 %v2364
    %2505 = vmatprep.subr.bf16.mxu0 %v2367
    %2506 = vmatpush1.bf16.msra.mxu0 %v2366
    %2507 = vmatprep.subr.bf16.mxu0 %v2369
    %2508 = vmatpush1.bf16.msra.mxu0 %v2368
    %2509 = vmatprep.subr.bf16.mxu0 %v2371
    %2510 = vmatpush1.bf16.msra.mxu0 %v2370
    %2511 = vmatprep.subr.bf16.mxu0 %v2373
    %2512 = vmatpush1.bf16.msra.mxu0 %v2372
    %2513 = vmatprep.subr.bf16.mxu0 %v2375
    %2514 = vmatpush1.bf16.msra.mxu0 %v2374
    %2515 = vmatprep.subr.bf16.mxu0 %v2377
    %2516 = vmatpush1.bf16.msra.mxu0 %v2376
    %2517 = vmatprep.subr.bf16.mxu0 %v2379
    %2518 = vmatpush1.bf16.msra.mxu0 %v2378
    %2519 = vmatprep.subr.bf16.mxu0 %v2381
    %2520 = vmatpush1.bf16.msra.mxu0 %v2380
    %2521 = vmatprep.mubr.bf16.mxu0 %v2049
    %2522 = vmatmul.mubr.bf16.gmra.mrb[0].mxu0 %v2048
    %v2523 = vpop.f32.mrb[0].mxu0
    %v2524 = vadd.f32 %v2481, %v2523
    %v2525 = vpop.f32.mrb[0].mxu0
    %v2526 = vadd.f32 %v2483, %v2525
    %v2527 = vpop.f32.mrb[0].mxu0
    %v2528 = vadd.f32 %v2485, %v2527
    %v2529 = vpop.f32.mrb[0].mxu0
    %v2530 = vadd.f32 %v2487, %v2529
    %2531 = vdwg.mxu0
    %v2532 = vmul.f32 %v2526, 1.442695
    %v2533 = vpow.pop %v2532
    %v2534 = vmul.f32 %v2530, 1.442695
    %v2535 = vpow.pop %v2534
    %v2536 = vld [vmem:[%s1] sm:$0xff]
    %v2537 = vld [vmem:[%s1 + $0x8] sm:$0xff]
    %v2538 = vmul.f32 %v2533, %v2536
    %v2539 = vmul.f32 %v2535, %v2537
    %v2540 = vadd.f32 %v2524, %v2538
    %v2541 = vadd.f32 %v2528, %v2539
    %v2542 = vmul.f32 %v2533, %v2533
    %v2543 = vmul.f32 %v2535, %v2535
    %v2544 = vmul.f32 %v2524, %v2524
    %v2545 = vmul.f32 %v2528, %v2528
    %v2546 = vadd.f32 %v2542, %v2544
    %v2547 = vadd.f32 %v2543, %v2545
    %v2548 = vsub.f32 %v2546, %v2526
    %v2549 = vsub.f32 %v2547, %v2530
    %v2550 = vsub.f32 %v2548, 0.5
    %v2551 = vsub.f32 %v2549, 0.5
    %v2552 = vlaneseq
    %v2553 = vand.u32 %v2552, 127
    %vm2554 = vcmp.lt.s32.totalorder %v2553, 32
    %v2555 = vsel %vm2554, 1, 0
    %vm2556 = vcmp.eq.s32.totalorder %v2555, 1
    %v2557 = vsel %vm2556, %v2550, 0.0
    %v2558 = vsel %vm2556, %v2551, 0.0
    %v2559 = vlaneseq
    %v2560 = vshrl.u32 %v2559, 7
    %v2561 = vadd.s32 %v2560, 8
    %s2562 = smul.u32 0, 16
    %v2563 = vstv %s2562
    %v2564 = vadd.s32 %v2560, %v2563
    %v2565 = vadd.s32 %v2561, %v2563
    %vm2566 = vcmp.lt.s32.totalorder %v2564, 2
    %vm2567 = vcmp.lt.s32.totalorder %v2565, 2
    %v2568 = vsel %vm2566, 1, 0
    %v2569 = vsel %vm2567, 1, 0
    %vm2570 = vcmp.eq.s32.totalorder %v2568, 1
    %vm2571 = vcmp.eq.s32.totalorder %v2569, 1
    %v2572 = vsel %vm2570, %v2557, 0.0
    %v2573 = vsel %vm2571, %v2558, 0.0
    %v2574 = vadd.f32 %v2572, %v2573
    %v2575 = vrot.slane %v2574, 4
    %v2576 = vadd.f32 %v2574, %v2575
    %v2577 = vrot.slane %v2576, 2
    %v2578 = vadd.f32 %v2576, %v2577
    %v2579 = vrot.slane %v2578, 1
    %v2580 = vadd.f32 %v2578, %v2579
    %2581 = vst [vmem:[%s11] sm:$0x1] %v2580
    %v2582 = vpack.c.bf16 %v2541, %v2540
    %v2583 = vld [vmem:[%s6] sm:$0xff]
    %v2584 = vld [vmem:[%s6 + $0x8] sm:$0xff]
    %v2585 = vld [vmem:[%s6 + $0x10] sm:$0xff]
    %v2586 = vld [vmem:[%s6 + $0x18] sm:$0xff]
    %v2587 = vld [vmem:[%s6 + $0x20] sm:$0xff]
    %v2588 = vld [vmem:[%s6 + $0x28] sm:$0xff]
    %v2589 = vld [vmem:[%s6 + $0x30] sm:$0xff]
    %v2590 = vld [vmem:[%s6 + $0x38] sm:$0xff]
    %v2591 = vld [vmem:[%s6 + $0x40] sm:$0xff]
    %v2592 = vld [vmem:[%s6 + $0x48] sm:$0xff]
    %v2593 = vld [vmem:[%s6 + $0x50] sm:$0xff]
    %v2594 = vld [vmem:[%s6 + $0x58] sm:$0xff]
    %v2595 = vld [vmem:[%s6 + $0x60] sm:$0xff]
    %v2596 = vld [vmem:[%s6 + $0x68] sm:$0xff]
    %v2597 = vld [vmem:[%s6 + $0x70] sm:$0xff]
    %v2598 = vld [vmem:[%s6 + $0x78] sm:$0xff]
    %v2599 = vld [vmem:[%s6 + $0x80] sm:$0xff]
    %v2600 = vld [vmem:[%s6 + $0x88] sm:$0xff]
    %v2601 = vld [vmem:[%s6 + $0x90] sm:$0xff]
    %v2602 = vld [vmem:[%s6 + $0x98] sm:$0xff]
    %v2603 = vld [vmem:[%s6 + $0xa0] sm:$0xff]
    %v2604 = vld [vmem:[%s6 + $0xa8] sm:$0xff]
    %v2605 = vld [vmem:[%s6 + $0xb0] sm:$0xff]
    %v2606 = vld [vmem:[%s6 + $0xb8] sm:$0xff]
    %v2607 = vld [vmem:[%s6 + $0xc0] sm:$0xff]
    %v2608 = vld [vmem:[%s6 + $0xc8] sm:$0xff]
    %v2609 = vld [vmem:[%s6 + $0xd0] sm:$0xff]
    %v2610 = vld [vmem:[%s6 + $0xd8] sm:$0xff]
    %v2611 = vld [vmem:[%s6 + $0xe0] sm:$0xff]
    %v2612 = vld [vmem:[%s6 + $0xe8] sm:$0xff]
    %v2613 = vld [vmem:[%s6 + $0xf0] sm:$0xff]
    %v2614 = vld [vmem:[%s6 + $0xf8] sm:$0xff]
    %v2615 = vld [vmem:[#allocation2] sm:$0xf]
    %v2617 = vlaneseq
    %v2618 = vshrl.u32 %v2617, 7
    %v2619 = vsub.s32 0, %v2618
    %v2620 = vrot.slane %v2615, %v2619
    %v2621 = vlaneseq
    %v2622 = vshrl.u32 %v2621, 7
    %v2623 = vsub.s32 1, %v2622
    %v2624 = vrot.slane %v2615, %v2623
    %v2625 = vlaneseq
    %v2626 = vshrl.u32 %v2625, 7
    %v2627 = vsub.s32 2, %v2626
    %v2628 = vrot.slane %v2615, %v2627
    %v2629 = vlaneseq
    %v2630 = vshrl.u32 %v2629, 7
    %v2631 = vsub.s32 3, %v2630
    %v2632 = vrot.slane %v2615, %v2631
    %v2669 = vunpack.c.l.b16 %v2583
    %v2670 = vunpack.c.h.b16 %v2583
    %v2671 = vunpack.c.l.b16 %v2584
    %v2672 = vunpack.c.h.b16 %v2584
    %v2673 = vunpack.c.l.b16 %v2585
    %v2674 = vunpack.c.h.b16 %v2585
    %v2675 = vunpack.c.l.b16 %v2586
    %v2676 = vunpack.c.h.b16 %v2586
    %v2677 = vunpack.c.l.b16 %v2587
    %v2678 = vunpack.c.h.b16 %v2587
    %v2679 = vunpack.c.l.b16 %v2588
    %v2680 = vunpack.c.h.b16 %v2588
    %v2681 = vunpack.c.l.b16 %v2589
    %v2682 = vunpack.c.h.b16 %v2589
    %v2683 = vunpack.c.l.b16 %v2590
    %v2684 = vunpack.c.h.b16 %v2590
    %v2685 = vunpack.c.l.b16 %v2591
    %v2686 = vunpack.c.h.b16 %v2591
    %v2687 = vunpack.c.l.b16 %v2592
    %v2688 = vunpack.c.h.b16 %v2592
    %v2689 = vunpack.c.l.b16 %v2593
    %v2690 = vunpack.c.h.b16 %v2593
    %v2691 = vunpack.c.l.b16 %v2594
    %v2692 = vunpack.c.h.b16 %v2594
    %v2693 = vunpack.c.l.b16 %v2595
    %v2694 = vunpack.c.h.b16 %v2595
    %v2695 = vunpack.c.l.b16 %v2596
    %v2696 = vunpack.c.h.b16 %v2596
    %v2697 = vunpack.c.l.b16 %v2597
    %v2698 = vunpack.c.h.b16 %v2597
    %v2699 = vunpack.c.l.b16 %v2598
    %v2700 = vunpack.c.h.b16 %v2598
    %v2701 = vunpack.c.l.b16 %v2599
    %v2702 = vunpack.c.h.b16 %v2599
    %v2703 = vunpack.c.l.b16 %v2600
    %v2704 = vunpack.c.h.b16 %v2600
    %v2705 = vunpack.c.l.b16 %v2601
    %v2706 = vunpack.c.h.b16 %v2601
    %v2707 = vunpack.c.l.b16 %v2602
    %v2708 = vunpack.c.h.b16 %v2602
    %v2709 = vunpack.c.l.b16 %v2603
    %v2710 = vunpack.c.h.b16 %v2603
    %v2711 = vunpack.c.l.b16 %v2604
    %v2712 = vunpack.c.h.b16 %v2604
    %v2713 = vunpack.c.l.b16 %v2605
    %v2714 = vunpack.c.h.b16 %v2605
    %v2715 = vunpack.c.l.b16 %v2606
    %v2716 = vunpack.c.h.b16 %v2606
    %v2717 = vunpack.c.l.b16 %v2607
    %v2718 = vunpack.c.h.b16 %v2607
    %v2719 = vunpack.c.l.b16 %v2608
    %v2720 = vunpack.c.h.b16 %v2608
    %v2721 = vunpack.c.l.b16 %v2609
    %v2722 = vunpack.c.h.b16 %v2609
    %v2723 = vunpack.c.l.b16 %v2610
    %v2724 = vunpack.c.h.b16 %v2610
    %v2725 = vunpack.c.l.b16 %v2611
    %v2726 = vunpack.c.h.b16 %v2611
    %v2727 = vunpack.c.l.b16 %v2612
    %v2728 = vunpack.c.h.b16 %v2612
    %v2729 = vunpack.c.l.b16 %v2613
    %v2730 = vunpack.c.h.b16 %v2613
    %v2731 = vunpack.c.l.b16 %v2614
    %v2732 = vunpack.c.h.b16 %v2614
    %v2733 = vpack.c.b16 %v2673, %v2669
    %v2734 = vpack.c.b16 %v2674, %v2670
    %v2735 = vpack.c.b16 %v2675, %v2671
    %v2736 = vpack.c.b16 %v2676, %v2672
    %v2737 = vpack.c.b16 %v2681, %v2677
    %v2738 = vpack.c.b16 %v2682, %v2678
    %v2739 = vpack.c.b16 %v2683, %v2679
    %v2740 = vpack.c.b16 %v2684, %v2680
    %v2741 = vpack.c.b16 %v2689, %v2685
    %v2742 = vpack.c.b16 %v2690, %v2686
    %v2743 = vpack.c.b16 %v2691, %v2687
    %v2744 = vpack.c.b16 %v2692, %v2688
    %v2745 = vpack.c.b16 %v2697, %v2693
    %v2746 = vpack.c.b16 %v2698, %v2694
    %v2747 = vpack.c.b16 %v2699, %v2695
    %v2748 = vpack.c.b16 %v2700, %v2696
    %v2749 = vpack.c.b16 %v2705, %v2701
    %v2750 = vpack.c.b16 %v2706, %v2702
    %v2751 = vpack.c.b16 %v2707, %v2703
    %v2752 = vpack.c.b16 %v2708, %v2704
    %v2753 = vpack.c.b16 %v2713, %v2709
    %v2754 = vpack.c.b16 %v2714, %v2710
    %v2755 = vpack.c.b16 %v2715, %v2711
    %v2756 = vpack.c.b16 %v2716, %v2712
    %v2757 = vpack.c.b16 %v2721, %v2717
    %v2758 = vpack.c.b16 %v2722, %v2718
    %v2759 = vpack.c.b16 %v2723, %v2719
    %v2760 = vpack.c.b16 %v2724, %v2720
    %v2761 = vpack.c.b16 %v2729, %v2725
    %v2762 = vpack.c.b16 %v2730, %v2726
    %v2763 = vpack.c.b16 %v2731, %v2727
    %v2764 = vpack.c.b16 %v2732, %v2728
    %2797 = vmatprep.subr.bf16.mxu0 %v2734
    %2798 = vmatpush1.bf16.msra.mxu0 %v2733
    %2799 = vmatprep.subr.bf16.mxu0 %v2738
    %2800 = vmatpush1.bf16.msra.mxu0 %v2737
    %2801 = vmatprep.subr.bf16.mxu0 %v2742
    %2802 = vmatpush1.bf16.msra.mxu0 %v2741
    %2803 = vmatprep.subr.bf16.mxu0 %v2746
    %2804 = vmatpush1.bf16.msra.mxu0 %v2745
    %2805 = vmatprep.subr.bf16.mxu0 %v2750
    %2806 = vmatpush1.bf16.msra.mxu0 %v2749
    %2807 = vmatprep.subr.bf16.mxu0 %v2754
    %2808 = vmatpush1.bf16.msra.mxu0 %v2753
    %2809 = vmatprep.subr.bf16.mxu0 %v2758
    %2810 = vmatpush1.bf16.msra.mxu0 %v2757
    %2811 = vmatprep.subr.bf16.mxu0 %v2762
    %2812 = vmatpush1.bf16.msra.mxu0 %v2761
    %2813 = vmatprep.subr.bf16.mxu0 0
    %2814 = vmatpush1.bf16.msra.mxu0 0
    %2815 = vmatprep.subr.bf16.mxu0 0
    %2816 = vmatpush1.bf16.msra.mxu0 0
    %2817 = vmatprep.subr.bf16.mxu0 0
    %2818 = vmatpush1.bf16.msra.mxu0 0
    %2819 = vmatprep.subr.bf16.mxu0 0
    %2820 = vmatpush1.bf16.msra.mxu0 0
    %2821 = vmatprep.subr.bf16.mxu0 0
    %2822 = vmatpush1.bf16.msra.mxu0 0
    %2823 = vmatprep.subr.bf16.mxu0 0
    %2824 = vmatpush1.bf16.msra.mxu0 0
    %2825 = vmatprep.subr.bf16.mxu0 0
    %2826 = vmatpush1.bf16.msra.mxu0 0
    %2827 = vmatprep.subr.bf16.mxu0 0
    %2828 = vmatpush1.bf16.msra.mxu0 0
    %2829 = vmatprep.mubr.bf16.mxu0 0
    %2830 = vmatmul.mubr.bf16.gmra.mrb[0].mxu0 %v2582
    %v2831 = vpop.f32.mrb[0].mxu0
    %v2832 = vadd.f32 %v2620, %v2831
    %v2833 = vpop.f32.mrb[0].mxu0
    %v2834 = vadd.f32 %v2624, %v2833
    %v2835 = vpop.f32.mrb[0].mxu0
    %v2836 = vadd.f32 %v2620, %v2835
    %v2837 = vpop.f32.mrb[0].mxu0
    %v2838 = vadd.f32 %v2624, %v2837
    %2839 = vdwg.mxu0
    %2840 = vmatprep.subr.bf16.mxu0 %v2736
    %2841 = vmatpush1.bf16.msra.mxu0 %v2735
    %2842 = vmatprep.subr.bf16.mxu0 %v2740
    %2843 = vmatpush1.bf16.msra.mxu0 %v2739
    %2844 = vmatprep.subr.bf16.mxu0 %v2744
    %2845 = vmatpush1.bf16.msra.mxu0 %v2743
    %2846 = vmatprep.subr.bf16.mxu0 %v2748
    %2847 = vmatpush1.bf16.msra.mxu0 %v2747
    %2848 = vmatprep.subr.bf16.mxu0 %v2752
    %2849 = vmatpush1.bf16.msra.mxu0 %v2751
    %2850 = vmatprep.subr.bf16.mxu0 %v2756
    %2851 = vmatpush1.bf16.msra.mxu0 %v2755
    %2852 = vmatprep.subr.bf16.mxu0 %v2760
    %2853 = vmatpush1.bf16.msra.mxu0 %v2759
    %2854 = vmatprep.subr.bf16.mxu0 %v2764
    %2855 = vmatpush1.bf16.msra.mxu0 %v2763
    %2856 = vmatprep.subr.bf16.mxu0 0
    %2857 = vmatpush1.bf16.msra.mxu0 0
    %2858 = vmatprep.subr.bf16.mxu0 0
    %2859 = vmatpush1.bf16.msra.mxu0 0
    %2860 = vmatprep.subr.bf16.mxu0 0
    %2861 = vmatpush1.bf16.msra.mxu0 0
    %2862 = vmatprep.subr.bf16.mxu0 0
    %2863 = vmatpush1.bf16.msra.mxu0 0
    %2864 = vmatprep.subr.bf16.mxu0 0
    %2865 = vmatpush1.bf16.msra.mxu0 0
    %2866 = vmatprep.subr.bf16.mxu0 0
    %2867 = vmatpush1.bf16.msra.mxu0 0
    %2868 = vmatprep.subr.bf16.mxu0 0
    %2869 = vmatpush1.bf16.msra.mxu0 0
    %2870 = vmatprep.subr.bf16.mxu0 0
    %2871 = vmatpush1.bf16.msra.mxu0 0
    %2872 = vmatprep.mubr.bf16.mxu0 0
    %2873 = vmatmul.mubr.bf16.gmra.mrb[0].mxu0 %v2582
    %v2874 = vpop.f32.mrb[0].mxu0
    %v2875 = vadd.f32 %v2628, %v2874
    %v2876 = vpop.f32.mrb[0].mxu0
    %v2877 = vadd.f32 %v2632, %v2876
    %v2878 = vpop.f32.mrb[0].mxu0
    %v2879 = vadd.f32 %v2628, %v2878
    %v2880 = vpop.f32.mrb[0].mxu0
    %v2881 = vadd.f32 %v2632, %v2880
    %2882 = vdwg.mxu0
    %vm2883 = vcmp.gt.f32.partialorder %v2832, 0.0
    %vm2884 = vcmp.gt.f32.partialorder %v2834, 0.0
    %vm2885 = vcmp.gt.f32.partialorder %v2875, 0.0
    %vm2886 = vcmp.gt.f32.partialorder %v2877, 0.0
    %vm2887 = vcmp.gt.f32.partialorder %v2836, 0.0
    %vm2888 = vcmp.gt.f32.partialorder %v2838, 0.0
    %vm2889 = vcmp.gt.f32.partialorder %v2879, 0.0
    %vm2890 = vcmp.gt.f32.partialorder %v2881, 0.0
    %v2891 = vmul.f32 %v2832, 1.442695
    %v2892 = vpow.pop %v2891
    %v2893 = vmul.f32 %v2834, 1.442695
    %v2894 = vpow.pop %v2893
    %v2895 = vmul.f32 %v2875, 1.442695
    %v2896 = vpow.pop %v2895
    %v2897 = vmul.f32 %v2877, 1.442695
    %v2898 = vpow.pop %v2897
    %v2899 = vmul.f32 %v2836, 1.442695
    %v2900 = vpow.pop %v2899
    %v2901 = vmul.f32 %v2838, 1.442695
    %v2902 = vpow.pop %v2901
    %v2903 = vmul.f32 %v2879, 1.442695
    %v2904 = vpow.pop %v2903
    %v2905 = vmul.f32 %v2881, 1.442695
    %v2906 = vpow.pop %v2905
    %v2907 = vsub.f32 %v2892, 1.0
    %v2908 = vsub.f32 %v2894, 1.0
    %v2909 = vsub.f32 %v2896, 1.0
    %v2910 = vsub.f32 %v2898, 1.0
    %v2911 = vsub.f32 %v2900, 1.0
    %v2912 = vsub.f32 %v2902, 1.0
    %v2913 = vsub.f32 %v2904, 1.0
    %v2914 = vsub.f32 %v2906, 1.0
    %v2915 = vmul.f32 %v2907, 1.6732632
    %v2916 = vmul.f32 %v2908, 1.6732632
    %v2917 = vmul.f32 %v2909, 1.6732632
    %v2918 = vmul.f32 %v2910, 1.6732632
    %v2919 = vmul.f32 %v2911, 1.6732632
    %v2920 = vmul.f32 %v2912, 1.6732632
    %v2921 = vmul.f32 %v2913, 1.6732632
    %v2922 = vmul.f32 %v2914, 1.6732632
    %v2923 = vsel %vm2883, %v2832, %v2915
    %v2924 = vsel %vm2884, %v2834, %v2916
    %v2925 = vsel %vm2885, %v2875, %v2917
    %v2926 = vsel %vm2886, %v2877, %v2918
    %v2927 = vsel %vm2887, %v2836, %v2919
    %v2928 = vsel %vm2888, %v2838, %v2920
    %v2929 = vsel %vm2889, %v2879, %v2921
    %v2930 = vsel %vm2890, %v2881, %v2922
    %v2931 = vmul.f32 %v2923, 1.050701
    %v2932 = vmul.f32 %v2924, 1.050701
    %v2933 = vmul.f32 %v2925, 1.050701
    %v2934 = vmul.f32 %v2926, 1.050701
    %v2935 = vmul.f32 %v2927, 1.050701
    %v2936 = vmul.f32 %v2928, 1.050701
    %v2937 = vmul.f32 %v2929, 1.050701
    %v2938 = vmul.f32 %v2930, 1.050701
    %v2939 = vpack.c.bf16 %v2935, %v2931
    %v2940 = vpack.c.bf16 %v2936, %v2932
    %v2941 = vpack.c.bf16 %v2937, %v2933
    %v2942 = vpack.c.bf16 %v2938, %v2934
    %v2943 = vld [vmem:[#allocation4] sm:$0xff]
    %v2944 = vld [vmem:[#allocation4 + $0x8] sm:$0xff]
    %v2945 = vld [vmem:[#allocation4 + $0x10] sm:$0xff]
    %v2946 = vld [vmem:[#allocation4 + $0x18] sm:$0xff]
    %v2947 = vld [vmem:[#allocation4 + $0x20] sm:$0xff]
    %v2948 = vld [vmem:[#allocation4 + $0x28] sm:$0xff]
    %v2949 = vld [vmem:[#allocation4 + $0x30] sm:$0xff]
    %v2950 = vld [vmem:[#allocation4 + $0x38] sm:$0xff]
    %v2951 = vld [vmem:[#allocation4 + $0x40] sm:$0xff]
    %v2952 = vld [vmem:[#allocation4 + $0x48] sm:$0xff]
    %v2953 = vld [vmem:[#allocation4 + $0x50] sm:$0xff]
    %v2954 = vld [vmem:[#allocation4 + $0x58] sm:$0xff]
    %v2955 = vld [vmem:[#allocation4 + $0x60] sm:$0xff]
    %v2956 = vld [vmem:[#allocation4 + $0x68] sm:$0xff]
    %v2957 = vld [vmem:[#allocation4 + $0x70] sm:$0xff]
    %v2958 = vld [vmem:[#allocation4 + $0x78] sm:$0xff]
    %v2959 = vld [vmem:[#allocation4 + $0x80] sm:$0xff]
    %v2960 = vld [vmem:[#allocation4 + $0x88] sm:$0xff]
    %v2961 = vld [vmem:[#allocation4 + $0x90] sm:$0xff]
    %v2962 = vld [vmem:[#allocation4 + $0x98] sm:$0xff]
    %v2963 = vld [vmem:[#allocation4 + $0xa0] sm:$0xff]
    %v2964 = vld [vmem:[#allocation4 + $0xa8] sm:$0xff]
    %v2965 = vld [vmem:[#allocation4 + $0xb0] sm:$0xff]
    %v2966 = vld [vmem:[#allocation4 + $0xb8] sm:$0xff]
    %v2967 = vld [vmem:[#allocation4 + $0xc0] sm:$0xff]
    %v2968 = vld [vmem:[#allocation4 + $0xc8] sm:$0xff]
    %v2969 = vld [vmem:[#allocation4 + $0xd0] sm:$0xff]
    %v2970 = vld [vmem:[#allocation4 + $0xd8] sm:$0xff]
    %v2971 = vld [vmem:[#allocation4 + $0xe0] sm:$0xff]
    %v2972 = vld [vmem:[#allocation4 + $0xe8] sm:$0xff]
    %v2973 = vld [vmem:[#allocation4 + $0xf0] sm:$0xff]
    %v2974 = vld [vmem:[#allocation4 + $0xf8] sm:$0xff]
    %v2975 = vld [vmem:[#allocation4 + $0x100] sm:$0xff]
    %v2976 = vld [vmem:[#allocation4 + $0x108] sm:$0xff]
    %v2977 = vld [vmem:[#allocation4 + $0x110] sm:$0xff]
    %v2978 = vld [vmem:[#allocation4 + $0x118] sm:$0xff]
    %v2979 = vld [vmem:[#allocation4 + $0x120] sm:$0xff]
    %v2980 = vld [vmem:[#allocation4 + $0x128] sm:$0xff]
    %v2981 = vld [vmem:[#allocation4 + $0x130] sm:$0xff]
    %v2982 = vld [vmem:[#allocation4 + $0x138] sm:$0xff]
    %v2983 = vld [vmem:[#allocation4 + $0x140] sm:$0xff]
    %v2984 = vld [vmem:[#allocation4 + $0x148] sm:$0xff]
    %v2985 = vld [vmem:[#allocation4 + $0x150] sm:$0xff]
    %v2986 = vld [vmem:[#allocation4 + $0x158] sm:$0xff]
    %v2987 = vld [vmem:[#allocation4 + $0x160] sm:$0xff]
    %v2988 = vld [vmem:[#allocation4 + $0x168] sm:$0xff]
    %v2989 = vld [vmem:[#allocation4 + $0x170] sm:$0xff]
    %v2990 = vld [vmem:[#allocation4 + $0x178] sm:$0xff]
    %v2991 = vld [vmem:[#allocation4 + $0x180] sm:$0xff]
    %v2992 = vld [vmem:[#allocation4 + $0x188] sm:$0xff]
    %v2993 = vld [vmem:[#allocation4 + $0x190] sm:$0xff]
    %v2994 = vld [vmem:[#allocation4 + $0x198] sm:$0xff]
    %v2995 = vld [vmem:[#allocation4 + $0x1a0] sm:$0xff]
    %v2996 = vld [vmem:[#allocation4 + $0x1a8] sm:$0xff]
    %v2997 = vld [vmem:[#allocation4 + $0x1b0] sm:$0xff]
    %v2998 = vld [vmem:[#allocation4 + $0x1b8] sm:$0xff]
    %v2999 = vld [vmem:[#allocation4 + $0x1c0] sm:$0xff]
    %v3000 = vld [vmem:[#allocation4 + $0x1c8] sm:$0xff]
    %v3001 = vld [vmem:[#allocation4 + $0x1d0] sm:$0xff]
    %v3002 = vld [vmem:[#allocation4 + $0x1d8] sm:$0xff]
    %v3003 = vld [vmem:[#allocation4 + $0x1e0] sm:$0xff]
    %v3004 = vld [vmem:[#allocation4 + $0x1e8] sm:$0xff]
    %v3005 = vld [vmem:[#allocation4 + $0x1f0] sm:$0xff]
    %v3006 = vld [vmem:[#allocation4 + $0x1f8] sm:$0xff]
    %v3007 = vld [vmem:[#allocation4 + $0x200] sm:$0xff]
    %v3008 = vld [vmem:[#allocation4 + $0x208] sm:$0xff]
    %v3009 = vld [vmem:[#allocation4 + $0x210] sm:$0xff]
    %v3010 = vld [vmem:[#allocation4 + $0x218] sm:$0xff]
    %v3011 = vld [vmem:[#allocation4 + $0x220] sm:$0xff]
    %v3012 = vld [vmem:[#allocation4 + $0x228] sm:$0xff]
    %v3013 = vld [vmem:[#allocation4 + $0x230] sm:$0xff]
    %v3014 = vld [vmem:[#allocation4 + $0x238] sm:$0xff]
    %v3015 = vld [vmem:[#allocation4 + $0x240] sm:$0xff]
    %v3016 = vld [vmem:[#allocation4 + $0x248] sm:$0xff]
    %v3017 = vld [vmem:[#allocation4 + $0x250] sm:$0xff]
    %v3018 = vld [vmem:[#allocation4 + $0x258] sm:$0xff]
    %v3019 = vld [vmem:[#allocation4 + $0x260] sm:$0xff]
    %v3020 = vld [vmem:[#allocation4 + $0x268] sm:$0xff]
    %v3021 = vld [vmem:[#allocation4 + $0x270] sm:$0xff]
    %v3022 = vld [vmem:[#allocation4 + $0x278] sm:$0xff]
    %v3023 = vld [vmem:[#allocation4 + $0x280] sm:$0xff]
    %v3024 = vld [vmem:[#allocation4 + $0x288] sm:$0xff]
    %v3025 = vld [vmem:[#allocation4 + $0x290] sm:$0xff]
    %v3026 = vld [vmem:[#allocation4 + $0x298] sm:$0xff]
    %v3027 = vld [vmem:[#allocation4 + $0x2a0] sm:$0xff]
    %v3028 = vld [vmem:[#allocation4 + $0x2a8] sm:$0xff]
    %v3029 = vld [vmem:[#allocation4 + $0x2b0] sm:$0xff]
    %v3030 = vld [vmem:[#allocation4 + $0x2b8] sm:$0xff]
    %v3031 = vld [vmem:[#allocation4 + $0x2c0] sm:$0xff]
    %v3032 = vld [vmem:[#allocation4 + $0x2c8] sm:$0xff]
    %v3033 = vld [vmem:[#allocation4 + $0x2d0] sm:$0xff]
    %v3034 = vld [vmem:[#allocation4 + $0x2d8] sm:$0xff]
    %v3035 = vld [vmem:[#allocation4 + $0x2e0] sm:$0xff]
    %v3036 = vld [vmem:[#allocation4 + $0x2e8] sm:$0xff]
    %v3037 = vld [vmem:[#allocation4 + $0x2f0] sm:$0xff]
    %v3038 = vld [vmem:[#allocation4 + $0x2f8] sm:$0xff]
    %v3039 = vld [vmem:[#allocation4 + $0x300] sm:$0xff]
    %v3040 = vld [vmem:[#allocation4 + $0x308] sm:$0xff]
    %v3041 = vld [vmem:[#allocation4 + $0x310] sm:$0xff]
    %v3042 = vld [vmem:[#allocation4 + $0x318] sm:$0xff]
    %v3043 = vld [vmem:[#allocation4 + $0x320] sm:$0xff]
    %v3044 = vld [vmem:[#allocation4 + $0x328] sm:$0xff]
    %v3045 = vld [vmem:[#allocation4 + $0x330] sm:$0xff]
    %v3046 = vld [vmem:[#allocation4 + $0x338] sm:$0xff]
    %v3047 = vld [vmem:[#allocation4 + $0x340] sm:$0xff]
    %v3048 = vld [vmem:[#allocation4 + $0x348] sm:$0xff]
    %v3049 = vld [vmem:[#allocation4 + $0x350] sm:$0xff]
    %v3050 = vld [vmem:[#allocation4 + $0x358] sm:$0xff]
    %v3051 = vld [vmem:[#allocation4 + $0x360] sm:$0xff]
    %v3052 = vld [vmem:[#allocation4 + $0x368] sm:$0xff]
    %v3053 = vld [vmem:[#allocation4 + $0x370] sm:$0xff]
    %v3054 = vld [vmem:[#allocation4 + $0x378] sm:$0xff]
    %v3055 = vld [vmem:[#allocation4 + $0x380] sm:$0xff]
    %v3056 = vld [vmem:[#allocation4 + $0x388] sm:$0xff]
    %v3057 = vld [vmem:[#allocation4 + $0x390] sm:$0xff]
    %v3058 = vld [vmem:[#allocation4 + $0x398] sm:$0xff]
    %v3059 = vld [vmem:[#allocation4 + $0x3a0] sm:$0xff]
    %v3060 = vld [vmem:[#allocation4 + $0x3a8] sm:$0xff]
    %v3061 = vld [vmem:[#allocation4 + $0x3b0] sm:$0xff]
    %v3062 = vld [vmem:[#allocation4 + $0x3b8] sm:$0xff]
    %v3063 = vld [vmem:[#allocation4 + $0x3c0] sm:$0xff]
    %v3064 = vld [vmem:[#allocation4 + $0x3c8] sm:$0xff]
    %v3065 = vld [vmem:[#allocation4 + $0x3d0] sm:$0xff]
    %v3066 = vld [vmem:[#allocation4 + $0x3d8] sm:$0xff]
    %v3067 = vld [vmem:[#allocation4 + $0x3e0] sm:$0xff]
    %v3068 = vld [vmem:[#allocation4 + $0x3e8] sm:$0xff]
    %v3069 = vld [vmem:[#allocation4 + $0x3f0] sm:$0xff]
    %v3070 = vld [vmem:[#allocation4 + $0x3f8] sm:$0xff]
    %v3071 = vld [vmem:[#allocation4 + $0x400] sm:$0xff]
    %v3072 = vld [vmem:[#allocation4 + $0x408] sm:$0xff]
    %v3073 = vld [vmem:[#allocation4 + $0x410] sm:$0xff]
    %v3074 = vld [vmem:[#allocation4 + $0x418] sm:$0xff]
    %v3075 = vld [vmem:[#allocation4 + $0x420] sm:$0xff]
    %v3076 = vld [vmem:[#allocation4 + $0x428] sm:$0xff]
    %v3077 = vld [vmem:[#allocation4 + $0x430] sm:$0xff]
    %v3078 = vld [vmem:[#allocation4 + $0x438] sm:$0xff]
    %v3079 = vld [vmem:[#allocation4 + $0x440] sm:$0xff]
    %v3080 = vld [vmem:[#allocation4 + $0x448] sm:$0xff]
    %v3081 = vld [vmem:[#allocation4 + $0x450] sm:$0xff]
    %v3082 = vld [vmem:[#allocation4 + $0x458] sm:$0xff]
    %v3083 = vld [vmem:[#allocation4 + $0x460] sm:$0xff]
    %v3084 = vld [vmem:[#allocation4 + $0x468] sm:$0xff]
    %v3085 = vld [vmem:[#allocation4 + $0x470] sm:$0xff]
    %v3086 = vld [vmem:[#allocation4 + $0x478] sm:$0xff]
    %v3087 = vld [vmem:[#allocation4 + $0x480] sm:$0xff]
    %v3088 = vld [vmem:[#allocation4 + $0x488] sm:$0xff]
    %v3089 = vld [vmem:[#allocation4 + $0x490] sm:$0xff]
    %v3090 = vld [vmem:[#allocation4 + $0x498] sm:$0xff]
    %v3091 = vld [vmem:[#allocation4 + $0x4a0] sm:$0xff]
    %v3092 = vld [vmem:[#allocation4 + $0x4a8] sm:$0xff]
    %v3093 = vld [vmem:[#allocation4 + $0x4b0] sm:$0xff]
    %v3094 = vld [vmem:[#allocation4 + $0x4b8] sm:$0xff]
    %v3095 = vld [vmem:[#allocation4 + $0x4c0] sm:$0xff]
    %v3096 = vld [vmem:[#allocation4 + $0x4c8] sm:$0xff]
    %v3097 = vld [vmem:[#allocation4 + $0x4d0] sm:$0xff]
    %v3098 = vld [vmem:[#allocation4 + $0x4d8] sm:$0xff]
    %v3099 = vld [vmem:[#allocation4 + $0x4e0] sm:$0xff]
    %v3100 = vld [vmem:[#allocation4 + $0x4e8] sm:$0xff]
    %v3101 = vld [vmem:[#allocation4 + $0x4f0] sm:$0xff]
    %v3102 = vld [vmem:[#allocation4 + $0x4f8] sm:$0xff]
    %v3103 = vld [vmem:[#allocation4 + $0x500] sm:$0xff]
    %v3104 = vld [vmem:[#allocation4 + $0x508] sm:$0xff]
    %v3105 = vld [vmem:[#allocation4 + $0x510] sm:$0xff]
    %v3106 = vld [vmem:[#allocation4 + $0x518] sm:$0xff]
    %v3107 = vld [vmem:[#allocation4 + $0x520] sm:$0xff]
    %v3108 = vld [vmem:[#allocation4 + $0x528] sm:$0xff]
    %v3109 = vld [vmem:[#allocation4 + $0x530] sm:$0xff]
    %v3110 = vld [vmem:[#allocation4 + $0x538] sm:$0xff]
    %v3111 = vld [vmem:[#allocation4 + $0x540] sm:$0xff]
    %v3112 = vld [vmem:[#allocation4 + $0x548] sm:$0xff]
    %v3113 = vld [vmem:[#allocation4 + $0x550] sm:$0xff]
    %v3114 = vld [vmem:[#allocation4 + $0x558] sm:$0xff]
    %v3115 = vld [vmem:[#allocation4 + $0x560] sm:$0xff]
    %v3116 = vld [vmem:[#allocation4 + $0x568] sm:$0xff]
    %v3117 = vld [vmem:[#allocation4 + $0x570] sm:$0xff]
    %v3118 = vld [vmem:[#allocation4 + $0x578] sm:$0xff]
    %v3119 = vld [vmem:[#allocation4 + $0x580] sm:$0xff]
    %v3120 = vld [vmem:[#allocation4 + $0x588] sm:$0xff]
    %v3121 = vld [vmem:[#allocation4 + $0x590] sm:$0xff]
    %v3122 = vld [vmem:[#allocation4 + $0x598] sm:$0xff]
    %v3123 = vld [vmem:[#allocation4 + $0x5a0] sm:$0xff]
    %v3124 = vld [vmem:[#allocation4 + $0x5a8] sm:$0xff]
    %v3125 = vld [vmem:[#allocation4 + $0x5b0] sm:$0xff]
    %v3126 = vld [vmem:[#allocation4 + $0x5b8] sm:$0xff]
    %v3127 = vld [vmem:[#allocation4 + $0x5c0] sm:$0xff]
    %v3128 = vld [vmem:[#allocation4 + $0x5c8] sm:$0xff]
    %v3129 = vld [vmem:[#allocation4 + $0x5d0] sm:$0xff]
    %v3130 = vld [vmem:[#allocation4 + $0x5d8] sm:$0xff]
    %v3131 = vld [vmem:[#allocation4 + $0x5e0] sm:$0xff]
    %v3132 = vld [vmem:[#allocation4 + $0x5e8] sm:$0xff]
    %v3133 = vld [vmem:[#allocation4 + $0x5f0] sm:$0xff]
    %v3134 = vld [vmem:[#allocation4 + $0x5f8] sm:$0xff]
    %v3135 = vld [vmem:[#allocation4 + $0x600] sm:$0xff]
    %v3136 = vld [vmem:[#allocation4 + $0x608] sm:$0xff]
    %v3137 = vld [vmem:[#allocation4 + $0x610] sm:$0xff]
    %v3138 = vld [vmem:[#allocation4 + $0x618] sm:$0xff]
    %v3139 = vld [vmem:[#allocation4 + $0x620] sm:$0xff]
    %v3140 = vld [vmem:[#allocation4 + $0x628] sm:$0xff]
    %v3141 = vld [vmem:[#allocation4 + $0x630] sm:$0xff]
    %v3142 = vld [vmem:[#allocation4 + $0x638] sm:$0xff]
    %v3143 = vld [vmem:[#allocation4 + $0x640] sm:$0xff]
    %v3144 = vld [vmem:[#allocation4 + $0x648] sm:$0xff]
    %v3145 = vld [vmem:[#allocation4 + $0x650] sm:$0xff]
    %v3146 = vld [vmem:[#allocation4 + $0x658] sm:$0xff]
    %v3147 = vld [vmem:[#allocation4 + $0x660] sm:$0xff]
    %v3148 = vld [vmem:[#allocation4 + $0x668] sm:$0xff]
    %v3149 = vld [vmem:[#allocation4 + $0x670] sm:$0xff]
    %v3150 = vld [vmem:[#allocation4 + $0x678] sm:$0xff]
    %v3151 = vld [vmem:[#allocation4 + $0x680] sm:$0xff]
    %v3152 = vld [vmem:[#allocation4 + $0x688] sm:$0xff]
    %v3153 = vld [vmem:[#allocation4 + $0x690] sm:$0xff]
    %v3154 = vld [vmem:[#allocation4 + $0x698] sm:$0xff]
    %v3155 = vld [vmem:[#allocation4 + $0x6a0] sm:$0xff]
    %v3156 = vld [vmem:[#allocation4 + $0x6a8] sm:$0xff]
    %v3157 = vld [vmem:[#allocation4 + $0x6b0] sm:$0xff]
    %v3158 = vld [vmem:[#allocation4 + $0x6b8] sm:$0xff]
    %v3159 = vld [vmem:[#allocation4 + $0x6c0] sm:$0xff]
    %v3160 = vld [vmem:[#allocation4 + $0x6c8] sm:$0xff]
    %v3161 = vld [vmem:[#allocation4 + $0x6d0] sm:$0xff]
    %v3162 = vld [vmem:[#allocation4 + $0x6d8] sm:$0xff]
    %v3163 = vld [vmem:[#allocation4 + $0x6e0] sm:$0xff]
    %v3164 = vld [vmem:[#allocation4 + $0x6e8] sm:$0xff]
    %v3165 = vld [vmem:[#allocation4 + $0x6f0] sm:$0xff]
    %v3166 = vld [vmem:[#allocation4 + $0x6f8] sm:$0xff]
    %v3167 = vld [vmem:[#allocation4 + $0x700] sm:$0xff]
    %v3168 = vld [vmem:[#allocation4 + $0x708] sm:$0xff]
    %v3169 = vld [vmem:[#allocation4 + $0x710] sm:$0xff]
    %v3170 = vld [vmem:[#allocation4 + $0x718] sm:$0xff]
    %v3171 = vld [vmem:[#allocation4 + $0x720] sm:$0xff]
    %v3172 = vld [vmem:[#allocation4 + $0x728] sm:$0xff]
    %v3173 = vld [vmem:[#allocation4 + $0x730] sm:$0xff]
    %v3174 = vld [vmem:[#allocation4 + $0x738] sm:$0xff]
    %v3175 = vld [vmem:[#allocation4 + $0x740] sm:$0xff]
    %v3176 = vld [vmem:[#allocation4 + $0x748] sm:$0xff]
    %v3177 = vld [vmem:[#allocation4 + $0x750] sm:$0xff]
    %v3178 = vld [vmem:[#allocation4 + $0x758] sm:$0xff]
    %v3179 = vld [vmem:[#allocation4 + $0x760] sm:$0xff]
    %v3180 = vld [vmem:[#allocation4 + $0x768] sm:$0xff]
    %v3181 = vld [vmem:[#allocation4 + $0x770] sm:$0xff]
    %v3182 = vld [vmem:[#allocation4 + $0x778] sm:$0xff]
    %v3183 = vld [vmem:[#allocation4 + $0x780] sm:$0xff]
    %v3184 = vld [vmem:[#allocation4 + $0x788] sm:$0xff]
    %v3185 = vld [vmem:[#allocation4 + $0x790] sm:$0xff]
    %v3186 = vld [vmem:[#allocation4 + $0x798] sm:$0xff]
    %v3187 = vld [vmem:[#allocation4 + $0x7a0] sm:$0xff]
    %v3188 = vld [vmem:[#allocation4 + $0x7a8] sm:$0xff]
    %v3189 = vld [vmem:[#allocation4 + $0x7b0] sm:$0xff]
    %v3190 = vld [vmem:[#allocation4 + $0x7b8] sm:$0xff]
    %v3191 = vld [vmem:[#allocation4 + $0x7c0] sm:$0xff]
    %v3192 = vld [vmem:[#allocation4 + $0x7c8] sm:$0xff]
    %v3193 = vld [vmem:[#allocation4 + $0x7d0] sm:$0xff]
    %v3194 = vld [vmem:[#allocation4 + $0x7d8] sm:$0xff]
    %v3195 = vld [vmem:[#allocation4 + $0x7e0] sm:$0xff]
    %v3196 = vld [vmem:[#allocation4 + $0x7e8] sm:$0xff]
    %v3197 = vld [vmem:[#allocation4 + $0x7f0] sm:$0xff]
    %v3198 = vld [vmem:[#allocation4 + $0x7f8] sm:$0xff]
    %v3199 = vld [vmem:[%s9] sm:$0xff]
    %v3201 = vlaneseq
    %v3202 = vshrl.u32 %v3201, 7
    %v3203 = vsub.s32 0, %v3202
    %v3204 = vrot.slane %v3199, %v3203
    %v3205 = vlaneseq
    %v3206 = vshrl.u32 %v3205, 7
    %v3207 = vsub.s32 1, %v3206
    %v3208 = vrot.slane %v3199, %v3207
    %v3209 = vlaneseq
    %v3210 = vshrl.u32 %v3209, 7
    %v3211 = vsub.s32 2, %v3210
    %v3212 = vrot.slane %v3199, %v3211
    %v3213 = vlaneseq
    %v3214 = vshrl.u32 %v3213, 7
    %v3215 = vsub.s32 3, %v3214
    %v3216 = vrot.slane %v3199, %v3215
    %v3217 = vlaneseq
    %v3218 = vshrl.u32 %v3217, 7
    %v3219 = vsub.s32 4, %v3218
    %v3220 = vrot.slane %v3199, %v3219
    %v3221 = vlaneseq
    %v3222 = vshrl.u32 %v3221, 7
    %v3223 = vsub.s32 5, %v3222
    %v3224 = vrot.slane %v3199, %v3223
    %v3225 = vlaneseq
    %v3226 = vshrl.u32 %v3225, 7
    %v3227 = vsub.s32 6, %v3226
    %v3228 = vrot.slane %v3199, %v3227
    %v3229 = vlaneseq
    %v3230 = vshrl.u32 %v3229, 7
    %v3231 = vsub.s32 7, %v3230
    %v3232 = vrot.slane %v3199, %v3231
    %v3497 = vunpack.c.l.b16 %v2943
    %v3498 = vunpack.c.h.b16 %v2943
    %v3499 = vunpack.c.l.b16 %v2944
    %v3500 = vunpack.c.h.b16 %v2944
    %v3501 = vunpack.c.l.b16 %v2945
    %v3502 = vunpack.c.h.b16 %v2945
    %v3503 = vunpack.c.l.b16 %v2946
    %v3504 = vunpack.c.h.b16 %v2946
    %v3505 = vunpack.c.l.b16 %v2947
    %v3506 = vunpack.c.h.b16 %v2947
    %v3507 = vunpack.c.l.b16 %v2948
    %v3508 = vunpack.c.h.b16 %v2948
    %v3509 = vunpack.c.l.b16 %v2949
    %v3510 = vunpack.c.h.b16 %v2949
    %v3511 = vunpack.c.l.b16 %v2950
    %v3512 = vunpack.c.h.b16 %v2950
    %v3513 = vunpack.c.l.b16 %v2951
    %v3514 = vunpack.c.h.b16 %v2951
    %v3515 = vunpack.c.l.b16 %v2952
    %v3516 = vunpack.c.h.b16 %v2952
    %v3517 = vunpack.c.l.b16 %v2953
    %v3518 = vunpack.c.h.b16 %v2953
    %v3519 = vunpack.c.l.b16 %v2954
    %v3520 = vunpack.c.h.b16 %v2954
    %v3521 = vunpack.c.l.b16 %v2955
    %v3522 = vunpack.c.h.b16 %v2955
    %v3523 = vunpack.c.l.b16 %v2956
    %v3524 = vunpack.c.h.b16 %v2956
    %v3525 = vunpack.c.l.b16 %v2957
    %v3526 = vunpack.c.h.b16 %v2957
    %v3527 = vunpack.c.l.b16 %v2958
    %v3528 = vunpack.c.h.b16 %v2958
    %v3529 = vunpack.c.l.b16 %v2959
    %v3530 = vunpack.c.h.b16 %v2959
    %v3531 = vunpack.c.l.b16 %v2960
    %v3532 = vunpack.c.h.b16 %v2960
    %v3533 = vunpack.c.l.b16 %v2961
    %v3534 = vunpack.c.h.b16 %v2961
    %v3535 = vunpack.c.l.b16 %v2962
    %v3536 = vunpack.c.h.b16 %v2962
    %v3537 = vunpack.c.l.b16 %v2963
    %v3538 = vunpack.c.h.b16 %v2963
    %v3539 = vunpack.c.l.b16 %v2964
    %v3540 = vunpack.c.h.b16 %v2964
    %v3541 = vunpack.c.l.b16 %v2965
    %v3542 = vunpack.c.h.b16 %v2965
    %v3543 = vunpack.c.l.b16 %v2966
    %v3544 = vunpack.c.h.b16 %v2966
    %v3545 = vunpack.c.l.b16 %v2967
    %v3546 = vunpack.c.h.b16 %v2967
    %v3547 = vunpack.c.l.b16 %v2968
    %v3548 = vunpack.c.h.b16 %v2968
    %v3549 = vunpack.c.l.b16 %v2969
    %v3550 = vunpack.c.h.b16 %v2969
    %v3551 = vunpack.c.l.b16 %v2970
    %v3552 = vunpack.c.h.b16 %v2970
    %v3553 = vunpack.c.l.b16 %v2971
    %v3554 = vunpack.c.h.b16 %v2971
    %v3555 = vunpack.c.l.b16 %v2972
    %v3556 = vunpack.c.h.b16 %v2972
    %v3557 = vunpack.c.l.b16 %v2973
    %v3558 = vunpack.c.h.b16 %v2973
    %v3559 = vunpack.c.l.b16 %v2974
    %v3560 = vunpack.c.h.b16 %v2974
    %v3561 = vunpack.c.l.b16 %v2975
    %v3562 = vunpack.c.h.b16 %v2975
    %v3563 = vunpack.c.l.b16 %v2976
    %v3564 = vunpack.c.h.b16 %v2976
    %v3565 = vunpack.c.l.b16 %v2977
    %v3566 = vunpack.c.h.b16 %v2977
    %v3567 = vunpack.c.l.b16 %v2978
    %v3568 = vunpack.c.h.b16 %v2978
    %v3569 = vunpack.c.l.b16 %v2979
    %v3570 = vunpack.c.h.b16 %v2979
    %v3571 = vunpack.c.l.b16 %v2980
    %v3572 = vunpack.c.h.b16 %v2980
    %v3573 = vunpack.c.l.b16 %v2981
    %v3574 = vunpack.c.h.b16 %v2981
    %v3575 = vunpack.c.l.b16 %v2982
    %v3576 = vunpack.c.h.b16 %v2982
    %v3577 = vunpack.c.l.b16 %v2983
    %v3578 = vunpack.c.h.b16 %v2983
    %v3579 = vunpack.c.l.b16 %v2984
    %v3580 = vunpack.c.h.b16 %v2984
    %v3581 = vunpack.c.l.b16 %v2985
    %v3582 = vunpack.c.h.b16 %v2985
    %v3583 = vunpack.c.l.b16 %v2986
    %v3584 = vunpack.c.h.b16 %v2986
    %v3585 = vunpack.c.l.b16 %v2987
    %v3586 = vunpack.c.h.b16 %v2987
    %v3587 = vunpack.c.l.b16 %v2988
    %v3588 = vunpack.c.h.b16 %v2988
    %v3589 = vunpack.c.l.b16 %v2989
    %v3590 = vunpack.c.h.b16 %v2989
    %v3591 = vunpack.c.l.b16 %v2990
    %v3592 = vunpack.c.h.b16 %v2990
    %v3593 = vunpack.c.l.b16 %v2991
    %v3594 = vunpack.c.h.b16 %v2991
    %v3595 = vunpack.c.l.b16 %v2992
    %v3596 = vunpack.c.h.b16 %v2992
    %v3597 = vunpack.c.l.b16 %v2993
    %v3598 = vunpack.c.h.b16 %v2993
    %v3599 = vunpack.c.l.b16 %v2994
    %v3600 = vunpack.c.h.b16 %v2994
    %v3601 = vunpack.c.l.b16 %v2995
    %v3602 = vunpack.c.h.b16 %v2995
    %v3603 = vunpack.c.l.b16 %v2996
    %v3604 = vunpack.c.h.b16 %v2996
    %v3605 = vunpack.c.l.b16 %v2997
    %v3606 = vunpack.c.h.b16 %v2997
    %v3607 = vunpack.c.l.b16 %v2998
    %v3608 = vunpack.c.h.b16 %v2998
    %v3609 = vunpack.c.l.b16 %v2999
    %v3610 = vunpack.c.h.b16 %v2999
    %v3611 = vunpack.c.l.b16 %v3000
    %v3612 = vunpack.c.h.b16 %v3000
    %v3613 = vunpack.c.l.b16 %v3001
    %v3614 = vunpack.c.h.b16 %v3001
    %v3615 = vunpack.c.l.b16 %v3002
    %v3616 = vunpack.c.h.b16 %v3002
    %v3617 = vunpack.c.l.b16 %v3003
    %v3618 = vunpack.c.h.b16 %v3003
    %v3619 = vunpack.c.l.b16 %v3004
    %v3620 = vunpack.c.h.b16 %v3004
    %v3621 = vunpack.c.l.b16 %v3005
    %v3622 = vunpack.c.h.b16 %v3005
    %v3623 = vunpack.c.l.b16 %v3006
    %v3624 = vunpack.c.h.b16 %v3006
    %v3625 = vunpack.c.l.b16 %v3007
    %v3626 = vunpack.c.h.b16 %v3007
    %v3627 = vunpack.c.l.b16 %v3008
    %v3628 = vunpack.c.h.b16 %v3008
    %v3629 = vunpack.c.l.b16 %v3009
    %v3630 = vunpack.c.h.b16 %v3009
    %v3631 = vunpack.c.l.b16 %v3010
    %v3632 = vunpack.c.h.b16 %v3010
    %v3633 = vunpack.c.l.b16 %v3011
    %v3634 = vunpack.c.h.b16 %v3011
    %v3635 = vunpack.c.l.b16 %v3012
    %v3636 = vunpack.c.h.b16 %v3012
    %v3637 = vunpack.c.l.b16 %v3013
    %v3638 = vunpack.c.h.b16 %v3013
    %v3639 = vunpack.c.l.b16 %v3014
    %v3640 = vunpack.c.h.b16 %v3014
    %v3641 = vunpack.c.l.b16 %v3015
    %v3642 = vunpack.c.h.b16 %v3015
    %v3643 = vunpack.c.l.b16 %v3016
    %v3644 = vunpack.c.h.b16 %v3016
    %v3645 = vunpack.c.l.b16 %v3017
    %v3646 = vunpack.c.h.b16 %v3017
    %v3647 = vunpack.c.l.b16 %v3018
    %v3648 = vunpack.c.h.b16 %v3018
    %v3649 = vunpack.c.l.b16 %v3019
    %v3650 = vunpack.c.h.b16 %v3019
    %v3651 = vunpack.c.l.b16 %v3020
    %v3652 = vunpack.c.h.b16 %v3020
    %v3653 = vunpack.c.l.b16 %v3021
    %v3654 = vunpack.c.h.b16 %v3021
    %v3655 = vunpack.c.l.b16 %v3022
    %v3656 = vunpack.c.h.b16 %v3022
    %v3657 = vunpack.c.l.b16 %v3023
    %v3658 = vunpack.c.h.b16 %v3023
    %v3659 = vunpack.c.l.b16 %v3024
    %v3660 = vunpack.c.h.b16 %v3024
    %v3661 = vunpack.c.l.b16 %v3025
    %v3662 = vunpack.c.h.b16 %v3025
    %v3663 = vunpack.c.l.b16 %v3026
    %v3664 = vunpack.c.h.b16 %v3026
    %v3665 = vunpack.c.l.b16 %v3027
    %v3666 = vunpack.c.h.b16 %v3027
    %v3667 = vunpack.c.l.b16 %v3028
    %v3668 = vunpack.c.h.b16 %v3028
    %v3669 = vunpack.c.l.b16 %v3029
    %v3670 = vunpack.c.h.b16 %v3029
    %v3671 = vunpack.c.l.b16 %v3030
    %v3672 = vunpack.c.h.b16 %v3030
    %v3673 = vunpack.c.l.b16 %v3031
    %v3674 = vunpack.c.h.b16 %v3031
    %v3675 = vunpack.c.l.b16 %v3032
    %v3676 = vunpack.c.h.b16 %v3032
    %v3677 = vunpack.c.l.b16 %v3033
    %v3678 = vunpack.c.h.b16 %v3033
    %v3679 = vunpack.c.l.b16 %v3034
    %v3680 = vunpack.c.h.b16 %v3034
    %v3681 = vunpack.c.l.b16 %v3035
    %v3682 = vunpack.c.h.b16 %v3035
    %v3683 = vunpack.c.l.b16 %v3036
    %v3684 = vunpack.c.h.b16 %v3036
    %v3685 = vunpack.c.l.b16 %v3037
    %v3686 = vunpack.c.h.b16 %v3037
    %v3687 = vunpack.c.l.b16 %v3038
    %v3688 = vunpack.c.h.b16 %v3038
    %v3689 = vunpack.c.l.b16 %v3039
    %v3690 = vunpack.c.h.b16 %v3039
    %v3691 = vunpack.c.l.b16 %v3040
    %v3692 = vunpack.c.h.b16 %v3040
    %v3693 = vunpack.c.l.b16 %v3041
    %v3694 = vunpack.c.h.b16 %v3041
    %v3695 = vunpack.c.l.b16 %v3042
    %v3696 = vunpack.c.h.b16 %v3042
    %v3697 = vunpack.c.l.b16 %v3043
    %v3698 = vunpack.c.h.b16 %v3043
    %v3699 = vunpack.c.l.b16 %v3044
    %v3700 = vunpack.c.h.b16 %v3044
    %v3701 = vunpack.c.l.b16 %v3045
    %v3702 = vunpack.c.h.b16 %v3045
    %v3703 = vunpack.c.l.b16 %v3046
    %v3704 = vunpack.c.h.b16 %v3046
    %v3705 = vunpack.c.l.b16 %v3047
    %v3706 = vunpack.c.h.b16 %v3047
    %v3707 = vunpack.c.l.b16 %v3048
    %v3708 = vunpack.c.h.b16 %v3048
    %v3709 = vunpack.c.l.b16 %v3049
    %v3710 = vunpack.c.h.b16 %v3049
    %v3711 = vunpack.c.l.b16 %v3050
    %v3712 = vunpack.c.h.b16 %v3050
    %v3713 = vunpack.c.l.b16 %v3051
    %v3714 = vunpack.c.h.b16 %v3051
    %v3715 = vunpack.c.l.b16 %v3052
    %v3716 = vunpack.c.h.b16 %v3052
    %v3717 = vunpack.c.l.b16 %v3053
    %v3718 = vunpack.c.h.b16 %v3053
    %v3719 = vunpack.c.l.b16 %v3054
    %v3720 = vunpack.c.h.b16 %v3054
    %v3721 = vunpack.c.l.b16 %v3055
    %v3722 = vunpack.c.h.b16 %v3055
    %v3723 = vunpack.c.l.b16 %v3056
    %v3724 = vunpack.c.h.b16 %v3056
    %v3725 = vunpack.c.l.b16 %v3057
    %v3726 = vunpack.c.h.b16 %v3057
    %v3727 = vunpack.c.l.b16 %v3058
    %v3728 = vunpack.c.h.b16 %v3058
    %v3729 = vunpack.c.l.b16 %v3059
    %v3730 = vunpack.c.h.b16 %v3059
    %v3731 = vunpack.c.l.b16 %v3060
    %v3732 = vunpack.c.h.b16 %v3060
    %v3733 = vunpack.c.l.b16 %v3061
    %v3734 = vunpack.c.h.b16 %v3061
    %v3735 = vunpack.c.l.b16 %v3062
    %v3736 = vunpack.c.h.b16 %v3062
    %v3737 = vunpack.c.l.b16 %v3063
    %v3738 = vunpack.c.h.b16 %v3063
    %v3739 = vunpack.c.l.b16 %v3064
    %v3740 = vunpack.c.h.b16 %v3064
    %v3741 = vunpack.c.l.b16 %v3065
    %v3742 = vunpack.c.h.b16 %v3065
    %v3743 = vunpack.c.l.b16 %v3066
    %v3744 = vunpack.c.h.b16 %v3066
    %v3745 = vunpack.c.l.b16 %v3067
    %v3746 = vunpack.c.h.b16 %v3067
    %v3747 = vunpack.c.l.b16 %v3068
    %v3748 = vunpack.c.h.b16 %v3068
    %v3749 = vunpack.c.l.b16 %v3069
    %v3750 = vunpack.c.h.b16 %v3069
    %v3751 = vunpack.c.l.b16 %v3070
    %v3752 = vunpack.c.h.b16 %v3070
    %v3753 = vunpack.c.l.b16 %v3071
    %v3754 = vunpack.c.h.b16 %v3071
    %v3755 = vunpack.c.l.b16 %v3072
    %v3756 = vunpack.c.h.b16 %v3072
    %v3757 = vunpack.c.l.b16 %v3073
    %v3758 = vunpack.c.h.b16 %v3073
    %v3759 = vunpack.c.l.b16 %v3074
    %v3760 = vunpack.c.h.b16 %v3074
    %v3761 = vunpack.c.l.b16 %v3075
    %v3762 = vunpack.c.h.b16 %v3075
    %v3763 = vunpack.c.l.b16 %v3076
    %v3764 = vunpack.c.h.b16 %v3076
    %v3765 = vunpack.c.l.b16 %v3077
    %v3766 = vunpack.c.h.b16 %v3077
    %v3767 = vunpack.c.l.b16 %v3078
    %v3768 = vunpack.c.h.b16 %v3078
    %v3769 = vunpack.c.l.b16 %v3079
    %v3770 = vunpack.c.h.b16 %v3079
    %v3771 = vunpack.c.l.b16 %v3080
    %v3772 = vunpack.c.h.b16 %v3080
    %v3773 = vunpack.c.l.b16 %v3081
    %v3774 = vunpack.c.h.b16 %v3081
    %v3775 = vunpack.c.l.b16 %v3082
    %v3776 = vunpack.c.h.b16 %v3082
    %v3777 = vunpack.c.l.b16 %v3083
    %v3778 = vunpack.c.h.b16 %v3083
    %v3779 = vunpack.c.l.b16 %v3084
    %v3780 = vunpack.c.h.b16 %v3084
    %v3781 = vunpack.c.l.b16 %v3085
    %v3782 = vunpack.c.h.b16 %v3085
    %v3783 = vunpack.c.l.b16 %v3086
    %v3784 = vunpack.c.h.b16 %v3086
    %v3785 = vunpack.c.l.b16 %v3087
    %v3786 = vunpack.c.h.b16 %v3087
    %v3787 = vunpack.c.l.b16 %v3088
    %v3788 = vunpack.c.h.b16 %v3088
    %v3789 = vunpack.c.l.b16 %v3089
    %v3790 = vunpack.c.h.b16 %v3089
    %v3791 = vunpack.c.l.b16 %v3090
    %v3792 = vunpack.c.h.b16 %v3090
    %v3793 = vunpack.c.l.b16 %v3091
    %v3794 = vunpack.c.h.b16 %v3091
    %v3795 = vunpack.c.l.b16 %v3092
    %v3796 = vunpack.c.h.b16 %v3092
    %v3797 = vunpack.c.l.b16 %v3093
    %v3798 = vunpack.c.h.b16 %v3093
    %v3799 = vunpack.c.l.b16 %v3094
    %v3800 = vunpack.c.h.b16 %v3094
    %v3801 = vunpack.c.l.b16 %v3095
    %v3802 = vunpack.c.h.b16 %v3095
    %v3803 = vunpack.c.l.b16 %v3096
    %v3804 = vunpack.c.h.b16 %v3096
    %v3805 = vunpack.c.l.b16 %v3097
    %v3806 = vunpack.c.h.b16 %v3097
    %v3807 = vunpack.c.l.b16 %v3098
    %v3808 = vunpack.c.h.b16 %v3098
    %v3809 = vunpack.c.l.b16 %v3099
    %v3810 = vunpack.c.h.b16 %v3099
    %v3811 = vunpack.c.l.b16 %v3100
    %v3812 = vunpack.c.h.b16 %v3100
    %v3813 = vunpack.c.l.b16 %v3101
    %v3814 = vunpack.c.h.b16 %v3101
    %v3815 = vunpack.c.l.b16 %v3102
    %v3816 = vunpack.c.h.b16 %v3102
    %v3817 = vunpack.c.l.b16 %v3103
    %v3818 = vunpack.c.h.b16 %v3103
    %v3819 = vunpack.c.l.b16 %v3104
    %v3820 = vunpack.c.h.b16 %v3104
    %v3821 = vunpack.c.l.b16 %v3105
    %v3822 = vunpack.c.h.b16 %v3105
    %v3823 = vunpack.c.l.b16 %v3106
    %v3824 = vunpack.c.h.b16 %v3106
    %v3825 = vunpack.c.l.b16 %v3107
    %v3826 = vunpack.c.h.b16 %v3107
    %v3827 = vunpack.c.l.b16 %v3108
    %v3828 = vunpack.c.h.b16 %v3108
    %v3829 = vunpack.c.l.b16 %v3109
    %v3830 = vunpack.c.h.b16 %v3109
    %v3831 = vunpack.c.l.b16 %v3110
    %v3832 = vunpack.c.h.b16 %v3110
    %v3833 = vunpack.c.l.b16 %v3111
    %v3834 = vunpack.c.h.b16 %v3111
    %v3835 = vunpack.c.l.b16 %v3112
    %v3836 = vunpack.c.h.b16 %v3112
    %v3837 = vunpack.c.l.b16 %v3113
    %v3838 = vunpack.c.h.b16 %v3113
    %v3839 = vunpack.c.l.b16 %v3114
    %v3840 = vunpack.c.h.b16 %v3114
    %v3841 = vunpack.c.l.b16 %v3115
    %v3842 = vunpack.c.h.b16 %v3115
    %v3843 = vunpack.c.l.b16 %v3116
    %v3844 = vunpack.c.h.b16 %v3116
    %v3845 = vunpack.c.l.b16 %v3117
    %v3846 = vunpack.c.h.b16 %v3117
    %v3847 = vunpack.c.l.b16 %v3118
    %v3848 = vunpack.c.h.b16 %v3118
    %v3849 = vunpack.c.l.b16 %v3119
    %v3850 = vunpack.c.h.b16 %v3119
    %v3851 = vunpack.c.l.b16 %v3120
    %v3852 = vunpack.c.h.b16 %v3120
    %v3853 = vunpack.c.l.b16 %v3121
    %v3854 = vunpack.c.h.b16 %v3121
    %v3855 = vunpack.c.l.b16 %v3122
    %v3856 = vunpack.c.h.b16 %v3122
    %v3857 = vunpack.c.l.b16 %v3123
    %v3858 = vunpack.c.h.b16 %v3123
    %v3859 = vunpack.c.l.b16 %v3124
    %v3860 = vunpack.c.h.b16 %v3124
    %v3861 = vunpack.c.l.b16 %v3125
    %v3862 = vunpack.c.h.b16 %v3125
    %v3863 = vunpack.c.l.b16 %v3126
    %v3864 = vunpack.c.h.b16 %v3126
    %v3865 = vunpack.c.l.b16 %v3127
    %v3866 = vunpack.c.h.b16 %v3127
    %v3867 = vunpack.c.l.b16 %v3128
    %v3868 = vunpack.c.h.b16 %v3128
    %v3869 = vunpack.c.l.b16 %v3129
    %v3870 = vunpack.c.h.b16 %v3129
    %v3871 = vunpack.c.l.b16 %v3130
    %v3872 = vunpack.c.h.b16 %v3130
    %v3873 = vunpack.c.l.b16 %v3131
    %v3874 = vunpack.c.h.b16 %v3131
    %v3875 = vunpack.c.l.b16 %v3132
    %v3876 = vunpack.c.h.b16 %v3132
    %v3877 = vunpack.c.l.b16 %v3133
    %v3878 = vunpack.c.h.b16 %v3133
    %v3879 = vunpack.c.l.b16 %v3134
    %v3880 = vunpack.c.h.b16 %v3134
    %v3881 = vunpack.c.l.b16 %v3135
    %v3882 = vunpack.c.h.b16 %v3135
    %v3883 = vunpack.c.l.b16 %v3136
    %v3884 = vunpack.c.h.b16 %v3136
    %v3885 = vunpack.c.l.b16 %v3137
    %v3886 = vunpack.c.h.b16 %v3137
    %v3887 = vunpack.c.l.b16 %v3138
    %v3888 = vunpack.c.h.b16 %v3138
    %v3889 = vunpack.c.l.b16 %v3139
    %v3890 = vunpack.c.h.b16 %v3139
    %v3891 = vunpack.c.l.b16 %v3140
    %v3892 = vunpack.c.h.b16 %v3140
    %v3893 = vunpack.c.l.b16 %v3141
    %v3894 = vunpack.c.h.b16 %v3141
    %v3895 = vunpack.c.l.b16 %v3142
    %v3896 = vunpack.c.h.b16 %v3142
    %v3897 = vunpack.c.l.b16 %v3143
    %v3898 = vunpack.c.h.b16 %v3143
    %v3899 = vunpack.c.l.b16 %v3144
    %v3900 = vunpack.c.h.b16 %v3144
    %v3901 = vunpack.c.l.b16 %v3145
    %v3902 = vunpack.c.h.b16 %v3145
    %v3903 = vunpack.c.l.b16 %v3146
    %v3904 = vunpack.c.h.b16 %v3146
    %v3905 = vunpack.c.l.b16 %v3147
    %v3906 = vunpack.c.h.b16 %v3147
    %v3907 = vunpack.c.l.b16 %v3148
    %v3908 = vunpack.c.h.b16 %v3148
    %v3909 = vunpack.c.l.b16 %v3149
    %v3910 = vunpack.c.h.b16 %v3149
    %v3911 = vunpack.c.l.b16 %v3150
    %v3912 = vunpack.c.h.b16 %v3150
    %v3913 = vunpack.c.l.b16 %v3151
    %v3914 = vunpack.c.h.b16 %v3151
    %v3915 = vunpack.c.l.b16 %v3152
    %v3916 = vunpack.c.h.b16 %v3152
    %v3917 = vunpack.c.l.b16 %v3153
    %v3918 = vunpack.c.h.b16 %v3153
    %v3919 = vunpack.c.l.b16 %v3154
    %v3920 = vunpack.c.h.b16 %v3154
    %v3921 = vunpack.c.l.b16 %v3155
    %v3922 = vunpack.c.h.b16 %v3155
    %v3923 = vunpack.c.l.b16 %v3156
    %v3924 = vunpack.c.h.b16 %v3156
    %v3925 = vunpack.c.l.b16 %v3157
    %v3926 = vunpack.c.h.b16 %v3157
    %v3927 = vunpack.c.l.b16 %v3158
    %v3928 = vunpack.c.h.b16 %v3158
    %v3929 = vunpack.c.l.b16 %v3159
    %v3930 = vunpack.c.h.b16 %v3159
    %v3931 = vunpack.c.l.b16 %v3160
    %v3932 = vunpack.c.h.b16 %v3160
    %v3933 = vunpack.c.l.b16 %v3161
    %v3934 = vunpack.c.h.b16 %v3161
    %v3935 = vunpack.c.l.b16 %v3162
    %v3936 = vunpack.c.h.b16 %v3162
    %v3937 = vunpack.c.l.b16 %v3163
    %v3938 = vunpack.c.h.b16 %v3163
    %v3939 = vunpack.c.l.b16 %v3164
    %v3940 = vunpack.c.h.b16 %v3164
    %v3941 = vunpack.c.l.b16 %v3165
    %v3942 = vunpack.c.h.b16 %v3165
    %v3943 = vunpack.c.l.b16 %v3166
    %v3944 = vunpack.c.h.b16 %v3166
    %v3945 = vunpack.c.l.b16 %v3167
    %v3946 = vunpack.c.h.b16 %v3167
    %v3947 = vunpack.c.l.b16 %v3168
    %v3948 = vunpack.c.h.b16 %v3168
    %v3949 = vunpack.c.l.b16 %v3169
    %v3950 = vunpack.c.h.b16 %v3169
    %v3951 = vunpack.c.l.b16 %v3170
    %v3952 = vunpack.c.h.b16 %v3170
    %v3953 = vunpack.c.l.b16 %v3171
    %v3954 = vunpack.c.h.b16 %v3171
    %v3955 = vunpack.c.l.b16 %v3172
    %v3956 = vunpack.c.h.b16 %v3172
    %v3957 = vunpack.c.l.b16 %v3173
    %v3958 = vunpack.c.h.b16 %v3173
    %v3959 = vunpack.c.l.b16 %v3174
    %v3960 = vunpack.c.h.b16 %v3174
    %v3961 = vunpack.c.l.b16 %v3175
    %v3962 = vunpack.c.h.b16 %v3175
    %v3963 = vunpack.c.l.b16 %v3176
    %v3964 = vunpack.c.h.b16 %v3176
    %v3965 = vunpack.c.l.b16 %v3177
    %v3966 = vunpack.c.h.b16 %v3177
    %v3967 = vunpack.c.l.b16 %v3178
    %v3968 = vunpack.c.h.b16 %v3178
    %v3969 = vunpack.c.l.b16 %v3179
    %v3970 = vunpack.c.h.b16 %v3179
    %v3971 = vunpack.c.l.b16 %v3180
    %v3972 = vunpack.c.h.b16 %v3180
    %v3973 = vunpack.c.l.b16 %v3181
    %v3974 = vunpack.c.h.b16 %v3181
    %v3975 = vunpack.c.l.b16 %v3182
    %v3976 = vunpack.c.h.b16 %v3182
    %v3977 = vunpack.c.l.b16 %v3183
    %v3978 = vunpack.c.h.b16 %v3183
    %v3979 = vunpack.c.l.b16 %v3184
    %v3980 = vunpack.c.h.b16 %v3184
    %v3981 = vunpack.c.l.b16 %v3185
    %v3982 = vunpack.c.h.b16 %v3185
    %v3983 = vunpack.c.l.b16 %v3186
    %v3984 = vunpack.c.h.b16 %v3186
    %v3985 = vunpack.c.l.b16 %v3187
    %v3986 = vunpack.c.h.b16 %v3187
    %v3987 = vunpack.c.l.b16 %v3188
    %v3988 = vunpack.c.h.b16 %v3188
    %v3989 = vunpack.c.l.b16 %v3189
    %v3990 = vunpack.c.h.b16 %v3189
    %v3991 = vunpack.c.l.b16 %v3190
    %v3992 = vunpack.c.h.b16 %v3190
    %v3993 = vunpack.c.l.b16 %v3191
    %v3994 = vunpack.c.h.b16 %v3191
    %v3995 = vunpack.c.l.b16 %v3192
    %v3996 = vunpack.c.h.b16 %v3192
    %v3997 = vunpack.c.l.b16 %v3193
    %v3998 = vunpack.c.h.b16 %v3193
    %v3999 = vunpack.c.l.b16 %v3194
    %v4000 = vunpack.c.h.b16 %v3194
    %v4001 = vunpack.c.l.b16 %v3195
    %v4002 = vunpack.c.h.b16 %v3195
    %v4003 = vunpack.c.l.b16 %v3196
    %v4004 = vunpack.c.h.b16 %v3196
    %v4005 = vunpack.c.l.b16 %v3197
    %v4006 = vunpack.c.h.b16 %v3197
    %v4007 = vunpack.c.l.b16 %v3198
    %v4008 = vunpack.c.h.b16 %v3198
    %v4009 = vpack.c.b16 %v3505, %v3497
    %v4010 = vpack.c.b16 %v3506, %v3498
    %v4011 = vpack.c.b16 %v3507, %v3499
    %v4012 = vpack.c.b16 %v3508, %v3500
    %v4013 = vpack.c.b16 %v3509, %v3501
    %v4014 = vpack.c.b16 %v3510, %v3502
    %v4015 = vpack.c.b16 %v3511, %v3503
    %v4016 = vpack.c.b16 %v3512, %v3504
    %v4017 = vpack.c.b16 %v3521, %v3513
    %v4018 = vpack.c.b16 %v3522, %v3514
    %v4019 = vpack.c.b16 %v3523, %v3515
    %v4020 = vpack.c.b16 %v3524, %v3516
    %v4021 = vpack.c.b16 %v3525, %v3517
    %v4022 = vpack.c.b16 %v3526, %v3518
    %v4023 = vpack.c.b16 %v3527, %v3519
    %v4024 = vpack.c.b16 %v3528, %v3520
    %v4025 = vpack.c.b16 %v3537, %v3529
    %v4026 = vpack.c.b16 %v3538, %v3530
    %v4027 = vpack.c.b16 %v3539, %v3531
    %v4028 = vpack.c.b16 %v3540, %v3532
    %v4029 = vpack.c.b16 %v3541, %v3533
    %v4030 = vpack.c.b16 %v3542, %v3534
    %v4031 = vpack.c.b16 %v3543, %v3535
    %v4032 = vpack.c.b16 %v3544, %v3536
    %v4033 = vpack.c.b16 %v3553, %v3545
    %v4034 = vpack.c.b16 %v3554, %v3546
    %v4035 = vpack.c.b16 %v3555, %v3547
    %v4036 = vpack.c.b16 %v3556, %v3548
    %v4037 = vpack.c.b16 %v3557, %v3549
    %v4038 = vpack.c.b16 %v3558, %v3550
    %v4039 = vpack.c.b16 %v3559, %v3551
    %v4040 = vpack.c.b16 %v3560, %v3552
    %v4041 = vpack.c.b16 %v3569, %v3561
    %v4042 = vpack.c.b16 %v3570, %v3562
    %v4043 = vpack.c.b16 %v3571, %v3563
    %v4044 = vpack.c.b16 %v3572, %v3564
    %v4045 = vpack.c.b16 %v3573, %v3565
    %v4046 = vpack.c.b16 %v3574, %v3566
    %v4047 = vpack.c.b16 %v3575, %v3567
    %v4048 = vpack.c.b16 %v3576, %v3568
    %v4049 = vpack.c.b16 %v3585, %v3577
    %v4050 = vpack.c.b16 %v3586, %v3578
    %v4051 = vpack.c.b16 %v3587, %v3579
    %v4052 = vpack.c.b16 %v3588, %v3580
    %v4053 = vpack.c.b16 %v3589, %v3581
    %v4054 = vpack.c.b16 %v3590, %v3582
    %v4055 = vpack.c.b16 %v3591, %v3583
    %v4056 = vpack.c.b16 %v3592, %v3584
    %v4057 = vpack.c.b16 %v3601, %v3593
    %v4058 = vpack.c.b16 %v3602, %v3594
    %v4059 = vpack.c.b16 %v3603, %v3595
    %v4060 = vpack.c.b16 %v3604, %v3596
    %v4061 = vpack.c.b16 %v3605, %v3597
    %v4062 = vpack.c.b16 %v3606, %v3598
    %v4063 = vpack.c.b16 %v3607, %v3599
    %v4064 = vpack.c.b16 %v3608, %v3600
    %v4065 = vpack.c.b16 %v3617, %v3609
    %v4066 = vpack.c.b16 %v3618, %v3610
    %v4067 = vpack.c.b16 %v3619, %v3611
    %v4068 = vpack.c.b16 %v3620, %v3612
    %v4069 = vpack.c.b16 %v3621, %v3613
    %v4070 = vpack.c.b16 %v3622, %v3614
    %v4071 = vpack.c.b16 %v3623, %v3615
    %v4072 = vpack.c.b16 %v3624, %v3616
    %v4073 = vpack.c.b16 %v3633, %v3625
    %v4074 = vpack.c.b16 %v3634, %v3626
    %v4075 = vpack.c.b16 %v3635, %v3627
    %v4076 = vpack.c.b16 %v3636, %v3628
    %v4077 = vpack.c.b16 %v3637, %v3629
    %v4078 = vpack.c.b16 %v3638, %v3630
    %v4079 = vpack.c.b16 %v3639, %v3631
    %v4080 = vpack.c.b16 %v3640, %v3632
    %v4081 = vpack.c.b16 %v3649, %v3641
    %v4082 = vpack.c.b16 %v3650, %v3642
    %v4083 = vpack.c.b16 %v3651, %v3643
    %v4084 = vpack.c.b16 %v3652, %v3644
    %v4085 = vpack.c.b16 %v3653, %v3645
    %v4086 = vpack.c.b16 %v3654, %v3646
    %v4087 = vpack.c.b16 %v3655, %v3647
    %v4088 = vpack.c.b16 %v3656, %v3648
    %v4089 = vpack.c.b16 %v3665, %v3657
    %v4090 = vpack.c.b16 %v3666, %v3658
    %v4091 = vpack.c.b16 %v3667, %v3659
    %v4092 = vpack.c.b16 %v3668, %v3660
    %v4093 = vpack.c.b16 %v3669, %v3661
    %v4094 = vpack.c.b16 %v3670, %v3662
    %v4095 = vpack.c.b16 %v3671, %v3663
    %v4096 = vpack.c.b16 %v3672, %v3664
    %v4097 = vpack.c.b16 %v3681, %v3673
    %v4098 = vpack.c.b16 %v3682, %v3674
    %v4099 = vpack.c.b16 %v3683, %v3675
    %v4100 = vpack.c.b16 %v3684, %v3676
    %v4101 = vpack.c.b16 %v3685, %v3677
    %v4102 = vpack.c.b16 %v3686, %v3678
    %v4103 = vpack.c.b16 %v3687, %v3679
    %v4104 = vpack.c.b16 %v3688, %v3680
    %v4105 = vpack.c.b16 %v3697, %v3689
    %v4106 = vpack.c.b16 %v3698, %v3690
    %v4107 = vpack.c.b16 %v3699, %v3691
    %v4108 = vpack.c.b16 %v3700, %v3692
    %v4109 = vpack.c.b16 %v3701, %v3693
    %v4110 = vpack.c.b16 %v3702, %v3694
    %v4111 = vpack.c.b16 %v3703, %v3695
    %v4112 = vpack.c.b16 %v3704, %v3696
    %v4113 = vpack.c.b16 %v3713, %v3705
    %v4114 = vpack.c.b16 %v3714, %v3706
    %v4115 = vpack.c.b16 %v3715, %v3707
    %v4116 = vpack.c.b16 %v3716, %v3708
    %v4117 = vpack.c.b16 %v3717, %v3709
    %v4118 = vpack.c.b16 %v3718, %v3710
    %v4119 = vpack.c.b16 %v3719, %v3711
    %v4120 = vpack.c.b16 %v3720, %v3712
    %v4121 = vpack.c.b16 %v3729, %v3721
    %v4122 = vpack.c.b16 %v3730, %v3722
    %v4123 = vpack.c.b16 %v3731, %v3723
    %v4124 = vpack.c.b16 %v3732, %v3724
    %v4125 = vpack.c.b16 %v3733, %v3725
    %v4126 = vpack.c.b16 %v3734, %v3726
    %v4127 = vpack.c.b16 %v3735, %v3727
    %v4128 = vpack.c.b16 %v3736, %v3728
    %v4129 = vpack.c.b16 %v3745, %v3737
    %v4130 = vpack.c.b16 %v3746, %v3738
    %v4131 = vpack.c.b16 %v3747, %v3739
    %v4132 = vpack.c.b16 %v3748, %v3740
    %v4133 = vpack.c.b16 %v3749, %v3741
    %v4134 = vpack.c.b16 %v3750, %v3742
    %v4135 = vpack.c.b16 %v3751, %v3743
    %v4136 = vpack.c.b16 %v3752, %v3744
    %v4137 = vpack.c.b16 %v3761, %v3753
    %v4138 = vpack.c.b16 %v3762, %v3754
    %v4139 = vpack.c.b16 %v3763, %v3755
    %v4140 = vpack.c.b16 %v3764, %v3756
    %v4141 = vpack.c.b16 %v3765, %v3757
    %v4142 = vpack.c.b16 %v3766, %v3758
    %v4143 = vpack.c.b16 %v3767, %v3759
    %v4144 = vpack.c.b16 %v3768, %v3760
    %v4145 = vpack.c.b16 %v3777, %v3769
    %v4146 = vpack.c.b16 %v3778, %v3770
    %v4147 = vpack.c.b16 %v3779, %v3771
    %v4148 = vpack.c.b16 %v3780, %v3772
    %v4149 = vpack.c.b16 %v3781, %v3773
    %v4150 = vpack.c.b16 %v3782, %v3774
    %v4151 = vpack.c.b16 %v3783, %v3775
    %v4152 = vpack.c.b16 %v3784, %v3776
    %v4153 = vpack.c.b16 %v3793, %v3785
    %v4154 = vpack.c.b16 %v3794, %v3786
    %v4155 = vpack.c.b16 %v3795, %v3787
    %v4156 = vpack.c.b16 %v3796, %v3788
    %v4157 = vpack.c.b16 %v3797, %v3789
    %v4158 = vpack.c.b16 %v3798, %v3790
    %v4159 = vpack.c.b16 %v3799, %v3791
    %v4160 = vpack.c.b16 %v3800, %v3792
    %v4161 = vpack.c.b16 %v3809, %v3801
    %v4162 = vpack.c.b16 %v3810, %v3802
    %v4163 = vpack.c.b16 %v3811, %v3803
    %v4164 = vpack.c.b16 %v3812, %v3804
    %v4165 = vpack.c.b16 %v3813, %v3805
    %v4166 = vpack.c.b16 %v3814, %v3806
    %v4167 = vpack.c.b16 %v3815, %v3807
    %v4168 = vpack.c.b16 %v3816, %v3808
    %v4169 = vpack.c.b16 %v3825, %v3817
    %v4170 = vpack.c.b16 %v3826, %v3818
    %v4171 = vpack.c.b16 %v3827, %v3819
    %v4172 = vpack.c.b16 %v3828, %v3820
    %v4173 = vpack.c.b16 %v3829, %v3821
    %v4174 = vpack.c.b16 %v3830, %v3822
    %v4175 = vpack.c.b16 %v3831, %v3823
    %v4176 = vpack.c.b16 %v3832, %v3824
    %v4177 = vpack.c.b16 %v3841, %v3833
    %v4178 = vpack.c.b16 %v3842, %v3834
    %v4179 = vpack.c.b16 %v3843, %v3835
    %v4180 = vpack.c.b16 %v3844, %v3836
    %v4181 = vpack.c.b16 %v3845, %v3837
    %v4182 = vpack.c.b16 %v3846, %v3838
    %v4183 = vpack.c.b16 %v3847, %v3839
    %v4184 = vpack.c.b16 %v3848, %v3840
    %v4185 = vpack.c.b16 %v3857, %v3849
    %v4186 = vpack.c.b16 %v3858, %v3850
    %v4187 = vpack.c.b16 %v3859, %v3851
    %v4188 = vpack.c.b16 %v3860, %v3852
    %v4189 = vpack.c.b16 %v3861, %v3853
    %v4190 = vpack.c.b16 %v3862, %v3854
    %v4191 = vpack.c.b16 %v3863, %v3855
    %v4192 = vpack.c.b16 %v3864, %v3856
    %v4193 = vpack.c.b16 %v3873, %v3865
    %v4194 = vpack.c.b16 %v3874, %v3866
    %v4195 = vpack.c.b16 %v3875, %v3867
    %v4196 = vpack.c.b16 %v3876, %v3868
    %v4197 = vpack.c.b16 %v3877, %v3869
    %v4198 = vpack.c.b16 %v3878, %v3870
    %v4199 = vpack.c.b16 %v3879, %v3871
    %v4200 = vpack.c.b16 %v3880, %v3872
    %v4201 = vpack.c.b16 %v3889, %v3881
    %v4202 = vpack.c.b16 %v3890, %v3882
    %v4203 = vpack.c.b16 %v3891, %v3883
    %v4204 = vpack.c.b16 %v3892, %v3884
    %v4205 = vpack.c.b16 %v3893, %v3885
    %v4206 = vpack.c.b16 %v3894, %v3886
    %v4207 = vpack.c.b16 %v3895, %v3887
    %v4208 = vpack.c.b16 %v3896, %v3888
    %v4209 = vpack.c.b16 %v3905, %v3897
    %v4210 = vpack.c.b16 %v3906, %v3898
    %v4211 = vpack.c.b16 %v3907, %v3899
    %v4212 = vpack.c.b16 %v3908, %v3900
    %v4213 = vpack.c.b16 %v3909, %v3901
    %v4214 = vpack.c.b16 %v3910, %v3902
    %v4215 = vpack.c.b16 %v3911, %v3903
    %v4216 = vpack.c.b16 %v3912, %v3904
    %v4217 = vpack.c.b16 %v3921, %v3913
    %v4218 = vpack.c.b16 %v3922, %v3914
    %v4219 = vpack.c.b16 %v3923, %v3915
    %v4220 = vpack.c.b16 %v3924, %v3916
    %v4221 = vpack.c.b16 %v3925, %v3917
    %v4222 = vpack.c.b16 %v3926, %v3918
    %v4223 = vpack.c.b16 %v3927, %v3919
    %v4224 = vpack.c.b16 %v3928, %v3920
    %v4225 = vpack.c.b16 %v3937, %v3929
    %v4226 = vpack.c.b16 %v3938, %v3930
    %v4227 = vpack.c.b16 %v3939, %v3931
    %v4228 = vpack.c.b16 %v3940, %v3932
    %v4229 = vpack.c.b16 %v3941, %v3933
    %v4230 = vpack.c.b16 %v3942, %v3934
    %v4231 = vpack.c.b16 %v3943, %v3935
    %v4232 = vpack.c.b16 %v3944, %v3936
    %v4233 = vpack.c.b16 %v3953, %v3945
    %v4234 = vpack.c.b16 %v3954, %v3946
    %v4235 = vpack.c.b16 %v3955, %v3947
    %v4236 = vpack.c.b16 %v3956, %v3948
    %v4237 = vpack.c.b16 %v3957, %v3949
    %v4238 = vpack.c.b16 %v3958, %v3950
    %v4239 = vpack.c.b16 %v3959, %v3951
    %v4240 = vpack.c.b16 %v3960, %v3952
    %v4241 = vpack.c.b16 %v3969, %v3961
    %v4242 = vpack.c.b16 %v3970, %v3962
    %v4243 = vpack.c.b16 %v3971, %v3963
    %v4244 = vpack.c.b16 %v3972, %v3964
    %v4245 = vpack.c.b16 %v3973, %v3965
    %v4246 = vpack.c.b16 %v3974, %v3966
    %v4247 = vpack.c.b16 %v3975, %v3967
    %v4248 = vpack.c.b16 %v3976, %v3968
    %v4249 = vpack.c.b16 %v3985, %v3977
    %v4250 = vpack.c.b16 %v3986, %v3978
    %v4251 = vpack.c.b16 %v3987, %v3979
    %v4252 = vpack.c.b16 %v3988, %v3980
    %v4253 = vpack.c.b16 %v3989, %v3981
    %v4254 = vpack.c.b16 %v3990, %v3982
    %v4255 = vpack.c.b16 %v3991, %v3983
    %v4256 = vpack.c.b16 %v3992, %v3984
    %v4257 = vpack.c.b16 %v4001, %v3993
    %v4258 = vpack.c.b16 %v4002, %v3994
    %v4259 = vpack.c.b16 %v4003, %v3995
    %v4260 = vpack.c.b16 %v4004, %v3996
    %v4261 = vpack.c.b16 %v4005, %v3997
    %v4262 = vpack.c.b16 %v4006, %v3998
    %v4263 = vpack.c.b16 %v4007, %v3999
    %v4264 = vpack.c.b16 %v4008, %v4000
    %4521 = vmatprep.subr.bf16.mxu0 %v4010
    %4522 = vmatpush1.bf16.msra.mxu0 %v4009
    %4523 = vmatprep.subr.bf16.mxu0 %v4018
    %4524 = vmatpush1.bf16.msra.mxu0 %v4017
    %4525 = vmatprep.subr.bf16.mxu0 %v4026
    %4526 = vmatpush1.bf16.msra.mxu0 %v4025
    %4527 = vmatprep.subr.bf16.mxu0 %v4034
    %4528 = vmatpush1.bf16.msra.mxu0 %v4033
    %4529 = vmatprep.subr.bf16.mxu0 %v4042
    %4530 = vmatpush1.bf16.msra.mxu0 %v4041
    %4531 = vmatprep.subr.bf16.mxu0 %v4050
    %4532 = vmatpush1.bf16.msra.mxu0 %v4049
    %4533 = vmatprep.subr.bf16.mxu0 %v4058
    %4534 = vmatpush1.bf16.msra.mxu0 %v4057
    %4535 = vmatprep.subr.bf16.mxu0 %v4066
    %4536 = vmatpush1.bf16.msra.mxu0 %v4065
    %4537 = vmatprep.subr.bf16.mxu0 %v4074
    %4538 = vmatpush1.bf16.msra.mxu0 %v4073
    %4539 = vmatprep.subr.bf16.mxu0 %v4082
    %4540 = vmatpush1.bf16.msra.mxu0 %v4081
    %4541 = vmatprep.subr.bf16.mxu0 %v4090
    %4542 = vmatpush1.bf16.msra.mxu0 %v4089
    %4543 = vmatprep.subr.bf16.mxu0 %v4098
    %4544 = vmatpush1.bf16.msra.mxu0 %v4097
    %4545 = vmatprep.subr.bf16.mxu0 %v4106
    %4546 = vmatpush1.bf16.msra.mxu0 %v4105
    %4547 = vmatprep.subr.bf16.mxu0 %v4114
    %4548 = vmatpush1.bf16.msra.mxu0 %v4113
    %4549 = vmatprep.subr.bf16.mxu0 %v4122
    %4550 = vmatpush1.bf16.msra.mxu0 %v4121
    %4551 = vmatprep.subr.bf16.mxu0 %v4130
    %4552 = vmatpush1.bf16.msra.mxu0 %v4129
    %4553 = vmatprep.mubr.bf16.mxu0 %v2940
    %4554 = vmatmul.mubr.bf16.gmra.mrb[0].mxu0 %v2939
    %v4555 = vpop.f32.mrb[0].mxu0
    %v4556 = vadd.f32 %v3204, %v4555
    %v4557 = vpop.f32.mrb[0].mxu0
    %v4558 = vadd.f32 %v3208, %v4557
    %v4559 = vpop.f32.mrb[0].mxu0
    %v4560 = vadd.f32 %v3204, %v4559
    %v4561 = vpop.f32.mrb[0].mxu0
    %v4562 = vadd.f32 %v3208, %v4561
    %4563 = vdwg.mxu0
    %4564 = vmatprep.subr.bf16.mxu0 %v4138
    %4565 = vmatpush1.bf16.msra.mxu0 %v4137
    %4566 = vmatprep.subr.bf16.mxu0 %v4146
    %4567 = vmatpush1.bf16.msra.mxu0 %v4145
    %4568 = vmatprep.subr.bf16.mxu0 %v4154
    %4569 = vmatpush1.bf16.msra.mxu0 %v4153
    %4570 = vmatprep.subr.bf16.mxu0 %v4162
    %4571 = vmatpush1.bf16.msra.mxu0 %v4161
    %4572 = vmatprep.subr.bf16.mxu0 %v4170
    %4573 = vmatpush1.bf16.msra.mxu0 %v4169
    %4574 = vmatprep.subr.bf16.mxu0 %v4178
    %4575 = vmatpush1.bf16.msra.mxu0 %v4177
    %4576 = vmatprep.subr.bf16.mxu0 %v4186
    %4577 = vmatpush1.bf16.msra.mxu0 %v4185
    %4578 = vmatprep.subr.bf16.mxu0 %v4194
    %4579 = vmatpush1.bf16.msra.mxu0 %v4193
    %4580 = vmatprep.subr.bf16.mxu0 %v4202
    %4581 = vmatpush1.bf16.msra.mxu0 %v4201
    %4582 = vmatprep.subr.bf16.mxu0 %v4210
    %4583 = vmatpush1.bf16.msra.mxu0 %v4209
    %4584 = vmatprep.subr.bf16.mxu0 %v4218
    %4585 = vmatpush1.bf16.msra.mxu0 %v4217
    %4586 = vmatprep.subr.bf16.mxu0 %v4226
    %4587 = vmatpush1.bf16.msra.mxu0 %v4225
    %4588 = vmatprep.subr.bf16.mxu0 %v4234
    %4589 = vmatpush1.bf16.msra.mxu0 %v4233
    %4590 = vmatprep.subr.bf16.mxu0 %v4242
    %4591 = vmatpush1.bf16.msra.mxu0 %v4241
    %4592 = vmatprep.subr.bf16.mxu0 %v4250
    %4593 = vmatpush1.bf16.msra.mxu0 %v4249
    %4594 = vmatprep.subr.bf16.mxu0 %v4258
    %4595 = vmatpush1.bf16.msra.mxu0 %v4257
    %4596 = vmatprep.mubr.bf16.mxu0 %v2942
    %4597 = vmatmul.mubr.bf16.gmra.mrb[0].mxu0 %v2941
    %v4598 = vpop.f32.mrb[0].mxu0
    %v4599 = vadd.f32 %v4556, %v4598
    %v4600 = vpop.f32.mrb[0].mxu0
    %v4601 = vadd.f32 %v4558, %v4600
    %v4602 = vpop.f32.mrb[0].mxu0
    %v4603 = vadd.f32 %v4560, %v4602
    %v4604 = vpop.f32.mrb[0].mxu0
    %v4605 = vadd.f32 %v4562, %v4604
    %4606 = vdwg.mxu0
    %4607 = vmatprep.subr.bf16.mxu0 %v4012
    %4608 = vmatpush1.bf16.msra.mxu0 %v4011
    %4609 = vmatprep.subr.bf16.mxu0 %v4020
    %4610 = vmatpush1.bf16.msra.mxu0 %v4019
    %4611 = vmatprep.subr.bf16.mxu0 %v4028
    %4612 = vmatpush1.bf16.msra.mxu0 %v4027
    %4613 = vmatprep.subr.bf16.mxu0 %v4036
    %4614 = vmatpush1.bf16.msra.mxu0 %v4035
    %4615 = vmatprep.subr.bf16.mxu0 %v4044
    %4616 = vmatpush1.bf16.msra.mxu0 %v4043
    %4617 = vmatprep.subr.bf16.mxu0 %v4052
    %4618 = vmatpush1.bf16.msra.mxu0 %v4051
    %4619 = vmatprep.subr.bf16.mxu0 %v4060
    %4620 = vmatpush1.bf16.msra.mxu0 %v4059
    %4621 = vmatprep.subr.bf16.mxu0 %v4068
    %4622 = vmatpush1.bf16.msra.mxu0 %v4067
    %4623 = vmatprep.subr.bf16.mxu0 %v4076
    %4624 = vmatpush1.bf16.msra.mxu0 %v4075
    %4625 = vmatprep.subr.bf16.mxu0 %v4084
    %4626 = vmatpush1.bf16.msra.mxu0 %v4083
    %4627 = vmatprep.subr.bf16.mxu0 %v4092
    %4628 = vmatpush1.bf16.msra.mxu0 %v4091
    %4629 = vmatprep.subr.bf16.mxu0 %v4100
    %4630 = vmatpush1.bf16.msra.mxu0 %v4099
    %4631 = vmatprep.subr.bf16.mxu0 %v4108
    %4632 = vmatpush1.bf16.msra.mxu0 %v4107
    %4633 = vmatprep.subr.bf16.mxu0 %v4116
    %4634 = vmatpush1.bf16.msra.mxu0 %v4115
    %4635 = vmatprep.subr.bf16.mxu0 %v4124
    %4636 = vmatpush1.bf16.msra.mxu0 %v4123
    %4637 = vmatprep.subr.bf16.mxu0 %v4132
    %4638 = vmatpush1.bf16.msra.mxu0 %v4131
    %4639 = vmatprep.mubr.bf16.mxu0 %v2940
    %4640 = vmatmul.mubr.bf16.gmra.mrb[0].mxu0 %v2939
    %v4641 = vpop.f32.mrb[0].mxu0
    %v4642 = vadd.f32 %v3212, %v4641
    %v4643 = vpop.f32.mrb[0].mxu0
    %v4644 = vadd.f32 %v3216, %v4643
    %v4645 = vpop.f32.mrb[0].mxu0
    %v4646 = vadd.f32 %v3212, %v4645
    %v4647 = vpop.f32.mrb[0].mxu0
    %v4648 = vadd.f32 %v3216, %v4647
    %4649 = vdwg.mxu0
    %4650 = vmatprep.subr.bf16.mxu0 %v4140
    %4651 = vmatpush1.bf16.msra.mxu0 %v4139
    %4652 = vmatprep.subr.bf16.mxu0 %v4148
    %4653 = vmatpush1.bf16.msra.mxu0 %v4147
    %4654 = vmatprep.subr.bf16.mxu0 %v4156
    %4655 = vmatpush1.bf16.msra.mxu0 %v4155
    %4656 = vmatprep.subr.bf16.mxu0 %v4164
    %4657 = vmatpush1.bf16.msra.mxu0 %v4163
    %4658 = vmatprep.subr.bf16.mxu0 %v4172
    %4659 = vmatpush1.bf16.msra.mxu0 %v4171
    %4660 = vmatprep.subr.bf16.mxu0 %v4180
    %4661 = vmatpush1.bf16.msra.mxu0 %v4179
    %4662 = vmatprep.subr.bf16.mxu0 %v4188
    %4663 = vmatpush1.bf16.msra.mxu0 %v4187
    %4664 = vmatprep.subr.bf16.mxu0 %v4196
    %4665 = vmatpush1.bf16.msra.mxu0 %v4195
    %4666 = vmatprep.subr.bf16.mxu0 %v4204
    %4667 = vmatpush1.bf16.msra.mxu0 %v4203
    %4668 = vmatprep.subr.bf16.mxu0 %v4212
    %4669 = vmatpush1.bf16.msra.mxu0 %v4211
    %4670 = vmatprep.subr.bf16.mxu0 %v4220
    %4671 = vmatpush1.bf16.msra.mxu0 %v4219
    %4672 = vmatprep.subr.bf16.mxu0 %v4228
    %4673 = vmatpush1.bf16.msra.mxu0 %v4227
    %4674 = vmatprep.subr.bf16.mxu0 %v4236
    %4675 = vmatpush1.bf16.msra.mxu0 %v4235
    %4676 = vmatprep.subr.bf16.mxu0 %v4244
    %4677 = vmatpush1.bf16.msra.mxu0 %v4243
    %4678 = vmatprep.subr.bf16.mxu0 %v4252
    %4679 = vmatpush1.bf16.msra.mxu0 %v4251
    %4680 = vmatprep.subr.bf16.mxu0 %v4260
    %4681 = vmatpush1.bf16.msra.mxu0 %v4259
    %4682 = vmatprep.mubr.bf16.mxu0 %v2942
    %4683 = vmatmul.mubr.bf16.gmra.mrb[0].mxu0 %v2941
    %v4684 = vpop.f32.mrb[0].mxu0
    %v4685 = vadd.f32 %v4642, %v4684
    %v4686 = vpop.f32.mrb[0].mxu0
    %v4687 = vadd.f32 %v4644, %v4686
    %v4688 = vpop.f32.mrb[0].mxu0
    %v4689 = vadd.f32 %v4646, %v4688
    %v4690 = vpop.f32.mrb[0].mxu0
    %v4691 = vadd.f32 %v4648, %v4690
    %4692 = vdwg.mxu0
    %4693 = vmatprep.subr.bf16.mxu0 %v4014
    %4694 = vmatpush1.bf16.msra.mxu0 %v4013
    %4695 = vmatprep.subr.bf16.mxu0 %v4022
    %4696 = vmatpush1.bf16.msra.mxu0 %v4021
    %4697 = vmatprep.subr.bf16.mxu0 %v4030
    %4698 = vmatpush1.bf16.msra.mxu0 %v4029
    %4699 = vmatprep.subr.bf16.mxu0 %v4038
    %4700 = vmatpush1.bf16.msra.mxu0 %v4037
    %4701 = vmatprep.subr.bf16.mxu0 %v4046
    %4702 = vmatpush1.bf16.msra.mxu0 %v4045
    %4703 = vmatprep.subr.bf16.mxu0 %v4054
    %4704 = vmatpush1.bf16.msra.mxu0 %v4053
    %4705 = vmatprep.subr.bf16.mxu0 %v4062
    %4706 = vmatpush1.bf16.msra.mxu0 %v4061
    %4707 = vmatprep.subr.bf16.mxu0 %v4070
    %4708 = vmatpush1.bf16.msra.mxu0 %v4069
    %4709 = vmatprep.subr.bf16.mxu0 %v4078
    %4710 = vmatpush1.bf16.msra.mxu0 %v4077
    %4711 = vmatprep.subr.bf16.mxu0 %v4086
    %4712 = vmatpush1.bf16.msra.mxu0 %v4085
    %4713 = vmatprep.subr.bf16.mxu0 %v4094
    %4714 = vmatpush1.bf16.msra.mxu0 %v4093
    %4715 = vmatprep.subr.bf16.mxu0 %v4102
    %4716 = vmatpush1.bf16.msra.mxu0 %v4101
    %4717 = vmatprep.subr.bf16.mxu0 %v4110
    %4718 = vmatpush1.bf16.msra.mxu0 %v4109
    %4719 = vmatprep.subr.bf16.mxu0 %v4118
    %4720 = vmatpush1.bf16.msra.mxu0 %v4117
    %4721 = vmatprep.subr.bf16.mxu0 %v4126
    %4722 = vmatpush1.bf16.msra.mxu0 %v4125
    %4723 = vmatprep.subr.bf16.mxu0 %v4134
    %4724 = vmatpush1.bf16.msra.mxu0 %v4133
    %4725 = vmatprep.mubr.bf16.mxu0 %v2940
    %4726 = vmatmul.mubr.bf16.gmra.mrb[0].mxu0 %v2939
    %v4727 = vpop.f32.mrb[0].mxu0
    %v4728 = vadd.f32 %v3220, %v4727
    %v4729 = vpop.f32.mrb[0].mxu0
    %v4730 = vadd.f32 %v3224, %v4729
    %v4731 = vpop.f32.mrb[0].mxu0
    %v4732 = vadd.f32 %v3220, %v4731
    %v4733 = vpop.f32.mrb[0].mxu0
    %v4734 = vadd.f32 %v3224, %v4733
    %4735 = vdwg.mxu0
    %4736 = vmatprep.subr.bf16.mxu0 %v4142
    %4737 = vmatpush1.bf16.msra.mxu0 %v4141
    %4738 = vmatprep.subr.bf16.mxu0 %v4150
    %4739 = vmatpush1.bf16.msra.mxu0 %v4149
    %4740 = vmatprep.subr.bf16.mxu0 %v4158
    %4741 = vmatpush1.bf16.msra.mxu0 %v4157
    %4742 = vmatprep.subr.bf16.mxu0 %v4166
    %4743 = vmatpush1.bf16.msra.mxu0 %v4165
    %4744 = vmatprep.subr.bf16.mxu0 %v4174
    %4745 = vmatpush1.bf16.msra.mxu0 %v4173
    %4746 = vmatprep.subr.bf16.mxu0 %v4182
    %4747 = vmatpush1.bf16.msra.mxu0 %v4181
    %4748 = vmatprep.subr.bf16.mxu0 %v4190
    %4749 = vmatpush1.bf16.msra.mxu0 %v4189
    %4750 = vmatprep.subr.bf16.mxu0 %v4198
    %4751 = vmatpush1.bf16.msra.mxu0 %v4197
    %4752 = vmatprep.subr.bf16.mxu0 %v4206
    %4753 = vmatpush1.bf16.msra.mxu0 %v4205
    %4754 = vmatprep.subr.bf16.mxu0 %v4214
    %4755 = vmatpush1.bf16.msra.mxu0 %v4213
    %4756 = vmatprep.subr.bf16.mxu0 %v4222
    %4757 = vmatpush1.bf16.msra.mxu0 %v4221
    %4758 = vmatprep.subr.bf16.mxu0 %v4230
    %4759 = vmatpush1.bf16.msra.mxu0 %v4229
    %4760 = vmatprep.subr.bf16.mxu0 %v4238
    %4761 = vmatpush1.bf16.msra.mxu0 %v4237
    %4762 = vmatprep.subr.bf16.mxu0 %v4246
    %4763 = vmatpush1.bf16.msra.mxu0 %v4245
    %4764 = vmatprep.subr.bf16.mxu0 %v4254
    %4765 = vmatpush1.bf16.msra.mxu0 %v4253
    %4766 = vmatprep.subr.bf16.mxu0 %v4262
    %4767 = vmatpush1.bf16.msra.mxu0 %v4261
    %4768 = vmatprep.mubr.bf16.mxu0 %v2942
    %4769 = vmatmul.mubr.bf16.gmra.mrb[0].mxu0 %v2941
    %v4770 = vpop.f32.mrb[0].mxu0
    %v4771 = vadd.f32 %v4728, %v4770
    %v4772 = vpop.f32.mrb[0].mxu0
    %v4773 = vadd.f32 %v4730, %v4772
    %v4774 = vpop.f32.mrb[0].mxu0
    %v4775 = vadd.f32 %v4732, %v4774
    %v4776 = vpop.f32.mrb[0].mxu0
    %v4777 = vadd.f32 %v4734, %v4776
    %4778 = vdwg.mxu0
    %4779 = vmatprep.subr.bf16.mxu0 %v4016
    %4780 = vmatpush1.bf16.msra.mxu0 %v4015
    %4781 = vmatprep.subr.bf16.mxu0 %v4024
    %4782 = vmatpush1.bf16.msra.mxu0 %v4023
    %4783 = vmatprep.subr.bf16.mxu0 %v4032
    %4784 = vmatpush1.bf16.msra.mxu0 %v4031
    %4785 = vmatprep.subr.bf16.mxu0 %v4040
    %4786 = vmatpush1.bf16.msra.mxu0 %v4039
    %4787 = vmatprep.subr.bf16.mxu0 %v4048
    %4788 = vmatpush1.bf16.msra.mxu0 %v4047
    %4789 = vmatprep.subr.bf16.mxu0 %v4056
    %4790 = vmatpush1.bf16.msra.mxu0 %v4055
    %4791 = vmatprep.subr.bf16.mxu0 %v4064
    %4792 = vmatpush1.bf16.msra.mxu0 %v4063
    %4793 = vmatprep.subr.bf16.mxu0 %v4072
    %4794 = vmatpush1.bf16.msra.mxu0 %v4071
    %4795 = vmatprep.subr.bf16.mxu0 %v4080
    %4796 = vmatpush1.bf16.msra.mxu0 %v4079
    %4797 = vmatprep.subr.bf16.mxu0 %v4088
    %4798 = vmatpush1.bf16.msra.mxu0 %v4087
    %4799 = vmatprep.subr.bf16.mxu0 %v4096
    %4800 = vmatpush1.bf16.msra.mxu0 %v4095
    %4801 = vmatprep.subr.bf16.mxu0 %v4104
    %4802 = vmatpush1.bf16.msra.mxu0 %v4103
    %4803 = vmatprep.subr.bf16.mxu0 %v4112
    %4804 = vmatpush1.bf16.msra.mxu0 %v4111
    %4805 = vmatprep.subr.bf16.mxu0 %v4120
    %4806 = vmatpush1.bf16.msra.mxu0 %v4119
    %4807 = vmatprep.subr.bf16.mxu0 %v4128
    %4808 = vmatpush1.bf16.msra.mxu0 %v4127
    %4809 = vmatprep.subr.bf16.mxu0 %v4136
    %4810 = vmatpush1.bf16.msra.mxu0 %v4135
    %4811 = vmatprep.mubr.bf16.mxu0 %v2940
    %4812 = vmatmul.mubr.bf16.gmra.mrb[0].mxu0 %v2939
    %v4813 = vpop.f32.mrb[0].mxu0
    %v4814 = vadd.f32 %v3228, %v4813
    %v4815 = vpop.f32.mrb[0].mxu0
    %v4816 = vadd.f32 %v3232, %v4815
    %v4817 = vpop.f32.mrb[0].mxu0
    %v4818 = vadd.f32 %v3228, %v4817
    %v4819 = vpop.f32.mrb[0].mxu0
    %v4820 = vadd.f32 %v3232, %v4819
    %4821 = vdwg.mxu0
    %4822 = vmatprep.subr.bf16.mxu0 %v4144
    %4823 = vmatpush1.bf16.msra.mxu0 %v4143
    %4824 = vmatprep.subr.bf16.mxu0 %v4152
    %4825 = vmatpush1.bf16.msra.mxu0 %v4151
    %4826 = vmatprep.subr.bf16.mxu0 %v4160
    %4827 = vmatpush1.bf16.msra.mxu0 %v4159
    %4828 = vmatprep.subr.bf16.mxu0 %v4168
    %4829 = vmatpush1.bf16.msra.mxu0 %v4167
    %4830 = vmatprep.subr.bf16.mxu0 %v4176
    %4831 = vmatpush1.bf16.msra.mxu0 %v4175
    %4832 = vmatprep.subr.bf16.mxu0 %v4184
    %4833 = vmatpush1.bf16.msra.mxu0 %v4183
    %4834 = vmatprep.subr.bf16.mxu0 %v4192
    %4835 = vmatpush1.bf16.msra.mxu0 %v4191
    %4836 = vmatprep.subr.bf16.mxu0 %v4200
    %4837 = vmatpush1.bf16.msra.mxu0 %v4199
    %4838 = vmatprep.subr.bf16.mxu0 %v4208
    %4839 = vmatpush1.bf16.msra.mxu0 %v4207
    %4840 = vmatprep.subr.bf16.mxu0 %v4216
    %4841 = vmatpush1.bf16.msra.mxu0 %v4215
    %4842 = vmatprep.subr.bf16.mxu0 %v4224
    %4843 = vmatpush1.bf16.msra.mxu0 %v4223
    %4844 = vmatprep.subr.bf16.mxu0 %v4232
    %4845 = vmatpush1.bf16.msra.mxu0 %v4231
    %4846 = vmatprep.subr.bf16.mxu0 %v4240
    %4847 = vmatpush1.bf16.msra.mxu0 %v4239
    %4848 = vmatprep.subr.bf16.mxu0 %v4248
    %4849 = vmatpush1.bf16.msra.mxu0 %v4247
    %4850 = vmatprep.subr.bf16.mxu0 %v4256
    %4851 = vmatpush1.bf16.msra.mxu0 %v4255
    %4852 = vmatprep.subr.bf16.mxu0 %v4264
    %4853 = vmatpush1.bf16.msra.mxu0 %v4263
    %4854 = vmatprep.mubr.bf16.mxu0 %v2942
    %4855 = vmatmul.mubr.bf16.gmra.mrb[0].mxu0 %v2941
    %v4856 = vpop.f32.mrb[0].mxu0
    %v4857 = vadd.f32 %v4814, %v4856
    %v4858 = vpop.f32.mrb[0].mxu0
    %v4859 = vadd.f32 %v4816, %v4858
    %v4860 = vpop.f32.mrb[0].mxu0
    %v4861 = vadd.f32 %v4818, %v4860
    %v4862 = vpop.f32.mrb[0].mxu0
    %v4863 = vadd.f32 %v4820, %v4862
    %4864 = vdwg.mxu0
    %v4865 = vtanh.pop %v4599
    %v4866 = vtanh.pop %v4601
    %v4867 = vtanh.pop %v4685
    %v4868 = vtanh.pop %v4687
    %v4869 = vtanh.pop %v4771
    %v4870 = vtanh.pop %v4773
    %v4871 = vtanh.pop %v4857
    %v4872 = vtanh.pop %v4859
    %v4873 = vtanh.pop %v4603
    %v4874 = vtanh.pop %v4605
    %v4875 = vtanh.pop %v4689
    %v4876 = vtanh.pop %v4691
    %v4877 = vtanh.pop %v4775
    %v4878 = vtanh.pop %v4777
    %v4879 = vtanh.pop %v4861
    %v4880 = vtanh.pop %v4863
    %v4881 = vpack.c.bf16 %v4873, %v4865
    %v4882 = vpack.c.bf16 %v4874, %v4866
    %v4883 = vpack.c.bf16 %v4875, %v4867
    %v4884 = vpack.c.bf16 %v4876, %v4868
    %v4885 = vpack.c.bf16 %v4877, %v4869
    %v4886 = vpack.c.bf16 %v4878, %v4870
    %v4887 = vpack.c.bf16 %v4879, %v4871
    %v4888 = vpack.c.bf16 %v4880, %v4872
    %v4897 = vunpack.c.l.b16 %v4881
    %v4898 = vunpack.c.l.b16 %v4882
    %v4899 = vunpack.c.l.b16 %v4883
    %v4900 = vunpack.c.l.b16 %v4884
    %v4901 = vunpack.c.l.b16 %v4885
    %v4902 = vunpack.c.l.b16 %v4886
    %v4903 = vunpack.c.l.b16 %v4887
    %v4904 = vunpack.c.l.b16 %v4888
    %v4905 = vunpack.c.h.b16 %v4881
    %v4906 = vunpack.c.h.b16 %v4882
    %v4907 = vunpack.c.h.b16 %v4883
    %v4908 = vunpack.c.h.b16 %v4884
    %v4909 = vunpack.c.h.b16 %v4885
    %v4910 = vunpack.c.h.b16 %v4886
    %v4911 = vunpack.c.h.b16 %v4887
    %v4912 = vunpack.c.h.b16 %v4888
    %v4913 = vpack.c.b16 %v4898, %v4897
    %v4914 = vpack.c.b16 %v4900, %v4899
    %v4915 = vpack.c.b16 %v4902, %v4901
    %v4916 = vpack.c.b16 %v4904, %v4903
    %v4917 = vpack.c.b16 %v4906, %v4905
    %v4918 = vpack.c.b16 %v4908, %v4907
    %v4919 = vpack.c.b16 %v4910, %v4909
    %v4920 = vpack.c.b16 %v4912, %v4911
    %4929 = vst [vmem:[%s10] sm:$0xff] %v4913
    %4930 = vst [vmem:[%s10 + $0x8] sm:$0xff] %v4914
    %4931 = vst [vmem:[%s10 + $0x10] sm:$0xff] %v4915
    %4932 = vst [vmem:[%s10 + $0x18] sm:$0xff] %v4916
    %4933 = vst [vmem:[%s10 + $0x20] sm:$0xff] %v4917
    %4934 = vst [vmem:[%s10 + $0x28] sm:$0xff] %v4918
    %4935 = vst [vmem:[%s10 + $0x30] sm:$0xff] %v4919
    %4936 = vst [vmem:[%s10 + $0x38] sm:$0xff] %v4920
    // Predicated region
    $region50: #{vae_forward.1} parent=1 // pred_check
      _
    $region51: #{vae_forward.1} parent=1 // pred_check_branch
      %4938 = sbr.rel (0) target = $region53
    $region52: #{vae_forward.1} parent=1 // pred_region
      _
    $region53: #{vae_forward.1} parent=1 // pred_fallthru
      _
    // Predicated region
    $region54: #{vae_forward.1} parent=1 // pred_check
      _
    $region55: #{vae_forward.1} parent=1 // pred_check_branch
      %4940 = sbr.rel (0) target = $region57
    $region56: #{vae_forward.1} parent=1 // pred_region
      _
    $region57: #{vae_forward.1} parent=1 // pred_fallthru
      _
    // Predicated region
    $region58: #{vae_forward.1} parent=1 // pred_check
      _
    $region59: #{vae_forward.1} parent=1 // pred_check_branch
      %4942 = sbr.rel (0) target = $region61
    $region60: #{vae_forward.1} parent=1 // pred_region
      _
    $region61: #{vae_forward.1} parent=1 // pred_fallthru
      _
    // Predicated region
    $region62: #{vae_forward.1} parent=1 // pred_check
      _
    $region63: #{vae_forward.1} parent=1 // pred_check_branch
      %4944 = sbr.rel (0) target = $region65
    $region64: #{vae_forward.1} parent=1 // pred_region
      _
    $region65: #{vae_forward.1} parent=1 // pred_fallthru
      _
    %4945 = vsyncpa [#allocation3], 1
    %4946 = vsyncpa [#allocation5], 1

</llo_original>
